<compile_context>
chip_gen: v7x
topology: tpu7x:2x2x1
jax: 0.10.0
libtpu: 0.0.40
codegen_flags: <defaults>
</compile_context>

<pallas_src>
import jax
import jax.numpy as jnp
from jax.experimental import pallas as pl
from jax.experimental.pallas import tpu as pltpu


def _conv3x3_relu(x_pad, w_ref, b_ref, H, W):
    """3x3 conv + bias + ReLU on a pre-padded slab.

    x_pad: (H+2, W+2, C) f32 array (registers/VMEM)
    w_ref: (3, 3*C, Cout) bf16 ref, laid out (ky, (kx, cin), cout)
    b_ref: (1, Cout) f32 ref
    returns (H*W, Cout) f32
    """
    C = x_pad.shape[-1]
    Cout = w_ref.shape[-1]

    # Fold the 3 kx taps into the channel (lane) axis once per conv:
    #   xcat[y, x, :] = concat_kx x_pad[y, x + kx, :]      -> (H+2, W, 3*C)
    xcat = jnp.concatenate(
        [x_pad[:, 0:W, :], x_pad[:, 1:W + 1, :], x_pad[:, 2:W + 2, :]],
        axis=-1)

    # Bias folded into the accumulator init (broadcast hoisted out of the loop).
    acc = jnp.broadcast_to(b_ref[...], (H * W, Cout)).astype(jnp.float32)

    # 3 fat MXU matmuls: M = H*W, K = 3*C, N = Cout, bf16 operands, f32 acc.
    for ky in range(3):
        patch = xcat[ky:ky + H].reshape(H * W, 3 * C)       # cheap axis-0 slice
        acc = acc + jnp.dot(patch.astype(jnp.bfloat16), w_ref[ky],
                            preferred_element_type=jnp.float32)

    return jnp.maximum(acc, 0.0)


def _fcn_fused_kernel(x_ref, w1_ref, b1_ref, w2_ref, b2_ref, o_ref, h_ref):
    """One batch element: relu(conv2(relu(conv1(x)))), intermediate kept in VMEM.

    x_ref : (H+2, W+2, Cin)   f32 padded input tile
    w1_ref: (3, 3*Cin, Cmid)  bf16 folded conv1 weights
    b1_ref: (1, Cmid)         f32
    w2_ref: (3, 3*Cmid, Cmid) bf16 folded conv2 weights
    b2_ref: (1, Cmid)         f32
    o_ref : (H*W, Cmid)       f32 output tile
    h_ref : (H+2, W+2, Cmid)  f32 VMEM scratch (padded intermediate)
    """
    Hp, Wp = x_ref.shape[0], x_ref.shape[1]
    H, W = Hp - 2, Wp - 2
    Cmid = w1_ref.shape[-1]

    # ---- conv1 + ReLU ----
    h = _conv3x3_relu(x_ref[...], w1_ref, b1_ref, H, W)     # (H*W, Cmid) f32

    # Stage the padded intermediate in VMEM scratch (zero halo, write interior).
    h_ref[...] = jnp.zeros_like(h_ref)
    h_ref[1:H + 1, 1:W + 1, :] = h.reshape(H, W, Cmid)

    # ---- conv2 + ReLU ----
    y = _conv3x3_relu(h_ref[...], w2_ref, b2_ref, H, W)     # (H*W, Cmid) f32

    o_ref[...] = y.astype(o_ref.dtype)


def fcn_backbone_pallas(x_nhwc, w1_hwio, b1, w2_hwio, b2):
    """x_nhwc: (N,H,W,Cin) f32; w*_hwio: (3,3,Ci,Co); b*: (Co,). Returns NHWC f32."""
    N, H, W, Cin = x_nhwc.shape
    Cmid = w1_hwio.shape[-1]
    assert w2_hwio.shape == (3, 3, Cmid, Cmid)
    Hp, Wp = H + 2, W + 2

    # Spatial halo (pad=1) applied once, to the network input only; the second
    # conv's halo is handled by the in-kernel VMEM scratch.
    x_pad = jnp.pad(x_nhwc, ((0, 0), (1, 1), (1, 1), (0, 0)))

    # Fold kx into the contraction axis: (ky, kx, Ci, Co) -> (ky, kx*Ci, Co),
    # and pre-cast MXU weight operands to bf16.
    w1_f = w1_hwio.astype(jnp.bfloat16).reshape(3, 3 * Cin, Cmid)
    w2_f = w2_hwio.astype(jnp.bfloat16).reshape(3, 3 * Cmid, Cmid)
    b1_2 = b1.astype(jnp.float32).reshape(1, Cmid)
    b2_2 = b2.astype(jnp.float32).reshape(1, Cmid)

    grid_spec = pltpu.PrefetchScalarGridSpec(
        num_scalar_prefetch=0,
        grid=(N,),
        in_specs=[
            pl.BlockSpec((None, Hp, Wp, Cin), lambda b: (b, 0, 0, 0)),
            pl.BlockSpec((3, 3 * Cin, Cmid), lambda b: (0, 0, 0)),
            pl.BlockSpec((1, Cmid), lambda b: (0, 0)),
            pl.BlockSpec((3, 3 * Cmid, Cmid), lambda b: (0, 0, 0)),
            pl.BlockSpec((1, Cmid), lambda b: (0, 0)),
        ],
        out_specs=pl.BlockSpec((None, H * W, Cmid), lambda b: (b, 0, 0)),
        scratch_shapes=[pltpu.VMEM((Hp, Wp, Cmid), jnp.float32)],
    )

    # TODO(synk): for FCN-scale inputs (e.g. 512x512), tile H with a 1-row halo
    # (pl.Element index_map on the padded input), set vmem_limit_bytes, and use
    # a lane-dense (>=128) packed output — full-image blocks only fit VMEM at
    # small H, W (v7x has 64 MiB).
    out = pl.pallas_call(
        _fcn_fused_kernel,
        out_shape=jax.ShapeDtypeStruct((N, H * W, Cmid), jnp.float32),
        grid_spec=grid_spec,
        compiler_params=pltpu.CompilerParams(
            dimension_semantics=("parallel",)),
    )(x_pad, w1_f, b1_2, w2_f, b2_2)

    return out.reshape(N, H, W, Cmid)


@jax.jit
def fcn_backbone_forward(x_nchw, w1, b1, w2, b2):
    """Reproduces FCNBackbone.forward. x_nchw: (N, Cin, H, W); weights OIHW."""
    x = jnp.transpose(x_nchw, (0, 2, 3, 1))        # NCHW -> NHWC
    w1_hwio = jnp.transpose(w1, (2, 3, 1, 0))      # OIHW -> HWIO
    w2_hwio = jnp.transpose(w2, (2, 3, 1, 0))
    y = fcn_backbone_pallas(x, w1_hwio, b1, w2_hwio, b2)
    return jnp.transpose(y, (0, 3, 1, 2))          # NHWC -> NCHW


def _reference_forward(x_nchw, w1, b1, w2, b2):
    """Pure-JAX f32 reference (lax conv) for correctness check."""
    def conv(x, w, b):
        y = jax.lax.conv_general_dilated(
            x, w, window_strides=(1, 1), padding=((1, 1), (1, 1)),
            dimension_numbers=("NCHW", "OIHW", "NCHW"))
        return jax.nn.relu(y + b[None, :, None, None])
    return conv(conv(x_nchw, w1, b1), w2, b2)


if __name__ == "__main__":
    # Module defaults: in_channels=32, out_channels=64.
    N, Cin, Cout, H, W = 2, 32, 64, 16, 16

    key = jax.random.PRNGKey(0)
    k_x, k_w1, k_b1, k_w2, k_b2 = jax.random.split(key, 5)

    x = jax.random.normal(k_x, (N, Cin, H, W), jnp.float32)
    fan1 = Cin * 3 * 3
    fan2 = Cout * 3 * 3
    w1 = jax.random.uniform(k_w1, (Cout, Cin, 3, 3), jnp.float32,
                            -1.0, 1.0) / jnp.sqrt(fan1)
    b1 = jax.random.uniform(k_b1, (Cout,), jnp.float32, -1.0, 1.0) / jnp.sqrt(fan1)
    w2 = jax.random.uniform(k_w2, (Cout, Cout, 3, 3), jnp.float32,
                            -1.0, 1.0) / jnp.sqrt(fan2)
    b2 = jax.random.uniform(k_b2, (Cout,), jnp.float32, -1.0, 1.0) / jnp.sqrt(fan2)

    out = jax.block_until_ready(fcn_backbone_forward(x, w1, b1, w2, b2))
    ref = _reference_forward(x, w1, b1, w2, b2)

    assert out.shape == (N, Cout, H, W), out.shape
    max_err = float(jnp.max(jnp.abs(out - ref)))
    # bf16 MXU operands (f32 accumulation) -> relaxed tolerance vs f32 reference.
    assert jnp.allclose(out, ref, atol=3e-2, rtol=3e-2), max_err

    print("KERNEL_OK")
</pallas_src>

<mosaic_0001>
module attributes {stable_mosaic.version = 11 : i64} {
  func.func @_fcn_fused_kernel(%arg0: i32, %arg1: memref<1x18x18x32xf32, #tpu.memory_space<vmem>>, %arg2: memref<3x96x64xbf16, #tpu.memory_space<vmem>>, %arg3: memref<1x64xf32, #tpu.memory_space<vmem>>, %arg4: memref<3x192x64xbf16, #tpu.memory_space<vmem>>, %arg5: memref<1x64xf32, #tpu.memory_space<vmem>>, %arg6: memref<1x256x64xf32, #tpu.memory_space<vmem>>, %arg7: memref<18x18x64xf32, #tpu.memory_space<vmem>>) attributes {dimension_semantics = [#tpu.dimension_semantics<parallel>], iteration_bounds = array<i64: 2>, scalar_prefetch = 0 : i64, scratch_operands = 1 : i64, tpu.core_type = #tpu.core_type<tc>, window_params = [{transform_indices = @transform_0, window_bounds = array<i64: 1, 18, 18, 32>}, {pipeline_mode = #tpu.pipeline_mode<synchronous>, transform_indices = @transform_1, window_bounds = array<i64: 3, 96, 64>}, {pipeline_mode = #tpu.pipeline_mode<synchronous>, transform_indices = @transform_2, window_bounds = array<i64: 1, 64>}, {pipeline_mode = #tpu.pipeline_mode<synchronous>, transform_indices = @transform_3, window_bounds = array<i64: 3, 192, 64>}, {pipeline_mode = #tpu.pipeline_mode<synchronous>, transform_indices = @transform_4, window_bounds = array<i64: 1, 64>}, {transform_indices = @transform_5, window_bounds = array<i64: 1, 256, 64>}]} {
    %c0 = arith.constant 0 : index
    %c0_0 = arith.constant 0 : index
    %c0_1 = arith.constant 0 : index
    %c0_2 = arith.constant 0 : index
    %0 = vector.load %arg1[%c0, %c0_0, %c0_1, %c0_2] : memref<1x18x18x32xf32, #tpu.memory_space<vmem>>, vector<1x18x18x32xf32>
    %1 = vector.shape_cast %0 : vector<1x18x18x32xf32> to vector<18x18x32xf32>
    %2 = vector.extract_strided_slice %1 {offsets = [0, 0, 0], sizes = [18, 16, 32], strides = [1, 1, 1]} : vector<18x18x32xf32> to vector<18x16x32xf32>
    %3 = vector.extract_strided_slice %1 {offsets = [0, 1, 0], sizes = [18, 16, 32], strides = [1, 1, 1]} : vector<18x18x32xf32> to vector<18x16x32xf32>
    %4 = vector.extract_strided_slice %1 {offsets = [0, 2, 0], sizes = [18, 16, 32], strides = [1, 1, 1]} : vector<18x18x32xf32> to vector<18x16x32xf32>
    %5 = tpu.concatenate %2, %3, %4 in 2 : vector<18x16x32xf32>, vector<18x16x32xf32>, vector<18x16x32xf32> -> vector<18x16x96xf32>
    %c0_3 = arith.constant 0 : index
    %c0_4 = arith.constant 0 : index
    %6 = vector.load %arg3[%c0_3, %c0_4] : memref<1x64xf32, #tpu.memory_space<vmem>>, vector<1x64xf32>
    %7 = vector.shape_cast %6 : vector<1x64xf32> to vector<1x64xf32>
    %8 = vector.broadcast %7 : vector<1x64xf32> to vector<256x64xf32>
    %9 = vector.extract_strided_slice %5 {offsets = [0, 0, 0], sizes = [16, 16, 96], strides = [1, 1, 1]} : vector<18x16x96xf32> to vector<16x16x96xf32>
    %10 = vector.shape_cast %9 : vector<16x16x96xf32> to vector<256x96xf32>
    %11 = arith.truncf %10 : vector<256x96xf32> to vector<256x96xbf16>
    %c0_5 = arith.constant 0 : index
    %c0_6 = arith.constant 0 : index
    %c0_7 = arith.constant 0 : index
    %12 = vector.load %arg2[%c0_5, %c0_6, %c0_7] : memref<3x96x64xbf16, #tpu.memory_space<vmem>>, vector<1x96x64xbf16>
    %13 = vector.shape_cast %12 : vector<1x96x64xbf16> to vector<96x64xbf16>
    %cst = arith.constant dense<0.000000e+00> : vector<256x64xf32>
    %14 = tpu.matmul %11, %13, %cst {dimension_numbers = #tpu.dot_dimension_numbers<[1], [0], [0], [1], [0, 0, 1, 1], [], []>} : vector<256x96xbf16>, vector<96x64xbf16>, vector<256x64xf32> -> vector<256x64xf32>
    %15 = arith.addf %8, %14 : vector<256x64xf32>
    %16 = vector.extract_strided_slice %5 {offsets = [1, 0, 0], sizes = [16, 16, 96], strides = [1, 1, 1]} : vector<18x16x96xf32> to vector<16x16x96xf32>
    %17 = vector.shape_cast %16 : vector<16x16x96xf32> to vector<256x96xf32>
    %18 = arith.truncf %17 : vector<256x96xf32> to vector<256x96xbf16>
    %c1 = arith.constant 1 : index
    %c0_8 = arith.constant 0 : index
    %c0_9 = arith.constant 0 : index
    %19 = vector.load %arg2[%c1, %c0_8, %c0_9] : memref<3x96x64xbf16, #tpu.memory_space<vmem>>, vector<1x96x64xbf16>
    %20 = vector.shape_cast %19 : vector<1x96x64xbf16> to vector<96x64xbf16>
    %cst_10 = arith.constant dense<0.000000e+00> : vector<256x64xf32>
    %21 = tpu.matmul %18, %20, %cst_10 {dimension_numbers = #tpu.dot_dimension_numbers<[1], [0], [0], [1], [0, 0, 1, 1], [], []>} : vector<256x96xbf16>, vector<96x64xbf16>, vector<256x64xf32> -> vector<256x64xf32>
    %22 = arith.addf %15, %21 : vector<256x64xf32>
    %23 = vector.extract_strided_slice %5 {offsets = [2, 0, 0], sizes = [16, 16, 96], strides = [1, 1, 1]} : vector<18x16x96xf32> to vector<16x16x96xf32>
    %24 = vector.shape_cast %23 : vector<16x16x96xf32> to vector<256x96xf32>
    %25 = arith.truncf %24 : vector<256x96xf32> to vector<256x96xbf16>
    %c2 = arith.constant 2 : index
    %c0_11 = arith.constant 0 : index
    %c0_12 = arith.constant 0 : index
    %26 = vector.load %arg2[%c2, %c0_11, %c0_12] : memref<3x96x64xbf16, #tpu.memory_space<vmem>>, vector<1x96x64xbf16>
    %27 = vector.shape_cast %26 : vector<1x96x64xbf16> to vector<96x64xbf16>
    %cst_13 = arith.constant dense<0.000000e+00> : vector<256x64xf32>
    %28 = tpu.matmul %25, %27, %cst_13 {dimension_numbers = #tpu.dot_dimension_numbers<[1], [0], [0], [1], [0, 0, 1, 1], [], []>} : vector<256x96xbf16>, vector<96x64xbf16>, vector<256x64xf32> -> vector<256x64xf32>
    %29 = arith.addf %22, %28 : vector<256x64xf32>
    %cst_14 = arith.constant 0.000000e+00 : f32
    %30 = vector.broadcast %cst_14 : f32 to vector<256x64xf32>
    %31 = arith.maximumf %29, %30 : vector<256x64xf32>
    %cst_15 = arith.constant 0.000000e+00 : f32
    %32 = vector.broadcast %cst_15 : f32 to vector<18x18x64xf32>
    %c0_16 = arith.constant 0 : index
    %c0_17 = arith.constant 0 : index
    %c0_18 = arith.constant 0 : index
    %33 = vector.load %arg7[%c0_16, %c0_17, %c0_18] : memref<18x18x64xf32, #tpu.memory_space<vmem>>, vector<18x18x64xf32>
    tpu.vector_store %arg7[%c0_16, %c0_17, %c0_18], %32 {strides = array<i32>} : memref<18x18x64xf32, #tpu.memory_space<vmem>>, vector<18x18x64xf32>,
    %34 = vector.shape_cast %31 : vector<256x64xf32> to vector<16x16x64xf32>
    %c1_19 = arith.constant 1 : index
    %c1_20 = arith.constant 1 : index
    %c0_21 = arith.constant 0 : index
    %35 = vector.load %arg7[%c1_19, %c1_20, %c0_21] : memref<18x18x64xf32, #tpu.memory_space<vmem>>, vector<16x16x64xf32>
    tpu.vector_store %arg7[%c1_19, %c1_20, %c0_21], %34 {strides = array<i32>} : memref<18x18x64xf32, #tpu.memory_space<vmem>>, vector<16x16x64xf32>,
    %c0_22 = arith.constant 0 : index
    %c0_23 = arith.constant 0 : index
    %c0_24 = arith.constant 0 : index
    %36 = vector.load %arg7[%c0_22, %c0_23, %c0_24] : memref<18x18x64xf32, #tpu.memory_space<vmem>>, vector<18x18x64xf32>
    %37 = vector.extract_strided_slice %36 {offsets = [0, 0, 0], sizes = [18, 16, 64], strides = [1, 1, 1]} : vector<18x18x64xf32> to vector<18x16x64xf32>
    %38 = vector.extract_strided_slice %36 {offsets = [0, 1, 0], sizes = [18, 16, 64], strides = [1, 1, 1]} : vector<18x18x64xf32> to vector<18x16x64xf32>
    %39 = vector.extract_strided_slice %36 {offsets = [0, 2, 0], sizes = [18, 16, 64], strides = [1, 1, 1]} : vector<18x18x64xf32> to vector<18x16x64xf32>
    %40 = tpu.concatenate %37, %38, %39 in 2 : vector<18x16x64xf32>, vector<18x16x64xf32>, vector<18x16x64xf32> -> vector<18x16x192xf32>
    %c0_25 = arith.constant 0 : index
    %c0_26 = arith.constant 0 : index
    %41 = vector.load %arg5[%c0_25, %c0_26] : memref<1x64xf32, #tpu.memory_space<vmem>>, vector<1x64xf32>
    %42 = vector.shape_cast %41 : vector<1x64xf32> to vector<1x64xf32>
    %43 = vector.broadcast %42 : vector<1x64xf32> to vector<256x64xf32>
    %44 = vector.extract_strided_slice %40 {offsets = [0, 0, 0], sizes = [16, 16, 192], strides = [1, 1, 1]} : vector<18x16x192xf32> to vector<16x16x192xf32>
    %45 = vector.shape_cast %44 : vector<16x16x192xf32> to vector<256x192xf32>
    %46 = arith.truncf %45 : vector<256x192xf32> to vector<256x192xbf16>
    %c0_27 = arith.constant 0 : index
    %c0_28 = arith.constant 0 : index
    %c0_29 = arith.constant 0 : index
    %47 = vector.load %arg4[%c0_27, %c0_28, %c0_29] : memref<3x192x64xbf16, #tpu.memory_space<vmem>>, vector<1x192x64xbf16>
    %48 = vector.shape_cast %47 : vector<1x192x64xbf16> to vector<192x64xbf16>
    %cst_30 = arith.constant dense<0.000000e+00> : vector<256x64xf32>
    %49 = tpu.matmul %46, %48, %cst_30 {dimension_numbers = #tpu.dot_dimension_numbers<[1], [0], [0], [1], [0, 0, 1, 1], [], []>} : vector<256x192xbf16>, vector<192x64xbf16>, vector<256x64xf32> -> vector<256x64xf32>
    %50 = arith.addf %43, %49 : vector<256x64xf32>
    %51 = vector.extract_strided_slice %40 {offsets = [1, 0, 0], sizes = [16, 16, 192], strides = [1, 1, 1]} : vector<18x16x192xf32> to vector<16x16x192xf32>
    %52 = vector.shape_cast %51 : vector<16x16x192xf32> to vector<256x192xf32>
    %53 = arith.truncf %52 : vector<256x192xf32> to vector<256x192xbf16>
    %c1_31 = arith.constant 1 : index
    %c0_32 = arith.constant 0 : index
    %c0_33 = arith.constant 0 : index
    %54 = vector.load %arg4[%c1_31, %c0_32, %c0_33] : memref<3x192x64xbf16, #tpu.memory_space<vmem>>, vector<1x192x64xbf16>
    %55 = vector.shape_cast %54 : vector<1x192x64xbf16> to vector<192x64xbf16>
    %cst_34 = arith.constant dense<0.000000e+00> : vector<256x64xf32>
    %56 = tpu.matmul %53, %55, %cst_34 {dimension_numbers = #tpu.dot_dimension_numbers<[1], [0], [0], [1], [0, 0, 1, 1], [], []>} : vector<256x192xbf16>, vector<192x64xbf16>, vector<256x64xf32> -> vector<256x64xf32>
    %57 = arith.addf %50, %56 : vector<256x64xf32>
    %58 = vector.extract_strided_slice %40 {offsets = [2, 0, 0], sizes = [16, 16, 192], strides = [1, 1, 1]} : vector<18x16x192xf32> to vector<16x16x192xf32>
    %59 = vector.shape_cast %58 : vector<16x16x192xf32> to vector<256x192xf32>
    %60 = arith.truncf %59 : vector<256x192xf32> to vector<256x192xbf16>
    %c2_35 = arith.constant 2 : index
    %c0_36 = arith.constant 0 : index
    %c0_37 = arith.constant 0 : index
    %61 = vector.load %arg4[%c2_35, %c0_36, %c0_37] : memref<3x192x64xbf16, #tpu.memory_space<vmem>>, vector<1x192x64xbf16>
    %62 = vector.shape_cast %61 : vector<1x192x64xbf16> to vector<192x64xbf16>
    %cst_38 = arith.constant dense<0.000000e+00> : vector<256x64xf32>
    %63 = tpu.matmul %60, %62, %cst_38 {dimension_numbers = #tpu.dot_dimension_numbers<[1], [0], [0], [1], [0, 0, 1, 1], [], []>} : vector<256x192xbf16>, vector<192x64xbf16>, vector<256x64xf32> -> vector<256x64xf32>
    %64 = arith.addf %57, %63 : vector<256x64xf32>
    %cst_39 = arith.constant 0.000000e+00 : f32
    %65 = vector.broadcast %cst_39 : f32 to vector<256x64xf32>
    %66 = arith.maximumf %64, %65 : vector<256x64xf32>
    %c0_40 = arith.constant 0 : index
    %c0_41 = arith.constant 0 : index
    %c0_42 = arith.constant 0 : index
    %67 = vector.load %arg6[%c0_40, %c0_41, %c0_42] : memref<1x256x64xf32, #tpu.memory_space<vmem>>, vector<1x256x64xf32>
    %68 = vector.shape_cast %67 : vector<1x256x64xf32> to vector<256x64xf32>
    %69 = vector.shape_cast %66 : vector<256x64xf32> to vector<1x256x64xf32>
    tpu.vector_store %arg6[%c0_40, %c0_41, %c0_42], %69 {strides = array<i32>} : memref<1x256x64xf32, #tpu.memory_space<vmem>>, vector<1x256x64xf32>,
    return
  }
  func.func @transform_0(%arg0: i32) -> (i32, i32, i32, i32) {
    %c0_i32 = arith.constant 0 : i32
    %c0_i32_0 = arith.constant 0 : i32
    %c0_i32_1 = arith.constant 0 : i32
    %c0_i32_2 = arith.constant 0 : i32
    return %arg0, %c0_i32, %c0_i32_0, %c0_i32_1 : i32, i32, i32, i32
  }
  func.func @transform_1(%arg0: i32) -> (i32, i32, i32) {
    %c0_i32 = arith.constant 0 : i32
    %c0_i32_0 = arith.constant 0 : i32
    %c0_i32_1 = arith.constant 0 : i32
    %c0_i32_2 = arith.constant 0 : i32
    return %c0_i32, %c0_i32_0, %c0_i32_1 : i32, i32, i32
  }
  func.func @transform_2(%arg0: i32) -> (i32, i32) {
    %c0_i32 = arith.constant 0 : i32
    %c0_i32_0 = arith.constant 0 : i32
    %c0_i32_1 = arith.constant 0 : i32
    return %c0_i32, %c0_i32_0 : i32, i32
  }
  func.func @transform_3(%arg0: i32) -> (i32, i32, i32) {
    %c0_i32 = arith.constant 0 : i32
    %c0_i32_0 = arith.constant 0 : i32
    %c0_i32_1 = arith.constant 0 : i32
    %c0_i32_2 = arith.constant 0 : i32
    return %c0_i32, %c0_i32_0, %c0_i32_1 : i32, i32, i32
  }
  func.func @transform_4(%arg0: i32) -> (i32, i32) {
    %c0_i32 = arith.constant 0 : i32
    %c0_i32_0 = arith.constant 0 : i32
    %c0_i32_1 = arith.constant 0 : i32
    return %c0_i32, %c0_i32_0 : i32, i32
  }
  func.func @transform_5(%arg0: i32) -> (i32, i32, i32) {
    %c0_i32 = arith.constant 0 : i32
    %c0_i32_0 = arith.constant 0 : i32
    %c0_i32_1 = arith.constant 0 : i32
    return %arg0, %c0_i32, %c0_i32_0 : i32, i32, i32
  }
}

</mosaic_0001>

<llo_original>
// kernel: fcn_backbone_forward.1
$region0: #{fcn_backbone_forward.1}
  #allocation0 [shape = 'u32[]', space=smem, size = 0x4, offset = 0x4, fixed_abs, tag = 'smem constant byte address 0x4 - core index']
  #allocation1 [shape = 'u32[144,128]{1,0:T(1,128)}', space=vmem, size = 0x12000, scoped, tag = 'internal scratch']
  #allocation2 [shape = 'f32[18,18,64]{2,1,0:T(8,128)}', space=vmem, size = 0x36000, scoped, tag = 'scratch operand']
  %s0 = inlined_call_operand.vmem [shape: f32[2,18,18,32], index: 0, kind: input, shape index: {}]
  %s1 = inlined_call_operand.vmem [shape: bf16[3,96,64], index: 1, kind: input, shape index: {}]
  %s2 = inlined_call_operand.vmem [shape: f32[1,64], index: 2, kind: input, shape index: {}]
  %s3 = inlined_call_operand.vmem [shape: bf16[3,192,64], index: 3, kind: input, shape index: {}]
  %s4 = inlined_call_operand.vmem [shape: f32[1,64], index: 4, kind: input, shape index: {}]
  %s5 = inlined_call_operand.hbm [shape: f32[2,256,64], index: 5, kind: output, shape index: {}]
  %s6 = sld [smem:[#allocation0]]
  $region53: #{fcn_backbone_forward.1} parent=0
    _
  %s8 = ssub.s32 1, %s6
  %s9 = scalar_select 0, %s8, %s6
  $region1: #{fcn_backbone_forward.1} parent=0
    #allocation3 [shape = 'u8[262144]{0}', space=vmem, size = 0x40000, scoped, tag = 'output window, operand 0']
    #allocation4 [shape = 's32[2]{0}', space=sflag, size = 0x8, scoped, tag = 'scoped memory for fcn_backbone_forward.1']
    %10 = vsyncpa [#allocation4], 0
    %s11 = scalar_lea.sflag [#allocation4], 1
    %12 = vsyncpa %s11, 0
    loop: start=0, step=1, limit=4
    $region2: #{fcn_backbone_forward.1} parent=1 // loop_pre_header
      _
    $region3: #{fcn_backbone_forward.1} parent=1 // loop_header
      %s14 = sphi 0, %s18
      %p15 = scmp.ge.s32.totalorder %s14, 4
      %s24 = sphi 0, %s26
      %s27 = sphi 0, %s24
      %s28 = sphi 0, %s27
      %s44 = sphi 0, %s28
      %s48 = sphi 0, %s48
      %s50 = sphi 0, %s48
      %s51 = sphi 0, %s50
      %s65 = sphi 0, %s51
      %s69 = sphi 0, %s69
      %s71 = sphi 0, %s69
      %s72 = sphi 0, %s71
      %s86 = sphi 0, %s72
      %s90 = sphi 0, %s90
      %s92 = sphi 0, %s90
      %s93 = sphi 0, %s92
      %s107 = sphi 0, %s93
      %s111 = sphi 0, %s111
      %s113 = sphi 0, %s111
      %s114 = sphi 0, %s113
      %s128 = sphi 0, %s114
      %s134 = sphi 0, %s136
      %s137 = sphi 0, %s134
      %s138 = sphi 0, %s137
      %s154 = sphi 0, %s138
    $region4: #{fcn_backbone_forward.1} parent=1 // loop_header_branch
      %17 = sbr.rel (%p15) target = $region8
    $region5: #{fcn_backbone_forward.1} parent=1 // loop_body
      %s19 = ssub.s32 %s14, 1
      %s20 = ssub.s32 %s14, 2
      %s21 = sadd.s32 %s14, 1
      %s22 = ssub.s32 %s14, %s21
      %p23 = scmp.eq.s32.totalorder %s22, 0
      %s25 = sadd.s32 %s24, 1
      %s26 = scalar_select %p23, %s24, %s25
      %p29 = pneg %p23
      %p30 = scmp.eq.s32.totalorder %s14, 1
      %p31 = por %p29, %p30
      %p32 = scmp.ne.s32.totalorder %s24, %s27
      %p33 = scmp.eq.s32.totalorder %s14, 0
      %p34 = por %p32, %p33
      %p35 = scmp.ne.s32.totalorder %s24, %s27
      %p36 = scmp.eq.s32.totalorder %s19, 1
      %p37 = por %p35, %p36
      %p38 = scmp.ne.s32.totalorder %s27, %s28
      %p39 = scmp.eq.s32.totalorder %s19, 0
      %p40 = por %p38, %p39
      %p41 = scmp.ne.s32.totalorder %s27, %s28
      %p42 = scmp.eq.s32.totalorder %s20, 1
      %p43 = por %p41, %p42
      %p45 = scmp.ne.s32.totalorder %s28, %s44
      %p46 = scmp.eq.s32.totalorder %s20, 0
      %p47 = por %p45, %p46
      %s49 = sadd.s32 %s48, 1
      %p52 = scmp.eq.s32.totalorder %s14, 1
      %p53 = scmp.ne.s32.totalorder %s48, %s50
      %p54 = scmp.eq.s32.totalorder %s14, 0
      %p55 = por %p53, %p54
      %p56 = scmp.ne.s32.totalorder %s48, %s50
      %p57 = scmp.eq.s32.totalorder %s19, 1
      %p58 = por %p56, %p57
      %p59 = scmp.ne.s32.totalorder %s50, %s51
      %p60 = scmp.eq.s32.totalorder %s19, 0
      %p61 = por %p59, %p60
      %p62 = scmp.ne.s32.totalorder %s50, %s51
      %p63 = scmp.eq.s32.totalorder %s20, 1
      %p64 = por %p62, %p63
      %p66 = scmp.ne.s32.totalorder %s51, %s65
      %p67 = scmp.eq.s32.totalorder %s20, 0
      %p68 = por %p66, %p67
      %s70 = sadd.s32 %s69, 1
      %p73 = scmp.eq.s32.totalorder %s14, 1
      %p74 = scmp.ne.s32.totalorder %s69, %s71
      %p75 = scmp.eq.s32.totalorder %s14, 0
      %p76 = por %p74, %p75
      %p77 = scmp.ne.s32.totalorder %s69, %s71
      %p78 = scmp.eq.s32.totalorder %s19, 1
      %p79 = por %p77, %p78
      %p80 = scmp.ne.s32.totalorder %s71, %s72
      %p81 = scmp.eq.s32.totalorder %s19, 0
      %p82 = por %p80, %p81
      %p83 = scmp.ne.s32.totalorder %s71, %s72
      %p84 = scmp.eq.s32.totalorder %s20, 1
      %p85 = por %p83, %p84
      %p87 = scmp.ne.s32.totalorder %s72, %s86
      %p88 = scmp.eq.s32.totalorder %s20, 0
      %p89 = por %p87, %p88
      %s91 = sadd.s32 %s90, 1
      %p94 = scmp.eq.s32.totalorder %s14, 1
      %p95 = scmp.ne.s32.totalorder %s90, %s92
      %p96 = scmp.eq.s32.totalorder %s14, 0
      %p97 = por %p95, %p96
      %p98 = scmp.ne.s32.totalorder %s90, %s92
      %p99 = scmp.eq.s32.totalorder %s19, 1
      %p100 = por %p98, %p99
      %p101 = scmp.ne.s32.totalorder %s92, %s93
      %p102 = scmp.eq.s32.totalorder %s19, 0
      %p103 = por %p101, %p102
      %p104 = scmp.ne.s32.totalorder %s92, %s93
      %p105 = scmp.eq.s32.totalorder %s20, 1
      %p106 = por %p104, %p105
      %p108 = scmp.ne.s32.totalorder %s93, %s107
      %p109 = scmp.eq.s32.totalorder %s20, 0
      %p110 = por %p108, %p109
      %s112 = sadd.s32 %s111, 1
      %p115 = scmp.eq.s32.totalorder %s14, 1
      %p116 = scmp.ne.s32.totalorder %s111, %s113
      %p117 = scmp.eq.s32.totalorder %s14, 0
      %p118 = por %p116, %p117
      %p119 = scmp.ne.s32.totalorder %s111, %s113
      %p120 = scmp.eq.s32.totalorder %s19, 1
      %p121 = por %p119, %p120
      %p122 = scmp.ne.s32.totalorder %s113, %s114
      %p123 = scmp.eq.s32.totalorder %s19, 0
      %p124 = por %p122, %p123
      %p125 = scmp.ne.s32.totalorder %s113, %s114
      %p126 = scmp.eq.s32.totalorder %s20, 1
      %p127 = por %p125, %p126
      %p129 = scmp.ne.s32.totalorder %s114, %s128
      %p130 = scmp.eq.s32.totalorder %s20, 0
      %p131 = por %p129, %p130
      %s132 = ssub.s32 %s14, %s21
      %p133 = scmp.eq.s32.totalorder %s132, 0
      %s135 = sadd.s32 %s134, 1
      %s136 = scalar_select %p133, %s134, %s135
      %p139 = pneg %p133
      %p140 = scmp.eq.s32.totalorder %s14, 1
      %p141 = por %p139, %p140
      %p142 = scmp.ne.s32.totalorder %s134, %s137
      %p143 = scmp.eq.s32.totalorder %s14, 0
      %p144 = por %p142, %p143
      %p145 = scmp.ne.s32.totalorder %s134, %s137
      %p146 = scmp.eq.s32.totalorder %s19, 1
      %p147 = por %p145, %p146
      %p148 = scmp.ne.s32.totalorder %s137, %s138
      %p149 = scmp.eq.s32.totalorder %s19, 0
      %p150 = por %p148, %p149
      %p151 = scmp.ne.s32.totalorder %s137, %s138
      %p152 = scmp.eq.s32.totalorder %s20, 1
      %p153 = por %p151, %p152
      %p155 = scmp.ne.s32.totalorder %s138, %s154
      %p156 = scmp.eq.s32.totalorder %s20, 0
      %p157 = por %p155, %p156
      %p158 = scmp.le.s32.totalorder 1, %s14
      %p159 = scmp.lt.s32.totalorder %s14, 3
      %p160 = pnand %p158, %p159
      %p161 = pneg %p160
      // Predicated region
      $region9: #{fcn_backbone_forward.1} parent=5 // pred_check
        _
      $region10: #{fcn_backbone_forward.1} parent=5 // pred_check_branch
        %163 = sbr.rel (%p160) target = $region12
      $region11: #{fcn_backbone_forward.1} parent=5 // pred_region
        %s164 = ssub.s32 %s14, 1
        // Predicated region
        $region13: #{fcn_backbone_forward.1} parent=11 // pred_check
          %p165 = pneg %p61
        $region14: #{fcn_backbone_forward.1} parent=11 // pred_check_branch
          %167 = sbr.rel (%p165) target = $region16
        $region15: #{fcn_backbone_forward.1} parent=11 // pred_region
          _
        $region16: #{fcn_backbone_forward.1} parent=11 // pred_fallthru
          _
        // Predicated region
        $region17: #{fcn_backbone_forward.1} parent=11 // pred_check
          %p168 = pneg %p82
        $region18: #{fcn_backbone_forward.1} parent=11 // pred_check_branch
          %170 = sbr.rel (%p168) target = $region20
        $region19: #{fcn_backbone_forward.1} parent=11 // pred_region
          _
        $region20: #{fcn_backbone_forward.1} parent=11 // pred_fallthru
          _
        // Predicated region
        $region21: #{fcn_backbone_forward.1} parent=11 // pred_check
          %p171 = pneg %p103
        $region22: #{fcn_backbone_forward.1} parent=11 // pred_check_branch
          %173 = sbr.rel (%p171) target = $region24
        $region23: #{fcn_backbone_forward.1} parent=11 // pred_region
          _
        $region24: #{fcn_backbone_forward.1} parent=11 // pred_fallthru
          _
        // Predicated region
        $region25: #{fcn_backbone_forward.1} parent=11 // pred_check
          %p174 = pneg %p124
        $region26: #{fcn_backbone_forward.1} parent=11 // pred_check_branch
          %176 = sbr.rel (%p174) target = $region28
        $region27: #{fcn_backbone_forward.1} parent=11 // pred_region
          _
        $region28: #{fcn_backbone_forward.1} parent=11 // pred_fallthru
          _
      $region12: #{fcn_backbone_forward.1} parent=5 // pred_fallthru
        _
      %p177 = scmp.lt.s32.totalorder %s14, 2
      // Predicated region
      $region29: #{fcn_backbone_forward.1} parent=5 // pred_check
        %p178 = pneg %p177
      $region30: #{fcn_backbone_forward.1} parent=5 // pred_check_branch
        %180 = sbr.rel (%p178) target = $region32
      $region31: #{fcn_backbone_forward.1} parent=5 // pred_region
        // Predicated region
        $region33: #{fcn_backbone_forward.1} parent=31 // pred_check
          %p181 = pneg %p34
        $region34: #{fcn_backbone_forward.1} parent=31 // pred_check_branch
          %183 = sbr.rel (%p181) target = $region36
        $region35: #{fcn_backbone_forward.1} parent=31 // pred_region
          %p184 = scmp.lt.s32.totalorder %s14, 1
          %s185 = scalar_select %p184, %s14, 1
          %s186 = smul.addr %s185, 54
          %s187 = smul.addr %s186, 8
          %s188 = scalar_lea.vmem %s0, %s187
        $region36: #{fcn_backbone_forward.1} parent=31 // pred_fallthru
          _
      $region32: #{fcn_backbone_forward.1} parent=5 // pred_fallthru
        _
      %p189 = scmp.le.s32.totalorder 1, %s14
      %p190 = scmp.lt.s32.totalorder %s14, 3
      %p191 = pnand %p189, %p190
      %p192 = pneg %p191
      // Predicated region
      $region37: #{fcn_backbone_forward.1} parent=5 // pred_check
        _
      $region38: #{fcn_backbone_forward.1} parent=5 // pred_check_branch
        %194 = sbr.rel (%p191) target = $region40
      $region39: #{fcn_backbone_forward.1} parent=5 // pred_region
        %s195 = ssub.s32 %s14, 1
        %p196 = scmp.lt.s32.totalorder %s19, 1
        %s197 = scalar_select %p196, %s19, 1
        %s198 = smul.addr %s197, 54
        %s199 = smul.addr %s198, 8
        %s200 = scalar_lea.vmem %s0, %s199
        %p201 = pneg %p40
        %p202 = pneg %p37
        %p203 = pneg %p61
        %p204 = pneg %p58
        %p205 = pneg %p82
        %p206 = pneg %p79
        %p207 = pneg %p103
        %p208 = pneg %p100
        %p209 = pneg %p124
        %p210 = pneg %p121
        %p211 = pneg %p150
        %p212 = pneg %p147
        %s213 = sand.u32 %s137, 1
        %s214 = scalar_lea.sflag [#allocation4], %s213
        %s215 = sand.u32 %s137, 1
        %s216 = smul.addr %s215, 256
        %s217 = scalar_lea.vmem [#allocation3], %s216
        %p218 = scmp.lt.s32.totalorder %s19, 1
        %s219 = scalar_select %p218, %s19, 1
        %s220 = smul.addr %s219, 54
        %s221 = smul.addr %s220, 8
        %s222 = scalar_lea.vmem %s0, %s221
        %v224 = vld [vmem:[%s222] sm:$0xff]
        %v225 = vld [vmem:[%s222 + $0x8] sm:$0xff]
        %v226 = vld [vmem:[%s222 + $0x10] sm:$0x3]
        %v227 = vld [vmem:[%s222 + $0x18] sm:$0xff]
        %v228 = vld [vmem:[%s222 + $0x20] sm:$0xff]
        %v229 = vld [vmem:[%s222 + $0x28] sm:$0x3]
        %v230 = vld [vmem:[%s222 + $0x30] sm:$0xff]
        %v231 = vld [vmem:[%s222 + $0x38] sm:$0xff]
        %v232 = vld [vmem:[%s222 + $0x40] sm:$0x3]
        %v233 = vld [vmem:[%s222 + $0x48] sm:$0xff]
        %v234 = vld [vmem:[%s222 + $0x50] sm:$0xff]
        %v235 = vld [vmem:[%s222 + $0x58] sm:$0x3]
        %v236 = vld [vmem:[%s222 + $0x60] sm:$0xff]
        %v237 = vld [vmem:[%s222 + $0x68] sm:$0xff]
        %v238 = vld [vmem:[%s222 + $0x70] sm:$0x3]
        %v239 = vld [vmem:[%s222 + $0x78] sm:$0xff]
        %v240 = vld [vmem:[%s222 + $0x80] sm:$0xff]
        %v241 = vld [vmem:[%s222 + $0x88] sm:$0x3]
        %v242 = vld [vmem:[%s222 + $0x90] sm:$0xff]
        %v243 = vld [vmem:[%s222 + $0x98] sm:$0xff]
        %v244 = vld [vmem:[%s222 + $0xa0] sm:$0x3]
        %v245 = vld [vmem:[%s222 + $0xa8] sm:$0xff]
        %v246 = vld [vmem:[%s222 + $0xb0] sm:$0xff]
        %v247 = vld [vmem:[%s222 + $0xb8] sm:$0x3]
        %v248 = vld [vmem:[%s222 + $0xc0] sm:$0xff]
        %v249 = vld [vmem:[%s222 + $0xc8] sm:$0xff]
        %v250 = vld [vmem:[%s222 + $0xd0] sm:$0x3]
        %v251 = vld [vmem:[%s222 + $0xd8] sm:$0xff]
        %v252 = vld [vmem:[%s222 + $0xe0] sm:$0xff]
        %v253 = vld [vmem:[%s222 + $0xe8] sm:$0x3]
        %v254 = vld [vmem:[%s222 + $0xf0] sm:$0xff]
        %v255 = vld [vmem:[%s222 + $0xf8] sm:$0xff]
        %v256 = vld [vmem:[%s222 + $0x100] sm:$0x3]
        %v257 = vld [vmem:[%s222 + $0x108] sm:$0xff]
        %v258 = vld [vmem:[%s222 + $0x110] sm:$0xff]
        %v259 = vld [vmem:[%s222 + $0x118] sm:$0x3]
        %v260 = vld [vmem:[%s222 + $0x120] sm:$0xff]
        %v261 = vld [vmem:[%s222 + $0x128] sm:$0xff]
        %v262 = vld [vmem:[%s222 + $0x130] sm:$0x3]
        %v263 = vld [vmem:[%s222 + $0x138] sm:$0xff]
        %v264 = vld [vmem:[%s222 + $0x140] sm:$0xff]
        %v265 = vld [vmem:[%s222 + $0x148] sm:$0x3]
        %v266 = vld [vmem:[%s222 + $0x150] sm:$0xff]
        %v267 = vld [vmem:[%s222 + $0x158] sm:$0xff]
        %v268 = vld [vmem:[%s222 + $0x160] sm:$0x3]
        %v269 = vld [vmem:[%s222 + $0x168] sm:$0xff]
        %v270 = vld [vmem:[%s222 + $0x170] sm:$0xff]
        %v271 = vld [vmem:[%s222 + $0x178] sm:$0x3]
        %v272 = vld [vmem:[%s222 + $0x180] sm:$0xff]
        %v273 = vld [vmem:[%s222 + $0x188] sm:$0xff]
        %v274 = vld [vmem:[%s222 + $0x190] sm:$0x3]
        %v275 = vld [vmem:[%s222 + $0x198] sm:$0xff]
        %v276 = vld [vmem:[%s222 + $0x1a0] sm:$0xff]
        %v277 = vld [vmem:[%s222 + $0x1a8] sm:$0x3]
        %vm332 = vcmask 1046528
        %v333 = vrot.slane %v224, 1
        %v334 = vrot.slane %v225, 1
        %v335 = vsel %vm332, %v333, %v334
        %v336 = vrot.slane %v226, 1
        %v337 = vsel %vm332, %v334, %v336
        %v338 = vrot.slane %v227, 1
        %v339 = vrot.slane %v228, 1
        %v340 = vsel %vm332, %v338, %v339
        %v341 = vrot.slane %v229, 1
        %v342 = vsel %vm332, %v339, %v341
        %v343 = vrot.slane %v230, 1
        %v344 = vrot.slane %v231, 1
        %v345 = vsel %vm332, %v343, %v344
        %v346 = vrot.slane %v232, 1
        %v347 = vsel %vm332, %v344, %v346
        %v348 = vrot.slane %v233, 1
        %v349 = vrot.slane %v234, 1
        %v350 = vsel %vm332, %v348, %v349
        %v351 = vrot.slane %v235, 1
        %v352 = vsel %vm332, %v349, %v351
        %v353 = vrot.slane %v236, 1
        %v354 = vrot.slane %v237, 1
        %v355 = vsel %vm332, %v353, %v354
        %v356 = vrot.slane %v238, 1
        %v357 = vsel %vm332, %v354, %v356
        %v358 = vrot.slane %v239, 1
        %v359 = vrot.slane %v240, 1
        %v360 = vsel %vm332, %v358, %v359
        %v361 = vrot.slane %v241, 1
        %v362 = vsel %vm332, %v359, %v361
        %v363 = vrot.slane %v242, 1
        %v364 = vrot.slane %v243, 1
        %v365 = vsel %vm332, %v363, %v364
        %v366 = vrot.slane %v244, 1
        %v367 = vsel %vm332, %v364, %v366
        %v368 = vrot.slane %v245, 1
        %v369 = vrot.slane %v246, 1
        %v370 = vsel %vm332, %v368, %v369
        %v371 = vrot.slane %v247, 1
        %v372 = vsel %vm332, %v369, %v371
        %v373 = vrot.slane %v248, 1
        %v374 = vrot.slane %v249, 1
        %v375 = vsel %vm332, %v373, %v374
        %v376 = vrot.slane %v250, 1
        %v377 = vsel %vm332, %v374, %v376
        %v378 = vrot.slane %v251, 1
        %v379 = vrot.slane %v252, 1
        %v380 = vsel %vm332, %v378, %v379
        %v381 = vrot.slane %v253, 1
        %v382 = vsel %vm332, %v379, %v381
        %v383 = vrot.slane %v254, 1
        %v384 = vrot.slane %v255, 1
        %v385 = vsel %vm332, %v383, %v384
        %v386 = vrot.slane %v256, 1
        %v387 = vsel %vm332, %v384, %v386
        %v388 = vrot.slane %v257, 1
        %v389 = vrot.slane %v258, 1
        %v390 = vsel %vm332, %v388, %v389
        %v391 = vrot.slane %v259, 1
        %v392 = vsel %vm332, %v389, %v391
        %v393 = vrot.slane %v260, 1
        %v394 = vrot.slane %v261, 1
        %v395 = vsel %vm332, %v393, %v394
        %v396 = vrot.slane %v262, 1
        %v397 = vsel %vm332, %v394, %v396
        %v398 = vrot.slane %v263, 1
        %v399 = vrot.slane %v264, 1
        %v400 = vsel %vm332, %v398, %v399
        %v401 = vrot.slane %v265, 1
        %v402 = vsel %vm332, %v399, %v401
        %v403 = vrot.slane %v266, 1
        %v404 = vrot.slane %v267, 1
        %v405 = vsel %vm332, %v403, %v404
        %v406 = vrot.slane %v268, 1
        %v407 = vsel %vm332, %v404, %v406
        %v408 = vrot.slane %v269, 1
        %v409 = vrot.slane %v270, 1
        %v410 = vsel %vm332, %v408, %v409
        %v411 = vrot.slane %v271, 1
        %v412 = vsel %vm332, %v409, %v411
        %v413 = vrot.slane %v272, 1
        %v414 = vrot.slane %v273, 1
        %v415 = vsel %vm332, %v413, %v414
        %v416 = vrot.slane %v274, 1
        %v417 = vsel %vm332, %v414, %v416
        %v418 = vrot.slane %v275, 1
        %v419 = vrot.slane %v276, 1
        %v420 = vsel %vm332, %v418, %v419
        %v421 = vrot.slane %v277, 1
        %v422 = vsel %vm332, %v419, %v421
        %423 = vrot.lane.b32.xlu0 %v335, 32
        %v424 = vpop.permute.xlu0 %423
        %425 = vrot.lane.b32.xlu0 %v337, 32
        %v426 = vpop.permute.xlu0 %425
        %427 = vrot.lane.b32.xlu0 %v340, 32
        %v428 = vpop.permute.xlu0 %427
        %429 = vrot.lane.b32.xlu0 %v342, 32
        %v430 = vpop.permute.xlu0 %429
        %431 = vrot.lane.b32.xlu0 %v345, 32
        %v432 = vpop.permute.xlu0 %431
        %433 = vrot.lane.b32.xlu0 %v347, 32
        %v434 = vpop.permute.xlu0 %433
        %435 = vrot.lane.b32.xlu0 %v350, 32
        %v436 = vpop.permute.xlu0 %435
        %437 = vrot.lane.b32.xlu0 %v352, 32
        %v438 = vpop.permute.xlu0 %437
        %439 = vrot.lane.b32.xlu0 %v355, 32
        %v440 = vpop.permute.xlu0 %439
        %441 = vrot.lane.b32.xlu0 %v357, 32
        %v442 = vpop.permute.xlu0 %441
        %443 = vrot.lane.b32.xlu0 %v360, 32
        %v444 = vpop.permute.xlu0 %443
        %445 = vrot.lane.b32.xlu0 %v362, 32
        %v446 = vpop.permute.xlu0 %445
        %447 = vrot.lane.b32.xlu0 %v365, 32
        %v448 = vpop.permute.xlu0 %447
        %449 = vrot.lane.b32.xlu0 %v367, 32
        %v450 = vpop.permute.xlu0 %449
        %451 = vrot.lane.b32.xlu0 %v370, 32
        %v452 = vpop.permute.xlu0 %451
        %453 = vrot.lane.b32.xlu0 %v372, 32
        %v454 = vpop.permute.xlu0 %453
        %455 = vrot.lane.b32.xlu0 %v375, 32
        %v456 = vpop.permute.xlu0 %455
        %457 = vrot.lane.b32.xlu0 %v377, 32
        %v458 = vpop.permute.xlu0 %457
        %459 = vrot.lane.b32.xlu0 %v380, 32
        %v460 = vpop.permute.xlu0 %459
        %461 = vrot.lane.b32.xlu0 %v382, 32
        %v462 = vpop.permute.xlu0 %461
        %463 = vrot.lane.b32.xlu0 %v385, 32
        %v464 = vpop.permute.xlu0 %463
        %465 = vrot.lane.b32.xlu0 %v387, 32
        %v466 = vpop.permute.xlu0 %465
        %467 = vrot.lane.b32.xlu0 %v390, 32
        %v468 = vpop.permute.xlu0 %467
        %469 = vrot.lane.b32.xlu0 %v392, 32
        %v470 = vpop.permute.xlu0 %469
        %471 = vrot.lane.b32.xlu0 %v395, 32
        %v472 = vpop.permute.xlu0 %471
        %473 = vrot.lane.b32.xlu0 %v397, 32
        %v474 = vpop.permute.xlu0 %473
        %475 = vrot.lane.b32.xlu0 %v400, 32
        %v476 = vpop.permute.xlu0 %475
        %477 = vrot.lane.b32.xlu0 %v402, 32
        %v478 = vpop.permute.xlu0 %477
        %479 = vrot.lane.b32.xlu0 %v405, 32
        %v480 = vpop.permute.xlu0 %479
        %481 = vrot.lane.b32.xlu0 %v407, 32
        %v482 = vpop.permute.xlu0 %481
        %483 = vrot.lane.b32.xlu0 %v410, 32
        %v484 = vpop.permute.xlu0 %483
        %485 = vrot.lane.b32.xlu0 %v412, 32
        %v486 = vpop.permute.xlu0 %485
        %487 = vrot.lane.b32.xlu0 %v415, 32
        %v488 = vpop.permute.xlu0 %487
        %489 = vrot.lane.b32.xlu0 %v417, 32
        %v490 = vpop.permute.xlu0 %489
        %491 = vrot.lane.b32.xlu0 %v420, 32
        %v492 = vpop.permute.xlu0 %491
        %493 = vrot.lane.b32.xlu0 %v422, 32
        %v494 = vpop.permute.xlu0 %493
        %vm531 = vcmask 1045504
        %v532 = vrot.slane %v224, 2
        %v533 = vrot.slane %v225, 2
        %v534 = vsel %vm531, %v532, %v533
        %v535 = vrot.slane %v226, 2
        %v536 = vsel %vm531, %v533, %v535
        %v537 = vrot.slane %v227, 2
        %v538 = vrot.slane %v228, 2
        %v539 = vsel %vm531, %v537, %v538
        %v540 = vrot.slane %v229, 2
        %v541 = vsel %vm531, %v538, %v540
        %v542 = vrot.slane %v230, 2
        %v543 = vrot.slane %v231, 2
        %v544 = vsel %vm531, %v542, %v543
        %v545 = vrot.slane %v232, 2
        %v546 = vsel %vm531, %v543, %v545
        %v547 = vrot.slane %v233, 2
        %v548 = vrot.slane %v234, 2
        %v549 = vsel %vm531, %v547, %v548
        %v550 = vrot.slane %v235, 2
        %v551 = vsel %vm531, %v548, %v550
        %v552 = vrot.slane %v236, 2
        %v553 = vrot.slane %v237, 2
        %v554 = vsel %vm531, %v552, %v553
        %v555 = vrot.slane %v238, 2
        %v556 = vsel %vm531, %v553, %v555
        %v557 = vrot.slane %v239, 2
        %v558 = vrot.slane %v240, 2
        %v559 = vsel %vm531, %v557, %v558
        %v560 = vrot.slane %v241, 2
        %v561 = vsel %vm531, %v558, %v560
        %v562 = vrot.slane %v242, 2
        %v563 = vrot.slane %v243, 2
        %v564 = vsel %vm531, %v562, %v563
        %v565 = vrot.slane %v244, 2
        %v566 = vsel %vm531, %v563, %v565
        %v567 = vrot.slane %v245, 2
        %v568 = vrot.slane %v246, 2
        %v569 = vsel %vm531, %v567, %v568
        %v570 = vrot.slane %v247, 2
        %v571 = vsel %vm531, %v568, %v570
        %v572 = vrot.slane %v248, 2
        %v573 = vrot.slane %v249, 2
        %v574 = vsel %vm531, %v572, %v573
        %v575 = vrot.slane %v250, 2
        %v576 = vsel %vm531, %v573, %v575
        %v577 = vrot.slane %v251, 2
        %v578 = vrot.slane %v252, 2
        %v579 = vsel %vm531, %v577, %v578
        %v580 = vrot.slane %v253, 2
        %v581 = vsel %vm531, %v578, %v580
        %v582 = vrot.slane %v254, 2
        %v583 = vrot.slane %v255, 2
        %v584 = vsel %vm531, %v582, %v583
        %v585 = vrot.slane %v256, 2
        %v586 = vsel %vm531, %v583, %v585
        %v587 = vrot.slane %v257, 2
        %v588 = vrot.slane %v258, 2
        %v589 = vsel %vm531, %v587, %v588
        %v590 = vrot.slane %v259, 2
        %v591 = vsel %vm531, %v588, %v590
        %v592 = vrot.slane %v260, 2
        %v593 = vrot.slane %v261, 2
        %v594 = vsel %vm531, %v592, %v593
        %v595 = vrot.slane %v262, 2
        %v596 = vsel %vm531, %v593, %v595
        %v597 = vrot.slane %v263, 2
        %v598 = vrot.slane %v264, 2
        %v599 = vsel %vm531, %v597, %v598
        %v600 = vrot.slane %v265, 2
        %v601 = vsel %vm531, %v598, %v600
        %v602 = vrot.slane %v266, 2
        %v603 = vrot.slane %v267, 2
        %v604 = vsel %vm531, %v602, %v603
        %v605 = vrot.slane %v268, 2
        %v606 = vsel %vm531, %v603, %v605
        %v607 = vrot.slane %v269, 2
        %v608 = vrot.slane %v270, 2
        %v609 = vsel %vm531, %v607, %v608
        %v610 = vrot.slane %v271, 2
        %v611 = vsel %vm531, %v608, %v610
        %v612 = vrot.slane %v272, 2
        %v613 = vrot.slane %v273, 2
        %v614 = vsel %vm531, %v612, %v613
        %v615 = vrot.slane %v274, 2
        %v616 = vsel %vm531, %v613, %v615
        %v617 = vrot.slane %v275, 2
        %v618 = vrot.slane %v276, 2
        %v619 = vsel %vm531, %v617, %v618
        %v620 = vrot.slane %v277, 2
        %v621 = vsel %vm531, %v618, %v620
        %622 = vrot.lane.b32.xlu0 %v534, 64
        %v623 = vpop.permute.xlu0 %622
        %624 = vrot.lane.b32.xlu0 %v536, 64
        %v625 = vpop.permute.xlu0 %624
        %626 = vrot.lane.b32.xlu0 %v539, 64
        %v627 = vpop.permute.xlu0 %626
        %628 = vrot.lane.b32.xlu0 %v541, 64
        %v629 = vpop.permute.xlu0 %628
        %630 = vrot.lane.b32.xlu0 %v544, 64
        %v631 = vpop.permute.xlu0 %630
        %632 = vrot.lane.b32.xlu0 %v546, 64
        %v633 = vpop.permute.xlu0 %632
        %634 = vrot.lane.b32.xlu0 %v549, 64
        %v635 = vpop.permute.xlu0 %634
        %636 = vrot.lane.b32.xlu0 %v551, 64
        %v637 = vpop.permute.xlu0 %636
        %638 = vrot.lane.b32.xlu0 %v554, 64
        %v639 = vpop.permute.xlu0 %638
        %640 = vrot.lane.b32.xlu0 %v556, 64
        %v641 = vpop.permute.xlu0 %640
        %642 = vrot.lane.b32.xlu0 %v559, 64
        %v643 = vpop.permute.xlu0 %642
        %644 = vrot.lane.b32.xlu0 %v561, 64
        %v645 = vpop.permute.xlu0 %644
        %646 = vrot.lane.b32.xlu0 %v564, 64
        %v647 = vpop.permute.xlu0 %646
        %648 = vrot.lane.b32.xlu0 %v566, 64
        %v649 = vpop.permute.xlu0 %648
        %650 = vrot.lane.b32.xlu0 %v569, 64
        %v651 = vpop.permute.xlu0 %650
        %652 = vrot.lane.b32.xlu0 %v571, 64
        %v653 = vpop.permute.xlu0 %652
        %654 = vrot.lane.b32.xlu0 %v574, 64
        %v655 = vpop.permute.xlu0 %654
        %656 = vrot.lane.b32.xlu0 %v576, 64
        %v657 = vpop.permute.xlu0 %656
        %658 = vrot.lane.b32.xlu0 %v579, 64
        %v659 = vpop.permute.xlu0 %658
        %660 = vrot.lane.b32.xlu0 %v581, 64
        %v661 = vpop.permute.xlu0 %660
        %662 = vrot.lane.b32.xlu0 %v584, 64
        %v663 = vpop.permute.xlu0 %662
        %664 = vrot.lane.b32.xlu0 %v586, 64
        %v665 = vpop.permute.xlu0 %664
        %666 = vrot.lane.b32.xlu0 %v589, 64
        %v667 = vpop.permute.xlu0 %666
        %668 = vrot.lane.b32.xlu0 %v591, 64
        %v669 = vpop.permute.xlu0 %668
        %670 = vrot.lane.b32.xlu0 %v594, 64
        %v671 = vpop.permute.xlu0 %670
        %672 = vrot.lane.b32.xlu0 %v596, 64
        %v673 = vpop.permute.xlu0 %672
        %674 = vrot.lane.b32.xlu0 %v599, 64
        %v675 = vpop.permute.xlu0 %674
        %676 = vrot.lane.b32.xlu0 %v601, 64
        %v677 = vpop.permute.xlu0 %676
        %678 = vrot.lane.b32.xlu0 %v604, 64
        %v679 = vpop.permute.xlu0 %678
        %680 = vrot.lane.b32.xlu0 %v606, 64
        %v681 = vpop.permute.xlu0 %680
        %682 = vrot.lane.b32.xlu0 %v609, 64
        %v683 = vpop.permute.xlu0 %682
        %684 = vrot.lane.b32.xlu0 %v611, 64
        %v685 = vpop.permute.xlu0 %684
        %686 = vrot.lane.b32.xlu0 %v614, 64
        %v687 = vpop.permute.xlu0 %686
        %688 = vrot.lane.b32.xlu0 %v616, 64
        %v689 = vpop.permute.xlu0 %688
        %690 = vrot.lane.b32.xlu0 %v619, 64
        %v691 = vpop.permute.xlu0 %690
        %692 = vrot.lane.b32.xlu0 %v621, 64
        %v693 = vpop.permute.xlu0 %692
        %vm730 = vcmask 261120
        %v731 = vsel %vm730, %v224, %v424
        %v732 = vsel %vm730, %v225, %v426
        %v733 = vsel %vm730, %v227, %v428
        %v734 = vsel %vm730, %v228, %v430
        %v735 = vsel %vm730, %v230, %v432
        %v736 = vsel %vm730, %v231, %v434
        %v737 = vsel %vm730, %v233, %v436
        %v738 = vsel %vm730, %v234, %v438
        %v739 = vsel %vm730, %v236, %v440
        %v740 = vsel %vm730, %v237, %v442
        %v741 = vsel %vm730, %v239, %v444
        %v742 = vsel %vm730, %v240, %v446
        %v743 = vsel %vm730, %v242, %v448
        %v744 = vsel %vm730, %v243, %v450
        %v745 = vsel %vm730, %v245, %v452
        %v746 = vsel %vm730, %v246, %v454
        %v747 = vsel %vm730, %v248, %v456
        %v748 = vsel %vm730, %v249, %v458
        %v749 = vsel %vm730, %v251, %v460
        %v750 = vsel %vm730, %v252, %v462
        %v751 = vsel %vm730, %v254, %v464
        %v752 = vsel %vm730, %v255, %v466
        %v753 = vsel %vm730, %v257, %v468
        %v754 = vsel %vm730, %v258, %v470
        %v755 = vsel %vm730, %v260, %v472
        %v756 = vsel %vm730, %v261, %v474
        %v757 = vsel %vm730, %v263, %v476
        %v758 = vsel %vm730, %v264, %v478
        %v759 = vsel %vm730, %v266, %v480
        %v760 = vsel %vm730, %v267, %v482
        %v761 = vsel %vm730, %v269, %v484
        %v762 = vsel %vm730, %v270, %v486
        %v763 = vsel %vm730, %v272, %v488
        %v764 = vsel %vm730, %v273, %v490
        %v765 = vsel %vm730, %v275, %v492
        %v766 = vsel %vm730, %v276, %v494
        %vm767 = vcmask 523264
        %v768 = vsel %vm767, %v731, %v623
        %v769 = vsel %vm767, %v732, %v625
        %v770 = vsel %vm767, %v733, %v627
        %v771 = vsel %vm767, %v734, %v629
        %v772 = vsel %vm767, %v735, %v631
        %v773 = vsel %vm767, %v736, %v633
        %v774 = vsel %vm767, %v737, %v635
        %v775 = vsel %vm767, %v738, %v637
        %v776 = vsel %vm767, %v739, %v639
        %v777 = vsel %vm767, %v740, %v641
        %v778 = vsel %vm767, %v741, %v643
        %v779 = vsel %vm767, %v742, %v645
        %v780 = vsel %vm767, %v743, %v647
        %v781 = vsel %vm767, %v744, %v649
        %v782 = vsel %vm767, %v745, %v651
        %v783 = vsel %vm767, %v746, %v653
        %v784 = vsel %vm767, %v747, %v655
        %v785 = vsel %vm767, %v748, %v657
        %v786 = vsel %vm767, %v749, %v659
        %v787 = vsel %vm767, %v750, %v661
        %v788 = vsel %vm767, %v751, %v663
        %v789 = vsel %vm767, %v752, %v665
        %v790 = vsel %vm767, %v753, %v667
        %v791 = vsel %vm767, %v754, %v669
        %v792 = vsel %vm767, %v755, %v671
        %v793 = vsel %vm767, %v756, %v673
        %v794 = vsel %vm767, %v757, %v675
        %v795 = vsel %vm767, %v758, %v677
        %v796 = vsel %vm767, %v759, %v679
        %v797 = vsel %vm767, %v760, %v681
        %v798 = vsel %vm767, %v761, %v683
        %v799 = vsel %vm767, %v762, %v685
        %v800 = vsel %vm767, %v763, %v687
        %v801 = vsel %vm767, %v764, %v689
        %v802 = vsel %vm767, %v765, %v691
        %v803 = vsel %vm767, %v766, %v693
        %v804 = vld [vmem:[%s2] sm:$0x1]
        %v806 = vlaneseq
        %v807 = vshrl.u32 %v806, 7
        %v808 = vsub.s32 0, %v807
        %v809 = vrot.slane %v804, %v808
        %v811 = vpack.c.bf16 %v769, %v768
        %v812 = vpack.c.bf16 %v771, %v770
        %v813 = vpack.c.bf16 %v773, %v772
        %v814 = vpack.c.bf16 %v775, %v774
        %v815 = vpack.c.bf16 %v777, %v776
        %v816 = vpack.c.bf16 %v779, %v778
        %v817 = vpack.c.bf16 %v781, %v780
        %v818 = vpack.c.bf16 %v783, %v782
        %v819 = vpack.c.bf16 %v785, %v784
        %v820 = vpack.c.bf16 %v787, %v786
        %v821 = vpack.c.bf16 %v789, %v788
        %v822 = vpack.c.bf16 %v791, %v790
        %v823 = vpack.c.bf16 %v793, %v792
        %v824 = vpack.c.bf16 %v795, %v794
        %v825 = vpack.c.bf16 %v797, %v796
        %v826 = vpack.c.bf16 %v799, %v798
        %v827 = vld [vmem:[%s1] sm:$0xf]
        %v828 = vld [vmem:[%s1 + $0x4] sm:$0xf]
        %v829 = vld [vmem:[%s1 + $0x8] sm:$0xf]
        %v830 = vld [vmem:[%s1 + $0xc] sm:$0xf]
        %v831 = vld [vmem:[%s1 + $0x10] sm:$0xf]
        %v832 = vld [vmem:[%s1 + $0x14] sm:$0xf]
        %v833 = vld [vmem:[%s1 + $0x18] sm:$0xf]
        %v834 = vld [vmem:[%s1 + $0x1c] sm:$0xf]
        %v835 = vld [vmem:[%s1 + $0x20] sm:$0xf]
        %v836 = vld [vmem:[%s1 + $0x24] sm:$0xf]
        %v837 = vld [vmem:[%s1 + $0x28] sm:$0xf]
        %v838 = vld [vmem:[%s1 + $0x2c] sm:$0xf]
        %v851 = vunpack.c.l.b16 %v827
        %v852 = vunpack.c.l.b16 %v828
        %v853 = vunpack.c.l.b16 %v829
        %v854 = vunpack.c.l.b16 %v830
        %v855 = vunpack.c.l.b16 %v831
        %v856 = vunpack.c.l.b16 %v832
        %v857 = vunpack.c.l.b16 %v833
        %v858 = vunpack.c.l.b16 %v834
        %v859 = vunpack.c.l.b16 %v835
        %v860 = vunpack.c.l.b16 %v836
        %v861 = vunpack.c.l.b16 %v837
        %v862 = vunpack.c.l.b16 %v838
        %v863 = vpack.c.b16 %v852, %v851
        %v864 = vpack.c.b16 %v854, %v853
        %v865 = vpack.c.b16 %v856, %v855
        %v866 = vpack.c.b16 %v858, %v857
        %v867 = vpack.c.b16 %v860, %v859
        %v868 = vpack.c.b16 %v862, %v861
        %vm875 = vcmask 785408
        %v877 = vsel %vm875, %v811, 0
        %v880 = vsel %vm875, %v812, 0
        %v883 = vsel %vm875, %v813, 0
        %v886 = vsel %vm875, %v814, 0
        %v889 = vsel %vm875, %v815, 0
        %v892 = vsel %vm875, %v816, 0
        %v895 = vsel %vm875, %v817, 0
        %v898 = vsel %vm875, %v818, 0
        %v901 = vsel %vm875, %v819, 0
        %v904 = vsel %vm875, %v820, 0
        %v907 = vsel %vm875, %v821, 0
        %v910 = vsel %vm875, %v822, 0
        %v913 = vsel %vm875, %v823, 0
        %v916 = vsel %vm875, %v824, 0
        %v919 = vsel %vm875, %v825, 0
        %v922 = vsel %vm875, %v826, 0
        %924 = vmatprep.subr.bf16.mxu0 0
        %925 = vmatpush1.bf16.msra.mxu0 %v863
        %926 = vmatprep.subr.bf16.mxu0 0
        %927 = vmatpush1.bf16.msra.mxu0 %v864
        %928 = vmatprep.subr.bf16.mxu0 0
        %929 = vmatpush1.bf16.msra.mxu0 %v865
        %930 = vmatprep.subr.bf16.mxu0 0
        %931 = vmatpush1.bf16.msra.mxu0 %v866
        %932 = vmatprep.subr.bf16.mxu0 0
        %933 = vmatpush1.bf16.msra.mxu0 %v867
        %934 = vmatprep.subr.bf16.mxu0 0
        %935 = vmatpush1.bf16.msra.mxu0 %v868
        %936 = vmatprep.subr.bf16.mxu0 0
        %937 = vmatpush1.bf16.msra.mxu0 0
        %938 = vmatprep.subr.bf16.mxu0 0
        %939 = vmatpush1.bf16.msra.mxu0 0
        %940 = vmatprep.subr.bf16.mxu0 0
        %941 = vmatpush1.bf16.msra.mxu0 0
        %942 = vmatprep.subr.bf16.mxu0 0
        %943 = vmatpush1.bf16.msra.mxu0 0
        %944 = vmatprep.subr.bf16.mxu0 0
        %945 = vmatpush1.bf16.msra.mxu0 0
        %946 = vmatprep.subr.bf16.mxu0 0
        %947 = vmatpush1.bf16.msra.mxu0 0
        %948 = vmatprep.subr.bf16.mxu0 0
        %949 = vmatpush1.bf16.msra.mxu0 0
        %950 = vmatprep.subr.bf16.mxu0 0
        %951 = vmatpush1.bf16.msra.mxu0 0
        %952 = vmatprep.subr.bf16.mxu0 0
        %953 = vmatpush1.bf16.msra.mxu0 0
        %954 = vmatprep.subr.bf16.mxu0 0
        %955 = vmatpush1.bf16.msra.mxu0 0
        %956 = vmatprep.mubr.bf16.mxu0 0
        %957 = vmatmul.mubr.bf16.gmra.mrb[0].mxu0 %v877
        %v958 = vpop.f32.mrb[0].mxu0
        %v959 = vadd.f32 0.0, %v958
        %v960 = vpop.f32.mrb[0].mxu0
        %v961 = vpop.f32.mrb[0].mxu0
        %v962 = vadd.f32 0.0, %v961
        %v963 = vpop.f32.mrb[0].mxu0
        %964 = vmatprep.mubr.bf16.mxu0 0
        %965 = vmatmul.mubr.bf16.gmra.mrb[0].mxu0 %v880
        %v966 = vpop.f32.mrb[0].mxu0
        %v967 = vadd.f32 0.0, %v966
        %v968 = vpop.f32.mrb[0].mxu0
        %v969 = vpop.f32.mrb[0].mxu0
        %v970 = vadd.f32 0.0, %v969
        %v971 = vpop.f32.mrb[0].mxu0
        %972 = vmatprep.mubr.bf16.mxu0 0
        %973 = vmatmul.mubr.bf16.gmra.mrb[0].mxu0 %v883
        %v974 = vpop.f32.mrb[0].mxu0
        %v975 = vadd.f32 0.0, %v974
        %v976 = vpop.f32.mrb[0].mxu0
        %v977 = vpop.f32.mrb[0].mxu0
        %v978 = vadd.f32 0.0, %v977
        %v979 = vpop.f32.mrb[0].mxu0
        %980 = vmatprep.mubr.bf16.mxu0 0
        %981 = vmatmul.mubr.bf16.gmra.mrb[0].mxu0 %v886
        %v982 = vpop.f32.mrb[0].mxu0
        %v983 = vadd.f32 0.0, %v982
        %v984 = vpop.f32.mrb[0].mxu0
        %v985 = vpop.f32.mrb[0].mxu0
        %v986 = vadd.f32 0.0, %v985
        %v987 = vpop.f32.mrb[0].mxu0
        %988 = vmatprep.mubr.bf16.mxu0 0
        %989 = vmatmul.mubr.bf16.gmra.mrb[0].mxu0 %v889
        %v990 = vpop.f32.mrb[0].mxu0
        %v991 = vadd.f32 0.0, %v990
        %v992 = vpop.f32.mrb[0].mxu0
        %v993 = vpop.f32.mrb[0].mxu0
        %v994 = vadd.f32 0.0, %v993
        %v995 = vpop.f32.mrb[0].mxu0
        %996 = vmatprep.mubr.bf16.mxu0 0
        %997 = vmatmul.mubr.bf16.gmra.mrb[0].mxu0 %v892
        %v998 = vpop.f32.mrb[0].mxu0
        %v999 = vadd.f32 0.0, %v998
        %v1000 = vpop.f32.mrb[0].mxu0
        %v1001 = vpop.f32.mrb[0].mxu0
        %v1002 = vadd.f32 0.0, %v1001
        %v1003 = vpop.f32.mrb[0].mxu0
        %1004 = vmatprep.mubr.bf16.mxu0 0
        %1005 = vmatmul.mubr.bf16.gmra.mrb[0].mxu0 %v895
        %v1006 = vpop.f32.mrb[0].mxu0
        %v1007 = vadd.f32 0.0, %v1006
        %v1008 = vpop.f32.mrb[0].mxu0
        %v1009 = vpop.f32.mrb[0].mxu0
        %v1010 = vadd.f32 0.0, %v1009
        %v1011 = vpop.f32.mrb[0].mxu0
        %1012 = vmatprep.mubr.bf16.mxu0 0
        %1013 = vmatmul.mubr.bf16.gmra.mrb[0].mxu0 %v898
        %v1014 = vpop.f32.mrb[0].mxu0
        %v1015 = vadd.f32 0.0, %v1014
        %v1016 = vpop.f32.mrb[0].mxu0
        %v1017 = vpop.f32.mrb[0].mxu0
        %v1018 = vadd.f32 0.0, %v1017
        %v1019 = vpop.f32.mrb[0].mxu0
        %1020 = vmatprep.mubr.bf16.mxu0 0
        %1021 = vmatmul.mubr.bf16.gmra.mrb[0].mxu0 %v901
        %v1022 = vpop.f32.mrb[0].mxu0
        %v1023 = vadd.f32 0.0, %v1022
        %v1024 = vpop.f32.mrb[0].mxu0
        %v1025 = vpop.f32.mrb[0].mxu0
        %v1026 = vadd.f32 0.0, %v1025
        %v1027 = vpop.f32.mrb[0].mxu0
        %1028 = vmatprep.mubr.bf16.mxu0 0
        %1029 = vmatmul.mubr.bf16.gmra.mrb[0].mxu0 %v904
        %v1030 = vpop.f32.mrb[0].mxu0
        %v1031 = vadd.f32 0.0, %v1030
        %v1032 = vpop.f32.mrb[0].mxu0
        %v1033 = vpop.f32.mrb[0].mxu0
        %v1034 = vadd.f32 0.0, %v1033
        %v1035 = vpop.f32.mrb[0].mxu0
        %1036 = vmatprep.mubr.bf16.mxu0 0
        %1037 = vmatmul.mubr.bf16.gmra.mrb[0].mxu0 %v907
        %v1038 = vpop.f32.mrb[0].mxu0
        %v1039 = vadd.f32 0.0, %v1038
        %v1040 = vpop.f32.mrb[0].mxu0
        %v1041 = vpop.f32.mrb[0].mxu0
        %v1042 = vadd.f32 0.0, %v1041
        %v1043 = vpop.f32.mrb[0].mxu0
        %1044 = vmatprep.mubr.bf16.mxu0 0
        %1045 = vmatmul.mubr.bf16.gmra.mrb[0].mxu0 %v910
        %v1046 = vpop.f32.mrb[0].mxu0
        %v1047 = vadd.f32 0.0, %v1046
        %v1048 = vpop.f32.mrb[0].mxu0
        %v1049 = vpop.f32.mrb[0].mxu0
        %v1050 = vadd.f32 0.0, %v1049
        %v1051 = vpop.f32.mrb[0].mxu0
        %1052 = vmatprep.mubr.bf16.mxu0 0
        %1053 = vmatmul.mubr.bf16.gmra.mrb[0].mxu0 %v913
        %v1054 = vpop.f32.mrb[0].mxu0
        %v1055 = vadd.f32 0.0, %v1054
        %v1056 = vpop.f32.mrb[0].mxu0
        %v1057 = vpop.f32.mrb[0].mxu0
        %v1058 = vadd.f32 0.0, %v1057
        %v1059 = vpop.f32.mrb[0].mxu0
        %1060 = vmatprep.mubr.bf16.mxu0 0
        %1061 = vmatmul.mubr.bf16.gmra.mrb[0].mxu0 %v916
        %v1062 = vpop.f32.mrb[0].mxu0
        %v1063 = vadd.f32 0.0, %v1062
        %v1064 = vpop.f32.mrb[0].mxu0
        %v1065 = vpop.f32.mrb[0].mxu0
        %v1066 = vadd.f32 0.0, %v1065
        %v1067 = vpop.f32.mrb[0].mxu0
        %1068 = vmatprep.mubr.bf16.mxu0 0
        %1069 = vmatmul.mubr.bf16.gmra.mrb[0].mxu0 %v919
        %v1070 = vpop.f32.mrb[0].mxu0
        %v1071 = vadd.f32 0.0, %v1070
        %v1072 = vpop.f32.mrb[0].mxu0
        %v1073 = vpop.f32.mrb[0].mxu0
        %v1074 = vadd.f32 0.0, %v1073
        %v1075 = vpop.f32.mrb[0].mxu0
        %1076 = vmatprep.mubr.bf16.mxu0 0
        %1077 = vmatmul.mubr.bf16.gmra.mrb[0].mxu0 %v922
        %v1078 = vpop.f32.mrb[0].mxu0
        %v1079 = vadd.f32 0.0, %v1078
        %v1080 = vpop.f32.mrb[0].mxu0
        %v1081 = vpop.f32.mrb[0].mxu0
        %v1082 = vadd.f32 0.0, %v1081
        %v1083 = vpop.f32.mrb[0].mxu0
        %1084 = vdwg.mxu0
        %v1085 = vadd.f32 %v809, %v959
        %v1086 = vadd.f32 %v809, %v962
        %v1087 = vadd.f32 %v809, %v967
        %v1088 = vadd.f32 %v809, %v970
        %v1089 = vadd.f32 %v809, %v975
        %v1090 = vadd.f32 %v809, %v978
        %v1091 = vadd.f32 %v809, %v983
        %v1092 = vadd.f32 %v809, %v986
        %v1093 = vadd.f32 %v809, %v991
        %v1094 = vadd.f32 %v809, %v994
        %v1095 = vadd.f32 %v809, %v999
        %v1096 = vadd.f32 %v809, %v1002
        %v1097 = vadd.f32 %v809, %v1007
        %v1098 = vadd.f32 %v809, %v1010
        %v1099 = vadd.f32 %v809, %v1015
        %v1100 = vadd.f32 %v809, %v1018
        %v1101 = vadd.f32 %v809, %v1023
        %v1102 = vadd.f32 %v809, %v1026
        %v1103 = vadd.f32 %v809, %v1031
        %v1104 = vadd.f32 %v809, %v1034
        %v1105 = vadd.f32 %v809, %v1039
        %v1106 = vadd.f32 %v809, %v1042
        %v1107 = vadd.f32 %v809, %v1047
        %v1108 = vadd.f32 %v809, %v1050
        %v1109 = vadd.f32 %v809, %v1055
        %v1110 = vadd.f32 %v809, %v1058
        %v1111 = vadd.f32 %v809, %v1063
        %v1112 = vadd.f32 %v809, %v1066
        %v1113 = vadd.f32 %v809, %v1071
        %v1114 = vadd.f32 %v809, %v1074
        %v1115 = vadd.f32 %v809, %v1079
        %v1116 = vadd.f32 %v809, %v1082
        %v1117 = vpack.c.bf16 %v801, %v800
        %s1118 = scalar_lea.vmem %s1, 48
        %v1119 = vld [vmem:[%s1118] sm:$0xf]
        %v1120 = vld [vmem:[%s1118 + $0x4] sm:$0xf]
        %v1121 = vld [vmem:[%s1118 + $0x8] sm:$0xf]
        %v1122 = vld [vmem:[%s1118 + $0xc] sm:$0xf]
        %v1123 = vld [vmem:[%s1118 + $0x10] sm:$0xf]
        %v1124 = vld [vmem:[%s1118 + $0x14] sm:$0xf]
        %v1125 = vld [vmem:[%s1118 + $0x18] sm:$0xf]
        %v1126 = vld [vmem:[%s1118 + $0x1c] sm:$0xf]
        %v1127 = vld [vmem:[%s1118 + $0x20] sm:$0xf]
        %v1128 = vld [vmem:[%s1118 + $0x24] sm:$0xf]
        %v1129 = vld [vmem:[%s1118 + $0x28] sm:$0xf]
        %v1130 = vld [vmem:[%s1118 + $0x2c] sm:$0xf]
        %v1143 = vunpack.c.l.b16 %v1119
        %v1144 = vunpack.c.l.b16 %v1120
        %v1145 = vunpack.c.l.b16 %v1121
        %v1146 = vunpack.c.l.b16 %v1122
        %v1147 = vunpack.c.l.b16 %v1123
        %v1148 = vunpack.c.l.b16 %v1124
        %v1149 = vunpack.c.l.b16 %v1125
        %v1150 = vunpack.c.l.b16 %v1126
        %v1151 = vunpack.c.l.b16 %v1127
        %v1152 = vunpack.c.l.b16 %v1128
        %v1153 = vunpack.c.l.b16 %v1129
        %v1154 = vunpack.c.l.b16 %v1130
        %v1155 = vpack.c.b16 %v1144, %v1143
        %v1156 = vpack.c.b16 %v1146, %v1145
        %v1157 = vpack.c.b16 %v1148, %v1147
        %v1158 = vpack.c.b16 %v1150, %v1149
        %v1159 = vpack.c.b16 %v1152, %v1151
        %v1160 = vpack.c.b16 %v1154, %v1153
        %v1168 = vsel %vm875, %v1117, 0
        %1170 = vmatprep.subr.bf16.mxu0 0
        %1171 = vmatpush1.bf16.msra.mxu0 %v1155
        %1172 = vmatprep.subr.bf16.mxu0 0
        %1173 = vmatpush1.bf16.msra.mxu0 %v1156
        %1174 = vmatprep.subr.bf16.mxu0 0
        %1175 = vmatpush1.bf16.msra.mxu0 %v1157
        %1176 = vmatprep.subr.bf16.mxu0 0
        %1177 = vmatpush1.bf16.msra.mxu0 %v1158
        %1178 = vmatprep.subr.bf16.mxu0 0
        %1179 = vmatpush1.bf16.msra.mxu0 %v1159
        %1180 = vmatprep.subr.bf16.mxu0 0
        %1181 = vmatpush1.bf16.msra.mxu0 %v1160
        %1182 = vmatprep.subr.bf16.mxu0 0
        %1183 = vmatpush1.bf16.msra.mxu0 0
        %1184 = vmatprep.subr.bf16.mxu0 0
        %1185 = vmatpush1.bf16.msra.mxu0 0
        %1186 = vmatprep.subr.bf16.mxu0 0
        %1187 = vmatpush1.bf16.msra.mxu0 0
        %1188 = vmatprep.subr.bf16.mxu0 0
        %1189 = vmatpush1.bf16.msra.mxu0 0
        %1190 = vmatprep.subr.bf16.mxu0 0
        %1191 = vmatpush1.bf16.msra.mxu0 0
        %1192 = vmatprep.subr.bf16.mxu0 0
        %1193 = vmatpush1.bf16.msra.mxu0 0
        %1194 = vmatprep.subr.bf16.mxu0 0
        %1195 = vmatpush1.bf16.msra.mxu0 0
        %1196 = vmatprep.subr.bf16.mxu0 0
        %1197 = vmatpush1.bf16.msra.mxu0 0
        %1198 = vmatprep.subr.bf16.mxu0 0
        %1199 = vmatpush1.bf16.msra.mxu0 0
        %1200 = vmatprep.subr.bf16.mxu0 0
        %1201 = vmatpush1.bf16.msra.mxu0 0
        %1202 = vmatprep.mubr.bf16.mxu0 0
        %1203 = vmatmul.mubr.bf16.gmra.mrb[0].mxu0 %v880
        %v1204 = vpop.f32.mrb[0].mxu0
        %v1205 = vadd.f32 0.0, %v1204
        %v1206 = vpop.f32.mrb[0].mxu0
        %v1207 = vpop.f32.mrb[0].mxu0
        %v1208 = vadd.f32 0.0, %v1207
        %v1209 = vpop.f32.mrb[0].mxu0
        %1210 = vmatprep.mubr.bf16.mxu0 0
        %1211 = vmatmul.mubr.bf16.gmra.mrb[0].mxu0 %v883
        %v1212 = vpop.f32.mrb[0].mxu0
        %v1213 = vadd.f32 0.0, %v1212
        %v1214 = vpop.f32.mrb[0].mxu0
        %v1215 = vpop.f32.mrb[0].mxu0
        %v1216 = vadd.f32 0.0, %v1215
        %v1217 = vpop.f32.mrb[0].mxu0
        %1218 = vmatprep.mubr.bf16.mxu0 0
        %1219 = vmatmul.mubr.bf16.gmra.mrb[0].mxu0 %v886
        %v1220 = vpop.f32.mrb[0].mxu0
        %v1221 = vadd.f32 0.0, %v1220
        %v1222 = vpop.f32.mrb[0].mxu0
        %v1223 = vpop.f32.mrb[0].mxu0
        %v1224 = vadd.f32 0.0, %v1223
        %v1225 = vpop.f32.mrb[0].mxu0
        %1226 = vmatprep.mubr.bf16.mxu0 0
        %1227 = vmatmul.mubr.bf16.gmra.mrb[0].mxu0 %v889
        %v1228 = vpop.f32.mrb[0].mxu0
        %v1229 = vadd.f32 0.0, %v1228
        %v1230 = vpop.f32.mrb[0].mxu0
        %v1231 = vpop.f32.mrb[0].mxu0
        %v1232 = vadd.f32 0.0, %v1231
        %v1233 = vpop.f32.mrb[0].mxu0
        %1234 = vmatprep.mubr.bf16.mxu0 0
        %1235 = vmatmul.mubr.bf16.gmra.mrb[0].mxu0 %v892
        %v1236 = vpop.f32.mrb[0].mxu0
        %v1237 = vadd.f32 0.0, %v1236
        %v1238 = vpop.f32.mrb[0].mxu0
        %v1239 = vpop.f32.mrb[0].mxu0
        %v1240 = vadd.f32 0.0, %v1239
        %v1241 = vpop.f32.mrb[0].mxu0
        %1242 = vmatprep.mubr.bf16.mxu0 0
        %1243 = vmatmul.mubr.bf16.gmra.mrb[0].mxu0 %v895
        %v1244 = vpop.f32.mrb[0].mxu0
        %v1245 = vadd.f32 0.0, %v1244
        %v1246 = vpop.f32.mrb[0].mxu0
        %v1247 = vpop.f32.mrb[0].mxu0
        %v1248 = vadd.f32 0.0, %v1247
        %v1249 = vpop.f32.mrb[0].mxu0
        %1250 = vmatprep.mubr.bf16.mxu0 0
        %1251 = vmatmul.mubr.bf16.gmra.mrb[0].mxu0 %v898
        %v1252 = vpop.f32.mrb[0].mxu0
        %v1253 = vadd.f32 0.0, %v1252
        %v1254 = vpop.f32.mrb[0].mxu0
        %v1255 = vpop.f32.mrb[0].mxu0
        %v1256 = vadd.f32 0.0, %v1255
        %v1257 = vpop.f32.mrb[0].mxu0
        %1258 = vmatprep.mubr.bf16.mxu0 0
        %1259 = vmatmul.mubr.bf16.gmra.mrb[0].mxu0 %v901
        %v1260 = vpop.f32.mrb[0].mxu0
        %v1261 = vadd.f32 0.0, %v1260
        %v1262 = vpop.f32.mrb[0].mxu0
        %v1263 = vpop.f32.mrb[0].mxu0
        %v1264 = vadd.f32 0.0, %v1263
        %v1265 = vpop.f32.mrb[0].mxu0
        %1266 = vmatprep.mubr.bf16.mxu0 0
        %1267 = vmatmul.mubr.bf16.gmra.mrb[0].mxu0 %v904
        %v1268 = vpop.f32.mrb[0].mxu0
        %v1269 = vadd.f32 0.0, %v1268
        %v1270 = vpop.f32.mrb[0].mxu0
        %v1271 = vpop.f32.mrb[0].mxu0
        %v1272 = vadd.f32 0.0, %v1271
        %v1273 = vpop.f32.mrb[0].mxu0
        %1274 = vmatprep.mubr.bf16.mxu0 0
        %1275 = vmatmul.mubr.bf16.gmra.mrb[0].mxu0 %v907
        %v1276 = vpop.f32.mrb[0].mxu0
        %v1277 = vadd.f32 0.0, %v1276
        %v1278 = vpop.f32.mrb[0].mxu0
        %v1279 = vpop.f32.mrb[0].mxu0
        %v1280 = vadd.f32 0.0, %v1279
        %v1281 = vpop.f32.mrb[0].mxu0
        %1282 = vmatprep.mubr.bf16.mxu0 0
        %1283 = vmatmul.mubr.bf16.gmra.mrb[0].mxu0 %v910
        %v1284 = vpop.f32.mrb[0].mxu0
        %v1285 = vadd.f32 0.0, %v1284
        %v1286 = vpop.f32.mrb[0].mxu0
        %v1287 = vpop.f32.mrb[0].mxu0
        %v1288 = vadd.f32 0.0, %v1287
        %v1289 = vpop.f32.mrb[0].mxu0
        %1290 = vmatprep.mubr.bf16.mxu0 0
        %1291 = vmatmul.mubr.bf16.gmra.mrb[0].mxu0 %v913
        %v1292 = vpop.f32.mrb[0].mxu0
        %v1293 = vadd.f32 0.0, %v1292
        %v1294 = vpop.f32.mrb[0].mxu0
        %v1295 = vpop.f32.mrb[0].mxu0
        %v1296 = vadd.f32 0.0, %v1295
        %v1297 = vpop.f32.mrb[0].mxu0
        %1298 = vmatprep.mubr.bf16.mxu0 0
        %1299 = vmatmul.mubr.bf16.gmra.mrb[0].mxu0 %v916
        %v1300 = vpop.f32.mrb[0].mxu0
        %v1301 = vadd.f32 0.0, %v1300
        %v1302 = vpop.f32.mrb[0].mxu0
        %v1303 = vpop.f32.mrb[0].mxu0
        %v1304 = vadd.f32 0.0, %v1303
        %v1305 = vpop.f32.mrb[0].mxu0
        %1306 = vmatprep.mubr.bf16.mxu0 0
        %1307 = vmatmul.mubr.bf16.gmra.mrb[0].mxu0 %v919
        %v1308 = vpop.f32.mrb[0].mxu0
        %v1309 = vadd.f32 0.0, %v1308
        %v1310 = vpop.f32.mrb[0].mxu0
        %v1311 = vpop.f32.mrb[0].mxu0
        %v1312 = vadd.f32 0.0, %v1311
        %v1313 = vpop.f32.mrb[0].mxu0
        %1314 = vmatprep.mubr.bf16.mxu0 0
        %1315 = vmatmul.mubr.bf16.gmra.mrb[0].mxu0 %v922
        %v1316 = vpop.f32.mrb[0].mxu0
        %v1317 = vadd.f32 0.0, %v1316
        %v1318 = vpop.f32.mrb[0].mxu0
        %v1319 = vpop.f32.mrb[0].mxu0
        %v1320 = vadd.f32 0.0, %v1319
        %v1321 = vpop.f32.mrb[0].mxu0
        %1322 = vmatprep.mubr.bf16.mxu0 0
        %1323 = vmatmul.mubr.bf16.gmra.mrb[0].mxu0 %v1168
        %v1324 = vpop.f32.mrb[0].mxu0
        %v1325 = vadd.f32 0.0, %v1324
        %v1326 = vpop.f32.mrb[0].mxu0
        %v1327 = vpop.f32.mrb[0].mxu0
        %v1328 = vadd.f32 0.0, %v1327
        %v1329 = vpop.f32.mrb[0].mxu0
        %1330 = vdwg.mxu0
        %v1331 = vadd.f32 %v1085, %v1205
        %v1332 = vadd.f32 %v1086, %v1208
        %v1333 = vadd.f32 %v1087, %v1213
        %v1334 = vadd.f32 %v1088, %v1216
        %v1335 = vadd.f32 %v1089, %v1221
        %v1336 = vadd.f32 %v1090, %v1224
        %v1337 = vadd.f32 %v1091, %v1229
        %v1338 = vadd.f32 %v1092, %v1232
        %v1339 = vadd.f32 %v1093, %v1237
        %v1340 = vadd.f32 %v1094, %v1240
        %v1341 = vadd.f32 %v1095, %v1245
        %v1342 = vadd.f32 %v1096, %v1248
        %v1343 = vadd.f32 %v1097, %v1253
        %v1344 = vadd.f32 %v1098, %v1256
        %v1345 = vadd.f32 %v1099, %v1261
        %v1346 = vadd.f32 %v1100, %v1264
        %v1347 = vadd.f32 %v1101, %v1269
        %v1348 = vadd.f32 %v1102, %v1272
        %v1349 = vadd.f32 %v1103, %v1277
        %v1350 = vadd.f32 %v1104, %v1280
        %v1351 = vadd.f32 %v1105, %v1285
        %v1352 = vadd.f32 %v1106, %v1288
        %v1353 = vadd.f32 %v1107, %v1293
        %v1354 = vadd.f32 %v1108, %v1296
        %v1355 = vadd.f32 %v1109, %v1301
        %v1356 = vadd.f32 %v1110, %v1304
        %v1357 = vadd.f32 %v1111, %v1309
        %v1358 = vadd.f32 %v1112, %v1312
        %v1359 = vadd.f32 %v1113, %v1317
        %v1360 = vadd.f32 %v1114, %v1320
        %v1361 = vadd.f32 %v1115, %v1325
        %v1362 = vadd.f32 %v1116, %v1328
        %v1363 = vpack.c.bf16 %v803, %v802
        %s1364 = scalar_lea.vmem %s1, 96
        %v1365 = vld [vmem:[%s1364] sm:$0xf]
        %v1366 = vld [vmem:[%s1364 + $0x4] sm:$0xf]
        %v1367 = vld [vmem:[%s1364 + $0x8] sm:$0xf]
        %v1368 = vld [vmem:[%s1364 + $0xc] sm:$0xf]
        %v1369 = vld [vmem:[%s1364 + $0x10] sm:$0xf]
        %v1370 = vld [vmem:[%s1364 + $0x14] sm:$0xf]
        %v1371 = vld [vmem:[%s1364 + $0x18] sm:$0xf]
        %v1372 = vld [vmem:[%s1364 + $0x1c] sm:$0xf]
        %v1373 = vld [vmem:[%s1364 + $0x20] sm:$0xf]
        %v1374 = vld [vmem:[%s1364 + $0x24] sm:$0xf]
        %v1375 = vld [vmem:[%s1364 + $0x28] sm:$0xf]
        %v1376 = vld [vmem:[%s1364 + $0x2c] sm:$0xf]
        %v1389 = vunpack.c.l.b16 %v1365
        %v1390 = vunpack.c.l.b16 %v1366
        %v1391 = vunpack.c.l.b16 %v1367
        %v1392 = vunpack.c.l.b16 %v1368
        %v1393 = vunpack.c.l.b16 %v1369
        %v1394 = vunpack.c.l.b16 %v1370
        %v1395 = vunpack.c.l.b16 %v1371
        %v1396 = vunpack.c.l.b16 %v1372
        %v1397 = vunpack.c.l.b16 %v1373
        %v1398 = vunpack.c.l.b16 %v1374
        %v1399 = vunpack.c.l.b16 %v1375
        %v1400 = vunpack.c.l.b16 %v1376
        %v1401 = vpack.c.b16 %v1390, %v1389
        %v1402 = vpack.c.b16 %v1392, %v1391
        %v1403 = vpack.c.b16 %v1394, %v1393
        %v1404 = vpack.c.b16 %v1396, %v1395
        %v1405 = vpack.c.b16 %v1398, %v1397
        %v1406 = vpack.c.b16 %v1400, %v1399
        %v1414 = vsel %vm875, %v1363, 0
        %1416 = vmatprep.subr.bf16.mxu0 0
        %1417 = vmatpush1.bf16.msra.mxu0 %v1401
        %1418 = vmatprep.subr.bf16.mxu0 0
        %1419 = vmatpush1.bf16.msra.mxu0 %v1402
        %1420 = vmatprep.subr.bf16.mxu0 0
        %1421 = vmatpush1.bf16.msra.mxu0 %v1403
        %1422 = vmatprep.subr.bf16.mxu0 0
        %1423 = vmatpush1.bf16.msra.mxu0 %v1404
        %1424 = vmatprep.subr.bf16.mxu0 0
        %1425 = vmatpush1.bf16.msra.mxu0 %v1405
        %1426 = vmatprep.subr.bf16.mxu0 0
        %1427 = vmatpush1.bf16.msra.mxu0 %v1406
        %1428 = vmatprep.subr.bf16.mxu0 0
        %1429 = vmatpush1.bf16.msra.mxu0 0
        %1430 = vmatprep.subr.bf16.mxu0 0
        %1431 = vmatpush1.bf16.msra.mxu0 0
        %1432 = vmatprep.subr.bf16.mxu0 0
        %1433 = vmatpush1.bf16.msra.mxu0 0
        %1434 = vmatprep.subr.bf16.mxu0 0
        %1435 = vmatpush1.bf16.msra.mxu0 0
        %1436 = vmatprep.subr.bf16.mxu0 0
        %1437 = vmatpush1.bf16.msra.mxu0 0
        %1438 = vmatprep.subr.bf16.mxu0 0
        %1439 = vmatpush1.bf16.msra.mxu0 0
        %1440 = vmatprep.subr.bf16.mxu0 0
        %1441 = vmatpush1.bf16.msra.mxu0 0
        %1442 = vmatprep.subr.bf16.mxu0 0
        %1443 = vmatpush1.bf16.msra.mxu0 0
        %1444 = vmatprep.subr.bf16.mxu0 0
        %1445 = vmatpush1.bf16.msra.mxu0 0
        %1446 = vmatprep.subr.bf16.mxu0 0
        %1447 = vmatpush1.bf16.msra.mxu0 0
        %1448 = vmatprep.mubr.bf16.mxu0 0
        %1449 = vmatmul.mubr.bf16.gmra.mrb[0].mxu0 %v883
        %v1450 = vpop.f32.mrb[0].mxu0
        %v1451 = vadd.f32 0.0, %v1450
        %v1452 = vpop.f32.mrb[0].mxu0
        %v1453 = vpop.f32.mrb[0].mxu0
        %v1454 = vadd.f32 0.0, %v1453
        %v1455 = vpop.f32.mrb[0].mxu0
        %1456 = vmatprep.mubr.bf16.mxu0 0
        %1457 = vmatmul.mubr.bf16.gmra.mrb[0].mxu0 %v886
        %v1458 = vpop.f32.mrb[0].mxu0
        %v1459 = vadd.f32 0.0, %v1458
        %v1460 = vpop.f32.mrb[0].mxu0
        %v1461 = vpop.f32.mrb[0].mxu0
        %v1462 = vadd.f32 0.0, %v1461
        %v1463 = vpop.f32.mrb[0].mxu0
        %1464 = vmatprep.mubr.bf16.mxu0 0
        %1465 = vmatmul.mubr.bf16.gmra.mrb[0].mxu0 %v889
        %v1466 = vpop.f32.mrb[0].mxu0
        %v1467 = vadd.f32 0.0, %v1466
        %v1468 = vpop.f32.mrb[0].mxu0
        %v1469 = vpop.f32.mrb[0].mxu0
        %v1470 = vadd.f32 0.0, %v1469
        %v1471 = vpop.f32.mrb[0].mxu0
        %1472 = vmatprep.mubr.bf16.mxu0 0
        %1473 = vmatmul.mubr.bf16.gmra.mrb[0].mxu0 %v892
        %v1474 = vpop.f32.mrb[0].mxu0
        %v1475 = vadd.f32 0.0, %v1474
        %v1476 = vpop.f32.mrb[0].mxu0
        %v1477 = vpop.f32.mrb[0].mxu0
        %v1478 = vadd.f32 0.0, %v1477
        %v1479 = vpop.f32.mrb[0].mxu0
        %1480 = vmatprep.mubr.bf16.mxu0 0
        %1481 = vmatmul.mubr.bf16.gmra.mrb[0].mxu0 %v895
        %v1482 = vpop.f32.mrb[0].mxu0
        %v1483 = vadd.f32 0.0, %v1482
        %v1484 = vpop.f32.mrb[0].mxu0
        %v1485 = vpop.f32.mrb[0].mxu0
        %v1486 = vadd.f32 0.0, %v1485
        %v1487 = vpop.f32.mrb[0].mxu0
        %1488 = vmatprep.mubr.bf16.mxu0 0
        %1489 = vmatmul.mubr.bf16.gmra.mrb[0].mxu0 %v898
        %v1490 = vpop.f32.mrb[0].mxu0
        %v1491 = vadd.f32 0.0, %v1490
        %v1492 = vpop.f32.mrb[0].mxu0
        %v1493 = vpop.f32.mrb[0].mxu0
        %v1494 = vadd.f32 0.0, %v1493
        %v1495 = vpop.f32.mrb[0].mxu0
        %1496 = vmatprep.mubr.bf16.mxu0 0
        %1497 = vmatmul.mubr.bf16.gmra.mrb[0].mxu0 %v901
        %v1498 = vpop.f32.mrb[0].mxu0
        %v1499 = vadd.f32 0.0, %v1498
        %v1500 = vpop.f32.mrb[0].mxu0
        %v1501 = vpop.f32.mrb[0].mxu0
        %v1502 = vadd.f32 0.0, %v1501
        %v1503 = vpop.f32.mrb[0].mxu0
        %1504 = vmatprep.mubr.bf16.mxu0 0
        %1505 = vmatmul.mubr.bf16.gmra.mrb[0].mxu0 %v904
        %v1506 = vpop.f32.mrb[0].mxu0
        %v1507 = vadd.f32 0.0, %v1506
        %v1508 = vpop.f32.mrb[0].mxu0
        %v1509 = vpop.f32.mrb[0].mxu0
        %v1510 = vadd.f32 0.0, %v1509
        %v1511 = vpop.f32.mrb[0].mxu0
        %1512 = vmatprep.mubr.bf16.mxu0 0
        %1513 = vmatmul.mubr.bf16.gmra.mrb[0].mxu0 %v907
        %v1514 = vpop.f32.mrb[0].mxu0
        %v1515 = vadd.f32 0.0, %v1514
        %v1516 = vpop.f32.mrb[0].mxu0
        %v1517 = vpop.f32.mrb[0].mxu0
        %v1518 = vadd.f32 0.0, %v1517
        %v1519 = vpop.f32.mrb[0].mxu0
        %1520 = vmatprep.mubr.bf16.mxu0 0
        %1521 = vmatmul.mubr.bf16.gmra.mrb[0].mxu0 %v910
        %v1522 = vpop.f32.mrb[0].mxu0
        %v1523 = vadd.f32 0.0, %v1522
        %v1524 = vpop.f32.mrb[0].mxu0
        %v1525 = vpop.f32.mrb[0].mxu0
        %v1526 = vadd.f32 0.0, %v1525
        %v1527 = vpop.f32.mrb[0].mxu0
        %1528 = vmatprep.mubr.bf16.mxu0 0
        %1529 = vmatmul.mubr.bf16.gmra.mrb[0].mxu0 %v913
        %v1530 = vpop.f32.mrb[0].mxu0
        %v1531 = vadd.f32 0.0, %v1530
        %v1532 = vpop.f32.mrb[0].mxu0
        %v1533 = vpop.f32.mrb[0].mxu0
        %v1534 = vadd.f32 0.0, %v1533
        %v1535 = vpop.f32.mrb[0].mxu0
        %1536 = vmatprep.mubr.bf16.mxu0 0
        %1537 = vmatmul.mubr.bf16.gmra.mrb[0].mxu0 %v916
        %v1538 = vpop.f32.mrb[0].mxu0
        %v1539 = vadd.f32 0.0, %v1538
        %v1540 = vpop.f32.mrb[0].mxu0
        %v1541 = vpop.f32.mrb[0].mxu0
        %v1542 = vadd.f32 0.0, %v1541
        %v1543 = vpop.f32.mrb[0].mxu0
        %1544 = vmatprep.mubr.bf16.mxu0 0
        %1545 = vmatmul.mubr.bf16.gmra.mrb[0].mxu0 %v919
        %v1546 = vpop.f32.mrb[0].mxu0
        %v1547 = vadd.f32 0.0, %v1546
        %v1548 = vpop.f32.mrb[0].mxu0
        %v1549 = vpop.f32.mrb[0].mxu0
        %v1550 = vadd.f32 0.0, %v1549
        %v1551 = vpop.f32.mrb[0].mxu0
        %1552 = vmatprep.mubr.bf16.mxu0 0
        %1553 = vmatmul.mubr.bf16.gmra.mrb[0].mxu0 %v922
        %v1554 = vpop.f32.mrb[0].mxu0
        %v1555 = vadd.f32 0.0, %v1554
        %v1556 = vpop.f32.mrb[0].mxu0
        %v1557 = vpop.f32.mrb[0].mxu0
        %v1558 = vadd.f32 0.0, %v1557
        %v1559 = vpop.f32.mrb[0].mxu0
        %1560 = vmatprep.mubr.bf16.mxu0 0
        %1561 = vmatmul.mubr.bf16.gmra.mrb[0].mxu0 %v1168
        %v1562 = vpop.f32.mrb[0].mxu0
        %v1563 = vadd.f32 0.0, %v1562
        %v1564 = vpop.f32.mrb[0].mxu0
        %v1565 = vpop.f32.mrb[0].mxu0
        %v1566 = vadd.f32 0.0, %v1565
        %v1567 = vpop.f32.mrb[0].mxu0
        %1568 = vmatprep.mubr.bf16.mxu0 0
        %1569 = vmatmul.mubr.bf16.gmra.mrb[0].mxu0 %v1414
        %v1570 = vpop.f32.mrb[0].mxu0
        %v1571 = vadd.f32 0.0, %v1570
        %v1572 = vpop.f32.mrb[0].mxu0
        %v1573 = vpop.f32.mrb[0].mxu0
        %v1574 = vadd.f32 0.0, %v1573
        %v1575 = vpop.f32.mrb[0].mxu0
        %1576 = vdwg.mxu0
        %v1577 = vadd.f32 %v1331, %v1451
        %v1578 = vadd.f32 %v1332, %v1454
        %v1579 = vadd.f32 %v1333, %v1459
        %v1580 = vadd.f32 %v1334, %v1462
        %v1581 = vadd.f32 %v1335, %v1467
        %v1582 = vadd.f32 %v1336, %v1470
        %v1583 = vadd.f32 %v1337, %v1475
        %v1584 = vadd.f32 %v1338, %v1478
        %v1585 = vadd.f32 %v1339, %v1483
        %v1586 = vadd.f32 %v1340, %v1486
        %v1587 = vadd.f32 %v1341, %v1491
        %v1588 = vadd.f32 %v1342, %v1494
        %v1589 = vadd.f32 %v1343, %v1499
        %v1590 = vadd.f32 %v1344, %v1502
        %v1591 = vadd.f32 %v1345, %v1507
        %v1592 = vadd.f32 %v1346, %v1510
        %v1593 = vadd.f32 %v1347, %v1515
        %v1594 = vadd.f32 %v1348, %v1518
        %v1595 = vadd.f32 %v1349, %v1523
        %v1596 = vadd.f32 %v1350, %v1526
        %v1597 = vadd.f32 %v1351, %v1531
        %v1598 = vadd.f32 %v1352, %v1534
        %v1599 = vadd.f32 %v1353, %v1539
        %v1600 = vadd.f32 %v1354, %v1542
        %v1601 = vadd.f32 %v1355, %v1547
        %v1602 = vadd.f32 %v1356, %v1550
        %v1603 = vadd.f32 %v1357, %v1555
        %v1604 = vadd.f32 %v1358, %v1558
        %v1605 = vadd.f32 %v1359, %v1563
        %v1606 = vadd.f32 %v1360, %v1566
        %v1607 = vadd.f32 %v1361, %v1571
        %v1608 = vadd.f32 %v1362, %v1574
        %v1609 = vmax.f32 %v1577, 0.0
        %v1610 = vmax.f32 %v1578, 0.0
        %v1611 = vmax.f32 %v1579, 0.0
        %v1612 = vmax.f32 %v1580, 0.0
        %v1613 = vmax.f32 %v1581, 0.0
        %v1614 = vmax.f32 %v1582, 0.0
        %v1615 = vmax.f32 %v1583, 0.0
        %v1616 = vmax.f32 %v1584, 0.0
        %v1617 = vmax.f32 %v1585, 0.0
        %v1618 = vmax.f32 %v1586, 0.0
        %v1619 = vmax.f32 %v1587, 0.0
        %v1620 = vmax.f32 %v1588, 0.0
        %v1621 = vmax.f32 %v1589, 0.0
        %v1622 = vmax.f32 %v1590, 0.0
        %v1623 = vmax.f32 %v1591, 0.0
        %v1624 = vmax.f32 %v1592, 0.0
        %v1625 = vmax.f32 %v1593, 0.0
        %v1626 = vmax.f32 %v1594, 0.0
        %v1627 = vmax.f32 %v1595, 0.0
        %v1628 = vmax.f32 %v1596, 0.0
        %v1629 = vmax.f32 %v1597, 0.0
        %v1630 = vmax.f32 %v1598, 0.0
        %v1631 = vmax.f32 %v1599, 0.0
        %v1632 = vmax.f32 %v1600, 0.0
        %v1633 = vmax.f32 %v1601, 0.0
        %v1634 = vmax.f32 %v1602, 0.0
        %v1635 = vmax.f32 %v1603, 0.0
        %v1636 = vmax.f32 %v1604, 0.0
        %v1637 = vmax.f32 %v1605, 0.0
        %v1638 = vmax.f32 %v1606, 0.0
        %v1639 = vmax.f32 %v1607, 0.0
        %v1640 = vmax.f32 %v1608, 0.0
        %1641 = vst.msk [vmem:[#allocation2] sm:$0xff] %vm767, 0.0
        %1642 = vst.msk [vmem:[#allocation2 + $0x8] sm:$0xff] %vm767, 0.0
        %vm1643 = vcmask 517120
        %1644 = vst.msk [vmem:[#allocation2 + $0x10] sm:$0x3] %vm1643, 0.0
        %1645 = vst.msk [vmem:[#allocation2 + $0x18] sm:$0xff] %vm767, 0.0
        %1646 = vst.msk [vmem:[#allocation2 + $0x20] sm:$0xff] %vm767, 0.0
        %1647 = vst.msk [vmem:[#allocation2 + $0x28] sm:$0x3] %vm1643, 0.0
        %1648 = vst.msk [vmem:[#allocation2 + $0x30] sm:$0xff] %vm767, 0.0
        %1649 = vst.msk [vmem:[#allocation2 + $0x38] sm:$0xff] %vm767, 0.0
        %1650 = vst.msk [vmem:[#allocation2 + $0x40] sm:$0x3] %vm1643, 0.0
        %1651 = vst.msk [vmem:[#allocation2 + $0x48] sm:$0xff] %vm767, 0.0
        %1652 = vst.msk [vmem:[#allocation2 + $0x50] sm:$0xff] %vm767, 0.0
        %1653 = vst.msk [vmem:[#allocation2 + $0x58] sm:$0x3] %vm1643, 0.0
        %1654 = vst.msk [vmem:[#allocation2 + $0x60] sm:$0xff] %vm767, 0.0
        %1655 = vst.msk [vmem:[#allocation2 + $0x68] sm:$0xff] %vm767, 0.0
        %1656 = vst.msk [vmem:[#allocation2 + $0x70] sm:$0x3] %vm1643, 0.0
        %1657 = vst.msk [vmem:[#allocation2 + $0x78] sm:$0xff] %vm767, 0.0
        %1658 = vst.msk [vmem:[#allocation2 + $0x80] sm:$0xff] %vm767, 0.0
        %1659 = vst.msk [vmem:[#allocation2 + $0x88] sm:$0x3] %vm1643, 0.0
        %1660 = vst.msk [vmem:[#allocation2 + $0x90] sm:$0xff] %vm767, 0.0
        %1661 = vst.msk [vmem:[#allocation2 + $0x98] sm:$0xff] %vm767, 0.0
        %1662 = vst.msk [vmem:[#allocation2 + $0xa0] sm:$0x3] %vm1643, 0.0
        %1663 = vst.msk [vmem:[#allocation2 + $0xa8] sm:$0xff] %vm767, 0.0
        %1664 = vst.msk [vmem:[#allocation2 + $0xb0] sm:$0xff] %vm767, 0.0
        %1665 = vst.msk [vmem:[#allocation2 + $0xb8] sm:$0x3] %vm1643, 0.0
        %1666 = vst.msk [vmem:[#allocation2 + $0xc0] sm:$0xff] %vm767, 0.0
        %1667 = vst.msk [vmem:[#allocation2 + $0xc8] sm:$0xff] %vm767, 0.0
        %1668 = vst.msk [vmem:[#allocation2 + $0xd0] sm:$0x3] %vm1643, 0.0
        %1669 = vst.msk [vmem:[#allocation2 + $0xd8] sm:$0xff] %vm767, 0.0
        %1670 = vst.msk [vmem:[#allocation2 + $0xe0] sm:$0xff] %vm767, 0.0
        %1671 = vst.msk [vmem:[#allocation2 + $0xe8] sm:$0x3] %vm1643, 0.0
        %1672 = vst.msk [vmem:[#allocation2 + $0xf0] sm:$0xff] %vm767, 0.0
        %1673 = vst.msk [vmem:[#allocation2 + $0xf8] sm:$0xff] %vm767, 0.0
        %1674 = vst.msk [vmem:[#allocation2 + $0x100] sm:$0x3] %vm1643, 0.0
        %1675 = vst.msk [vmem:[#allocation2 + $0x108] sm:$0xff] %vm767, 0.0
        %1676 = vst.msk [vmem:[#allocation2 + $0x110] sm:$0xff] %vm767, 0.0
        %1677 = vst.msk [vmem:[#allocation2 + $0x118] sm:$0x3] %vm1643, 0.0
        %1678 = vst.msk [vmem:[#allocation2 + $0x120] sm:$0xff] %vm767, 0.0
        %1679 = vst.msk [vmem:[#allocation2 + $0x128] sm:$0xff] %vm767, 0.0
        %1680 = vst.msk [vmem:[#allocation2 + $0x130] sm:$0x3] %vm1643, 0.0
        %1681 = vst.msk [vmem:[#allocation2 + $0x138] sm:$0xff] %vm767, 0.0
        %1682 = vst.msk [vmem:[#allocation2 + $0x140] sm:$0xff] %vm767, 0.0
        %1683 = vst.msk [vmem:[#allocation2 + $0x148] sm:$0x3] %vm1643, 0.0
        %1684 = vst.msk [vmem:[#allocation2 + $0x150] sm:$0xff] %vm767, 0.0
        %1685 = vst.msk [vmem:[#allocation2 + $0x158] sm:$0xff] %vm767, 0.0
        %1686 = vst.msk [vmem:[#allocation2 + $0x160] sm:$0x3] %vm1643, 0.0
        %1687 = vst.msk [vmem:[#allocation2 + $0x168] sm:$0xff] %vm767, 0.0
        %1688 = vst.msk [vmem:[#allocation2 + $0x170] sm:$0xff] %vm767, 0.0
        %1689 = vst.msk [vmem:[#allocation2 + $0x178] sm:$0x3] %vm1643, 0.0
        %1690 = vst.msk [vmem:[#allocation2 + $0x180] sm:$0xff] %vm767, 0.0
        %1691 = vst.msk [vmem:[#allocation2 + $0x188] sm:$0xff] %vm767, 0.0
        %1692 = vst.msk [vmem:[#allocation2 + $0x190] sm:$0x3] %vm1643, 0.0
        %1693 = vst.msk [vmem:[#allocation2 + $0x198] sm:$0xff] %vm767, 0.0
        %1694 = vst.msk [vmem:[#allocation2 + $0x1a0] sm:$0xff] %vm767, 0.0
        %1695 = vst.msk [vmem:[#allocation2 + $0x1a8] sm:$0x3] %vm1643, 0.0
        %s1696 = scalar_lea.vmem [#allocation2], 24
        %1697 = vst.msk [vmem:[%s1696 + $0x1] sm:$0xff] %vm767, %v1609
        %1698 = vst.msk [vmem:[%s1696 + $0x9] sm:$0xff] %vm767, %v1610
        %1699 = vst.msk [vmem:[%s1696 + $0x19] sm:$0xff] %vm767, %v1611
        %1700 = vst.msk [vmem:[%s1696 + $0x21] sm:$0xff] %vm767, %v1612
        %1701 = vst.msk [vmem:[%s1696 + $0x31] sm:$0xff] %vm767, %v1613
        %1702 = vst.msk [vmem:[%s1696 + $0x39] sm:$0xff] %vm767, %v1614
        %1703 = vst.msk [vmem:[%s1696 + $0x49] sm:$0xff] %vm767, %v1615
        %1704 = vst.msk [vmem:[%s1696 + $0x51] sm:$0xff] %vm767, %v1616
        %1705 = vst.msk [vmem:[%s1696 + $0x61] sm:$0xff] %vm767, %v1617
        %1706 = vst.msk [vmem:[%s1696 + $0x69] sm:$0xff] %vm767, %v1618
        %1707 = vst.msk [vmem:[%s1696 + $0x79] sm:$0xff] %vm767, %v1619
        %1708 = vst.msk [vmem:[%s1696 + $0x81] sm:$0xff] %vm767, %v1620
        %1709 = vst.msk [vmem:[%s1696 + $0x91] sm:$0xff] %vm767, %v1621
        %1710 = vst.msk [vmem:[%s1696 + $0x99] sm:$0xff] %vm767, %v1622
        %1711 = vst.msk [vmem:[%s1696 + $0xa9] sm:$0xff] %vm767, %v1623
        %1712 = vst.msk [vmem:[%s1696 + $0xb1] sm:$0xff] %vm767, %v1624
        %1713 = vst.msk [vmem:[%s1696 + $0xc1] sm:$0xff] %vm767, %v1625
        %1714 = vst.msk [vmem:[%s1696 + $0xc9] sm:$0xff] %vm767, %v1626
        %1715 = vst.msk [vmem:[%s1696 + $0xd9] sm:$0xff] %vm767, %v1627
        %1716 = vst.msk [vmem:[%s1696 + $0xe1] sm:$0xff] %vm767, %v1628
        %1717 = vst.msk [vmem:[%s1696 + $0xf1] sm:$0xff] %vm767, %v1629
        %1718 = vst.msk [vmem:[%s1696 + $0xf9] sm:$0xff] %vm767, %v1630
        %1719 = vst.msk [vmem:[%s1696 + $0x109] sm:$0xff] %vm767, %v1631
        %1720 = vst.msk [vmem:[%s1696 + $0x111] sm:$0xff] %vm767, %v1632
        %1721 = vst.msk [vmem:[%s1696 + $0x121] sm:$0xff] %vm767, %v1633
        %1722 = vst.msk [vmem:[%s1696 + $0x129] sm:$0xff] %vm767, %v1634
        %1723 = vst.msk [vmem:[%s1696 + $0x139] sm:$0xff] %vm767, %v1635
        %1724 = vst.msk [vmem:[%s1696 + $0x141] sm:$0xff] %vm767, %v1636
        %1725 = vst.msk [vmem:[%s1696 + $0x151] sm:$0xff] %vm767, %v1637
        %1726 = vst.msk [vmem:[%s1696 + $0x159] sm:$0xff] %vm767, %v1638
        %1727 = vst.msk [vmem:[%s1696 + $0x169] sm:$0xff] %vm767, %v1639
        %1728 = vst.msk [vmem:[%s1696 + $0x171] sm:$0xff] %vm767, %v1640
        %v1729 = vld [vmem:[#allocation2] sm:$0xff]
        %v1730 = vld [vmem:[#allocation2 + $0x8] sm:$0xff]
        %v1731 = vld [vmem:[#allocation2 + $0x10] sm:$0x3]
        %v1732 = vld [vmem:[#allocation2 + $0x18] sm:$0xff]
        %v1733 = vld [vmem:[#allocation2 + $0x20] sm:$0xff]
        %v1734 = vld [vmem:[#allocation2 + $0x28] sm:$0x3]
        %v1735 = vld [vmem:[#allocation2 + $0x30] sm:$0xff]
        %v1736 = vld [vmem:[#allocation2 + $0x38] sm:$0xff]
        %v1737 = vld [vmem:[#allocation2 + $0x40] sm:$0x3]
        %v1738 = vld [vmem:[#allocation2 + $0x48] sm:$0xff]
        %v1739 = vld [vmem:[#allocation2 + $0x50] sm:$0xff]
        %v1740 = vld [vmem:[#allocation2 + $0x58] sm:$0x3]
        %v1741 = vld [vmem:[#allocation2 + $0x60] sm:$0xff]
        %v1742 = vld [vmem:[#allocation2 + $0x68] sm:$0xff]
        %v1743 = vld [vmem:[#allocation2 + $0x70] sm:$0x3]
        %v1744 = vld [vmem:[#allocation2 + $0x78] sm:$0xff]
        %v1745 = vld [vmem:[#allocation2 + $0x80] sm:$0xff]
        %v1746 = vld [vmem:[#allocation2 + $0x88] sm:$0x3]
        %v1747 = vld [vmem:[#allocation2 + $0x90] sm:$0xff]
        %v1748 = vld [vmem:[#allocation2 + $0x98] sm:$0xff]
        %v1749 = vld [vmem:[#allocation2 + $0xa0] sm:$0x3]
        %v1750 = vld [vmem:[#allocation2 + $0xa8] sm:$0xff]
        %v1751 = vld [vmem:[#allocation2 + $0xb0] sm:$0xff]
        %v1752 = vld [vmem:[#allocation2 + $0xb8] sm:$0x3]
        %v1753 = vld [vmem:[#allocation2 + $0xc0] sm:$0xff]
        %v1754 = vld [vmem:[#allocation2 + $0xc8] sm:$0xff]
        %v1755 = vld [vmem:[#allocation2 + $0xd0] sm:$0x3]
        %v1756 = vld [vmem:[#allocation2 + $0xd8] sm:$0xff]
        %v1757 = vld [vmem:[#allocation2 + $0xe0] sm:$0xff]
        %v1758 = vld [vmem:[#allocation2 + $0xe8] sm:$0x3]
        %v1759 = vld [vmem:[#allocation2 + $0xf0] sm:$0xff]
        %v1760 = vld [vmem:[#allocation2 + $0xf8] sm:$0xff]
        %v1761 = vld [vmem:[#allocation2 + $0x100] sm:$0x3]
        %v1762 = vld [vmem:[#allocation2 + $0x108] sm:$0xff]
        %v1763 = vld [vmem:[#allocation2 + $0x110] sm:$0xff]
        %v1764 = vld [vmem:[#allocation2 + $0x118] sm:$0x3]
        %v1765 = vld [vmem:[#allocation2 + $0x120] sm:$0xff]
        %v1766 = vld [vmem:[#allocation2 + $0x128] sm:$0xff]
        %v1767 = vld [vmem:[#allocation2 + $0x130] sm:$0x3]
        %v1768 = vld [vmem:[#allocation2 + $0x138] sm:$0xff]
        %v1769 = vld [vmem:[#allocation2 + $0x140] sm:$0xff]
        %v1770 = vld [vmem:[#allocation2 + $0x148] sm:$0x3]
        %v1771 = vld [vmem:[#allocation2 + $0x150] sm:$0xff]
        %v1772 = vld [vmem:[#allocation2 + $0x158] sm:$0xff]
        %v1773 = vld [vmem:[#allocation2 + $0x160] sm:$0x3]
        %v1774 = vld [vmem:[#allocation2 + $0x168] sm:$0xff]
        %v1775 = vld [vmem:[#allocation2 + $0x170] sm:$0xff]
        %v1776 = vld [vmem:[#allocation2 + $0x178] sm:$0x3]
        %v1777 = vld [vmem:[#allocation2 + $0x180] sm:$0xff]
        %v1778 = vld [vmem:[#allocation2 + $0x188] sm:$0xff]
        %v1779 = vld [vmem:[#allocation2 + $0x190] sm:$0x3]
        %v1780 = vld [vmem:[#allocation2 + $0x198] sm:$0xff]
        %v1781 = vld [vmem:[#allocation2 + $0x1a0] sm:$0xff]
        %v1782 = vld [vmem:[#allocation2 + $0x1a8] sm:$0x3]
        %v1837 = vrot.slane %v1729, 1
        %v1838 = vrot.slane %v1730, 1
        %v1839 = vsel %vm332, %v1837, %v1838
        %v1840 = vrot.slane %v1731, 1
        %v1841 = vsel %vm332, %v1838, %v1840
        %v1842 = vrot.slane %v1732, 1
        %v1843 = vrot.slane %v1733, 1
        %v1844 = vsel %vm332, %v1842, %v1843
        %v1845 = vrot.slane %v1734, 1
        %v1846 = vsel %vm332, %v1843, %v1845
        %v1847 = vrot.slane %v1735, 1
        %v1848 = vrot.slane %v1736, 1
        %v1849 = vsel %vm332, %v1847, %v1848
        %v1850 = vrot.slane %v1737, 1
        %v1851 = vsel %vm332, %v1848, %v1850
        %v1852 = vrot.slane %v1738, 1
        %v1853 = vrot.slane %v1739, 1
        %v1854 = vsel %vm332, %v1852, %v1853
        %v1855 = vrot.slane %v1740, 1
        %v1856 = vsel %vm332, %v1853, %v1855
        %v1857 = vrot.slane %v1741, 1
        %v1858 = vrot.slane %v1742, 1
        %v1859 = vsel %vm332, %v1857, %v1858
        %v1860 = vrot.slane %v1743, 1
        %v1861 = vsel %vm332, %v1858, %v1860
        %v1862 = vrot.slane %v1744, 1
        %v1863 = vrot.slane %v1745, 1
        %v1864 = vsel %vm332, %v1862, %v1863
        %v1865 = vrot.slane %v1746, 1
        %v1866 = vsel %vm332, %v1863, %v1865
        %v1867 = vrot.slane %v1747, 1
        %v1868 = vrot.slane %v1748, 1
        %v1869 = vsel %vm332, %v1867, %v1868
        %v1870 = vrot.slane %v1749, 1
        %v1871 = vsel %vm332, %v1868, %v1870
        %v1872 = vrot.slane %v1750, 1
        %v1873 = vrot.slane %v1751, 1
        %v1874 = vsel %vm332, %v1872, %v1873
        %v1875 = vrot.slane %v1752, 1
        %v1876 = vsel %vm332, %v1873, %v1875
        %v1877 = vrot.slane %v1753, 1
        %v1878 = vrot.slane %v1754, 1
        %v1879 = vsel %vm332, %v1877, %v1878
        %v1880 = vrot.slane %v1755, 1
        %v1881 = vsel %vm332, %v1878, %v1880
        %v1882 = vrot.slane %v1756, 1
        %v1883 = vrot.slane %v1757, 1
        %v1884 = vsel %vm332, %v1882, %v1883
        %v1885 = vrot.slane %v1758, 1
        %v1886 = vsel %vm332, %v1883, %v1885
        %v1887 = vrot.slane %v1759, 1
        %v1888 = vrot.slane %v1760, 1
        %v1889 = vsel %vm332, %v1887, %v1888
        %v1890 = vrot.slane %v1761, 1
        %v1891 = vsel %vm332, %v1888, %v1890
        %v1892 = vrot.slane %v1762, 1
        %v1893 = vrot.slane %v1763, 1
        %v1894 = vsel %vm332, %v1892, %v1893
        %v1895 = vrot.slane %v1764, 1
        %v1896 = vsel %vm332, %v1893, %v1895
        %v1897 = vrot.slane %v1765, 1
        %v1898 = vrot.slane %v1766, 1
        %v1899 = vsel %vm332, %v1897, %v1898
        %v1900 = vrot.slane %v1767, 1
        %v1901 = vsel %vm332, %v1898, %v1900
        %v1902 = vrot.slane %v1768, 1
        %v1903 = vrot.slane %v1769, 1
        %v1904 = vsel %vm332, %v1902, %v1903
        %v1905 = vrot.slane %v1770, 1
        %v1906 = vsel %vm332, %v1903, %v1905
        %v1907 = vrot.slane %v1771, 1
        %v1908 = vrot.slane %v1772, 1
        %v1909 = vsel %vm332, %v1907, %v1908
        %v1910 = vrot.slane %v1773, 1
        %v1911 = vsel %vm332, %v1908, %v1910
        %v1912 = vrot.slane %v1774, 1
        %v1913 = vrot.slane %v1775, 1
        %v1914 = vsel %vm332, %v1912, %v1913
        %v1915 = vrot.slane %v1776, 1
        %v1916 = vsel %vm332, %v1913, %v1915
        %v1917 = vrot.slane %v1777, 1
        %v1918 = vrot.slane %v1778, 1
        %v1919 = vsel %vm332, %v1917, %v1918
        %v1920 = vrot.slane %v1779, 1
        %v1921 = vsel %vm332, %v1918, %v1920
        %v1922 = vrot.slane %v1780, 1
        %v1923 = vrot.slane %v1781, 1
        %v1924 = vsel %vm332, %v1922, %v1923
        %v1925 = vrot.slane %v1782, 1
        %v1926 = vsel %vm332, %v1923, %v1925
        %1927 = vrot.lane.b32.xlu0 %v1839, 64
        %v1928 = vpop.permute.xlu0 %1927
        %1929 = vrot.lane.b32.xlu0 %v1841, 64
        %v1930 = vpop.permute.xlu0 %1929
        %1931 = vrot.lane.b32.xlu0 %v1844, 64
        %v1932 = vpop.permute.xlu0 %1931
        %1933 = vrot.lane.b32.xlu0 %v1846, 64
        %v1934 = vpop.permute.xlu0 %1933
        %1935 = vrot.lane.b32.xlu0 %v1849, 64
        %v1936 = vpop.permute.xlu0 %1935
        %1937 = vrot.lane.b32.xlu0 %v1851, 64
        %v1938 = vpop.permute.xlu0 %1937
        %1939 = vrot.lane.b32.xlu0 %v1854, 64
        %v1940 = vpop.permute.xlu0 %1939
        %1941 = vrot.lane.b32.xlu0 %v1856, 64
        %v1942 = vpop.permute.xlu0 %1941
        %1943 = vrot.lane.b32.xlu0 %v1859, 64
        %v1944 = vpop.permute.xlu0 %1943
        %1945 = vrot.lane.b32.xlu0 %v1861, 64
        %v1946 = vpop.permute.xlu0 %1945
        %1947 = vrot.lane.b32.xlu0 %v1864, 64
        %v1948 = vpop.permute.xlu0 %1947
        %1949 = vrot.lane.b32.xlu0 %v1866, 64
        %v1950 = vpop.permute.xlu0 %1949
        %1951 = vrot.lane.b32.xlu0 %v1869, 64
        %v1952 = vpop.permute.xlu0 %1951
        %1953 = vrot.lane.b32.xlu0 %v1871, 64
        %v1954 = vpop.permute.xlu0 %1953
        %1955 = vrot.lane.b32.xlu0 %v1874, 64
        %v1956 = vpop.permute.xlu0 %1955
        %1957 = vrot.lane.b32.xlu0 %v1876, 64
        %v1958 = vpop.permute.xlu0 %1957
        %1959 = vrot.lane.b32.xlu0 %v1879, 64
        %v1960 = vpop.permute.xlu0 %1959
        %1961 = vrot.lane.b32.xlu0 %v1881, 64
        %v1962 = vpop.permute.xlu0 %1961
        %1963 = vrot.lane.b32.xlu0 %v1884, 64
        %v1964 = vpop.permute.xlu0 %1963
        %1965 = vrot.lane.b32.xlu0 %v1886, 64
        %v1966 = vpop.permute.xlu0 %1965
        %1967 = vrot.lane.b32.xlu0 %v1889, 64
        %v1968 = vpop.permute.xlu0 %1967
        %1969 = vrot.lane.b32.xlu0 %v1891, 64
        %v1970 = vpop.permute.xlu0 %1969
        %1971 = vrot.lane.b32.xlu0 %v1894, 64
        %v1972 = vpop.permute.xlu0 %1971
        %1973 = vrot.lane.b32.xlu0 %v1896, 64
        %v1974 = vpop.permute.xlu0 %1973
        %1975 = vrot.lane.b32.xlu0 %v1899, 64
        %v1976 = vpop.permute.xlu0 %1975
        %1977 = vrot.lane.b32.xlu0 %v1901, 64
        %v1978 = vpop.permute.xlu0 %1977
        %1979 = vrot.lane.b32.xlu0 %v1904, 64
        %v1980 = vpop.permute.xlu0 %1979
        %1981 = vrot.lane.b32.xlu0 %v1906, 64
        %v1982 = vpop.permute.xlu0 %1981
        %1983 = vrot.lane.b32.xlu0 %v1909, 64
        %v1984 = vpop.permute.xlu0 %1983
        %1985 = vrot.lane.b32.xlu0 %v1911, 64
        %v1986 = vpop.permute.xlu0 %1985
        %1987 = vrot.lane.b32.xlu0 %v1914, 64
        %v1988 = vpop.permute.xlu0 %1987
        %1989 = vrot.lane.b32.xlu0 %v1916, 64
        %v1990 = vpop.permute.xlu0 %1989
        %1991 = vrot.lane.b32.xlu0 %v1919, 64
        %v1992 = vpop.permute.xlu0 %1991
        %1993 = vrot.lane.b32.xlu0 %v1921, 64
        %v1994 = vpop.permute.xlu0 %1993
        %1995 = vrot.lane.b32.xlu0 %v1924, 64
        %v1996 = vpop.permute.xlu0 %1995
        %1997 = vrot.lane.b32.xlu0 %v1926, 64
        %v1998 = vpop.permute.xlu0 %1997
        %v2035 = vrot.slane %v1729, 2
        %v2036 = vrot.slane %v1730, 2
        %v2037 = vsel %vm531, %v2035, %v2036
        %v2038 = vrot.slane %v1731, 2
        %v2039 = vsel %vm531, %v2036, %v2038
        %v2040 = vrot.slane %v1732, 2
        %v2041 = vrot.slane %v1733, 2
        %v2042 = vsel %vm531, %v2040, %v2041
        %v2043 = vrot.slane %v1734, 2
        %v2044 = vsel %vm531, %v2041, %v2043
        %v2045 = vrot.slane %v1735, 2
        %v2046 = vrot.slane %v1736, 2
        %v2047 = vsel %vm531, %v2045, %v2046
        %v2048 = vrot.slane %v1737, 2
        %v2049 = vsel %vm531, %v2046, %v2048
        %v2050 = vrot.slane %v1738, 2
        %v2051 = vrot.slane %v1739, 2
        %v2052 = vsel %vm531, %v2050, %v2051
        %v2053 = vrot.slane %v1740, 2
        %v2054 = vsel %vm531, %v2051, %v2053
        %v2055 = vrot.slane %v1741, 2
        %v2056 = vrot.slane %v1742, 2
        %v2057 = vsel %vm531, %v2055, %v2056
        %v2058 = vrot.slane %v1743, 2
        %v2059 = vsel %vm531, %v2056, %v2058
        %v2060 = vrot.slane %v1744, 2
        %v2061 = vrot.slane %v1745, 2
        %v2062 = vsel %vm531, %v2060, %v2061
        %v2063 = vrot.slane %v1746, 2
        %v2064 = vsel %vm531, %v2061, %v2063
        %v2065 = vrot.slane %v1747, 2
        %v2066 = vrot.slane %v1748, 2
        %v2067 = vsel %vm531, %v2065, %v2066
        %v2068 = vrot.slane %v1749, 2
        %v2069 = vsel %vm531, %v2066, %v2068
        %v2070 = vrot.slane %v1750, 2
        %v2071 = vrot.slane %v1751, 2
        %v2072 = vsel %vm531, %v2070, %v2071
        %v2073 = vrot.slane %v1752, 2
        %v2074 = vsel %vm531, %v2071, %v2073
        %v2075 = vrot.slane %v1753, 2
        %v2076 = vrot.slane %v1754, 2
        %v2077 = vsel %vm531, %v2075, %v2076
        %v2078 = vrot.slane %v1755, 2
        %v2079 = vsel %vm531, %v2076, %v2078
        %v2080 = vrot.slane %v1756, 2
        %v2081 = vrot.slane %v1757, 2
        %v2082 = vsel %vm531, %v2080, %v2081
        %v2083 = vrot.slane %v1758, 2
        %v2084 = vsel %vm531, %v2081, %v2083
        %v2085 = vrot.slane %v1759, 2
        %v2086 = vrot.slane %v1760, 2
        %v2087 = vsel %vm531, %v2085, %v2086
        %v2088 = vrot.slane %v1761, 2
        %v2089 = vsel %vm531, %v2086, %v2088
        %v2090 = vrot.slane %v1762, 2
        %v2091 = vrot.slane %v1763, 2
        %v2092 = vsel %vm531, %v2090, %v2091
        %v2093 = vrot.slane %v1764, 2
        %v2094 = vsel %vm531, %v2091, %v2093
        %v2095 = vrot.slane %v1765, 2
        %v2096 = vrot.slane %v1766, 2
        %v2097 = vsel %vm531, %v2095, %v2096
        %v2098 = vrot.slane %v1767, 2
        %v2099 = vsel %vm531, %v2096, %v2098
        %v2100 = vrot.slane %v1768, 2
        %v2101 = vrot.slane %v1769, 2
        %v2102 = vsel %vm531, %v2100, %v2101
        %v2103 = vrot.slane %v1770, 2
        %v2104 = vsel %vm531, %v2101, %v2103
        %v2105 = vrot.slane %v1771, 2
        %v2106 = vrot.slane %v1772, 2
        %v2107 = vsel %vm531, %v2105, %v2106
        %v2108 = vrot.slane %v1773, 2
        %v2109 = vsel %vm531, %v2106, %v2108
        %v2110 = vrot.slane %v1774, 2
        %v2111 = vrot.slane %v1775, 2
        %v2112 = vsel %vm531, %v2110, %v2111
        %v2113 = vrot.slane %v1776, 2
        %v2114 = vsel %vm531, %v2111, %v2113
        %v2115 = vrot.slane %v1777, 2
        %v2116 = vrot.slane %v1778, 2
        %v2117 = vsel %vm531, %v2115, %v2116
        %v2118 = vrot.slane %v1779, 2
        %v2119 = vsel %vm531, %v2116, %v2118
        %v2120 = vrot.slane %v1780, 2
        %v2121 = vrot.slane %v1781, 2
        %v2122 = vsel %vm531, %v2120, %v2121
        %v2123 = vrot.slane %v1782, 2
        %v2124 = vsel %vm531, %v2121, %v2123
        %v2161 = vsel %vm767, %v1729, %v1928
        %v2162 = vsel %vm767, %v1730, %v1930
        %v2163 = vsel %vm767, %v1732, %v1932
        %v2164 = vsel %vm767, %v1733, %v1934
        %v2165 = vsel %vm767, %v1735, %v1936
        %v2166 = vsel %vm767, %v1736, %v1938
        %v2167 = vsel %vm767, %v1738, %v1940
        %v2168 = vsel %vm767, %v1739, %v1942
        %v2169 = vsel %vm767, %v1741, %v1944
        %v2170 = vsel %vm767, %v1742, %v1946
        %v2171 = vsel %vm767, %v1744, %v1948
        %v2172 = vsel %vm767, %v1745, %v1950
        %v2173 = vsel %vm767, %v1747, %v1952
        %v2174 = vsel %vm767, %v1748, %v1954
        %v2175 = vsel %vm767, %v1750, %v1956
        %v2176 = vsel %vm767, %v1751, %v1958
        %v2177 = vsel %vm767, %v1753, %v1960
        %v2178 = vsel %vm767, %v1754, %v1962
        %v2179 = vsel %vm767, %v1756, %v1964
        %v2180 = vsel %vm767, %v1757, %v1966
        %v2181 = vsel %vm767, %v1759, %v1968
        %v2182 = vsel %vm767, %v1760, %v1970
        %v2183 = vsel %vm767, %v1762, %v1972
        %v2184 = vsel %vm767, %v1763, %v1974
        %v2185 = vsel %vm767, %v1765, %v1976
        %v2186 = vsel %vm767, %v1766, %v1978
        %v2187 = vsel %vm767, %v1768, %v1980
        %v2188 = vsel %vm767, %v1769, %v1982
        %v2189 = vsel %vm767, %v1771, %v1984
        %v2190 = vsel %vm767, %v1772, %v1986
        %v2191 = vsel %vm767, %v1774, %v1988
        %v2192 = vsel %vm767, %v1775, %v1990
        %v2193 = vsel %vm767, %v1777, %v1992
        %v2194 = vsel %vm767, %v1778, %v1994
        %v2195 = vsel %vm767, %v1780, %v1996
        %v2196 = vsel %vm767, %v1781, %v1998
        %v2197 = vld [vmem:[%s4] sm:$0x1]
        %v2199 = vlaneseq
        %v2200 = vshrl.u32 %v2199, 7
        %v2201 = vsub.s32 0, %v2200
        %v2202 = vrot.slane %v2197, %v2201
        %v2204 = vpack.c.bf16 %v2162, %v2161
        %v2205 = vpack.c.bf16 %v2039, %v2037
        %v2206 = vpack.c.bf16 %v2164, %v2163
        %v2207 = vpack.c.bf16 %v2044, %v2042
        %v2208 = vpack.c.bf16 %v2166, %v2165
        %v2209 = vpack.c.bf16 %v2049, %v2047
        %v2210 = vpack.c.bf16 %v2168, %v2167
        %v2211 = vpack.c.bf16 %v2054, %v2052
        %v2212 = vpack.c.bf16 %v2170, %v2169
        %v2213 = vpack.c.bf16 %v2059, %v2057
        %v2214 = vpack.c.bf16 %v2172, %v2171
        %v2215 = vpack.c.bf16 %v2064, %v2062
        %v2216 = vpack.c.bf16 %v2174, %v2173
        %v2217 = vpack.c.bf16 %v2069, %v2067
        %v2218 = vpack.c.bf16 %v2176, %v2175
        %v2219 = vpack.c.bf16 %v2074, %v2072
        %v2220 = vpack.c.bf16 %v2178, %v2177
        %v2221 = vpack.c.bf16 %v2079, %v2077
        %v2222 = vpack.c.bf16 %v2180, %v2179
        %v2223 = vpack.c.bf16 %v2084, %v2082
        %v2224 = vpack.c.bf16 %v2182, %v2181
        %v2225 = vpack.c.bf16 %v2089, %v2087
        %v2226 = vpack.c.bf16 %v2184, %v2183
        %v2227 = vpack.c.bf16 %v2094, %v2092
        %v2228 = vpack.c.bf16 %v2186, %v2185
        %v2229 = vpack.c.bf16 %v2099, %v2097
        %v2230 = vpack.c.bf16 %v2188, %v2187
        %v2231 = vpack.c.bf16 %v2104, %v2102
        %v2232 = vpack.c.bf16 %v2190, %v2189
        %v2233 = vpack.c.bf16 %v2109, %v2107
        %v2234 = vpack.c.bf16 %v2192, %v2191
        %v2235 = vpack.c.bf16 %v2114, %v2112
        %v2236 = vld [vmem:[%s3] sm:$0xf]
        %v2237 = vld [vmem:[%s3 + $0x4] sm:$0xf]
        %v2238 = vld [vmem:[%s3 + $0x8] sm:$0xf]
        %v2239 = vld [vmem:[%s3 + $0xc] sm:$0xf]
        %v2240 = vld [vmem:[%s3 + $0x10] sm:$0xf]
        %v2241 = vld [vmem:[%s3 + $0x14] sm:$0xf]
        %v2242 = vld [vmem:[%s3 + $0x18] sm:$0xf]
        %v2243 = vld [vmem:[%s3 + $0x1c] sm:$0xf]
        %v2244 = vld [vmem:[%s3 + $0x20] sm:$0xf]
        %v2245 = vld [vmem:[%s3 + $0x24] sm:$0xf]
        %v2246 = vld [vmem:[%s3 + $0x28] sm:$0xf]
        %v2247 = vld [vmem:[%s3 + $0x2c] sm:$0xf]
        %v2248 = vld [vmem:[%s3 + $0x30] sm:$0xf]
        %v2249 = vld [vmem:[%s3 + $0x34] sm:$0xf]
        %v2250 = vld [vmem:[%s3 + $0x38] sm:$0xf]
        %v2251 = vld [vmem:[%s3 + $0x3c] sm:$0xf]
        %v2252 = vld [vmem:[%s3 + $0x40] sm:$0xf]
        %v2253 = vld [vmem:[%s3 + $0x44] sm:$0xf]
        %v2254 = vld [vmem:[%s3 + $0x48] sm:$0xf]
        %v2255 = vld [vmem:[%s3 + $0x4c] sm:$0xf]
        %v2256 = vld [vmem:[%s3 + $0x50] sm:$0xf]
        %v2257 = vld [vmem:[%s3 + $0x54] sm:$0xf]
        %v2258 = vld [vmem:[%s3 + $0x58] sm:$0xf]
        %v2259 = vld [vmem:[%s3 + $0x5c] sm:$0xf]
        %v2284 = vunpack.c.l.b16 %v2236
        %v2285 = vunpack.c.l.b16 %v2237
        %v2286 = vunpack.c.l.b16 %v2238
        %v2287 = vunpack.c.l.b16 %v2239
        %v2288 = vunpack.c.l.b16 %v2240
        %v2289 = vunpack.c.l.b16 %v2241
        %v2290 = vunpack.c.l.b16 %v2242
        %v2291 = vunpack.c.l.b16 %v2243
        %v2292 = vunpack.c.l.b16 %v2244
        %v2293 = vunpack.c.l.b16 %v2245
        %v2294 = vunpack.c.l.b16 %v2246
        %v2295 = vunpack.c.l.b16 %v2247
        %v2296 = vunpack.c.l.b16 %v2248
        %v2297 = vunpack.c.l.b16 %v2249
        %v2298 = vunpack.c.l.b16 %v2250
        %v2299 = vunpack.c.l.b16 %v2251
        %v2300 = vunpack.c.l.b16 %v2252
        %v2301 = vunpack.c.l.b16 %v2253
        %v2302 = vunpack.c.l.b16 %v2254
        %v2303 = vunpack.c.l.b16 %v2255
        %v2304 = vunpack.c.l.b16 %v2256
        %v2305 = vunpack.c.l.b16 %v2257
        %v2306 = vunpack.c.l.b16 %v2258
        %v2307 = vunpack.c.l.b16 %v2259
        %v2308 = vpack.c.b16 %v2285, %v2284
        %v2309 = vpack.c.b16 %v2287, %v2286
        %v2310 = vpack.c.b16 %v2289, %v2288
        %v2311 = vpack.c.b16 %v2291, %v2290
        %v2312 = vpack.c.b16 %v2293, %v2292
        %v2313 = vpack.c.b16 %v2295, %v2294
        %v2314 = vpack.c.b16 %v2297, %v2296
        %v2315 = vpack.c.b16 %v2299, %v2298
        %v2316 = vpack.c.b16 %v2301, %v2300
        %v2317 = vpack.c.b16 %v2303, %v2302
        %v2318 = vpack.c.b16 %v2305, %v2304
        %v2319 = vpack.c.b16 %v2307, %v2306
        %v2333 = vsel %vm767, %v2205, 0
        %v2336 = vsel %vm767, %v2207, 0
        %v2339 = vsel %vm767, %v2209, 0
        %v2342 = vsel %vm767, %v2211, 0
        %v2345 = vsel %vm767, %v2213, 0
        %v2348 = vsel %vm767, %v2215, 0
        %v2351 = vsel %vm767, %v2217, 0
        %v2354 = vsel %vm767, %v2219, 0
        %v2357 = vsel %vm767, %v2221, 0
        %v2360 = vsel %vm767, %v2223, 0
        %v2363 = vsel %vm767, %v2225, 0
        %v2366 = vsel %vm767, %v2227, 0
        %v2369 = vsel %vm767, %v2229, 0
        %v2372 = vsel %vm767, %v2231, 0
        %v2375 = vsel %vm767, %v2233, 0
        %v2378 = vsel %vm767, %v2235, 0
        %2380 = vmatprep.subr.bf16.mxu0 0
        %2381 = vmatpush1.bf16.msra.mxu0 %v2308
        %2382 = vmatprep.subr.bf16.mxu0 0
        %2383 = vmatpush1.bf16.msra.mxu0 %v2309
        %2384 = vmatprep.subr.bf16.mxu0 0
        %2385 = vmatpush1.bf16.msra.mxu0 %v2310
        %2386 = vmatprep.subr.bf16.mxu0 0
        %2387 = vmatpush1.bf16.msra.mxu0 %v2311
        %2388 = vmatprep.subr.bf16.mxu0 0
        %2389 = vmatpush1.bf16.msra.mxu0 %v2312
        %2390 = vmatprep.subr.bf16.mxu0 0
        %2391 = vmatpush1.bf16.msra.mxu0 %v2313
        %2392 = vmatprep.subr.bf16.mxu0 0
        %2393 = vmatpush1.bf16.msra.mxu0 %v2314
        %2394 = vmatprep.subr.bf16.mxu0 0
        %2395 = vmatpush1.bf16.msra.mxu0 %v2315
        %2396 = vmatprep.subr.bf16.mxu0 0
        %2397 = vmatpush1.bf16.msra.mxu0 %v2316
        %2398 = vmatprep.subr.bf16.mxu0 0
        %2399 = vmatpush1.bf16.msra.mxu0 %v2317
        %2400 = vmatprep.subr.bf16.mxu0 0
        %2401 = vmatpush1.bf16.msra.mxu0 %v2318
        %2402 = vmatprep.subr.bf16.mxu0 0
        %2403 = vmatpush1.bf16.msra.mxu0 %v2319
        %2404 = vmatprep.subr.bf16.mxu0 0
        %2405 = vmatpush1.bf16.msra.mxu0 0
        %2406 = vmatprep.subr.bf16.mxu0 0
        %2407 = vmatpush1.bf16.msra.mxu0 0
        %2408 = vmatprep.subr.bf16.mxu0 0
        %2409 = vmatpush1.bf16.msra.mxu0 0
        %2410 = vmatprep.subr.bf16.mxu0 0
        %2411 = vmatpush1.bf16.msra.mxu0 0
        %2412 = vmatprep.mubr.bf16.mxu0 %v2333
        %2413 = vmatmul.mubr.bf16.gmra.mrb[0].mxu0 %v2204
        %v2414 = vpop.f32.mrb[0].mxu0
        %v2415 = vadd.f32 0.0, %v2414
        %v2416 = vpop.f32.mrb[0].mxu0
        %v2417 = vpop.f32.mrb[0].mxu0
        %v2418 = vadd.f32 0.0, %v2417
        %v2419 = vpop.f32.mrb[0].mxu0
        %2420 = vmatprep.mubr.bf16.mxu0 %v2336
        %2421 = vmatmul.mubr.bf16.gmra.mrb[0].mxu0 %v2206
        %v2422 = vpop.f32.mrb[0].mxu0
        %v2423 = vadd.f32 0.0, %v2422
        %v2424 = vpop.f32.mrb[0].mxu0
        %v2425 = vpop.f32.mrb[0].mxu0
        %v2426 = vadd.f32 0.0, %v2425
        %v2427 = vpop.f32.mrb[0].mxu0
        %2428 = vmatprep.mubr.bf16.mxu0 %v2339
        %2429 = vmatmul.mubr.bf16.gmra.mrb[0].mxu0 %v2208
        %v2430 = vpop.f32.mrb[0].mxu0
        %v2431 = vadd.f32 0.0, %v2430
        %v2432 = vpop.f32.mrb[0].mxu0
        %v2433 = vpop.f32.mrb[0].mxu0
        %v2434 = vadd.f32 0.0, %v2433
        %v2435 = vpop.f32.mrb[0].mxu0
        %2436 = vmatprep.mubr.bf16.mxu0 %v2342
        %2437 = vmatmul.mubr.bf16.gmra.mrb[0].mxu0 %v2210
        %v2438 = vpop.f32.mrb[0].mxu0
        %v2439 = vadd.f32 0.0, %v2438
        %v2440 = vpop.f32.mrb[0].mxu0
        %v2441 = vpop.f32.mrb[0].mxu0
        %v2442 = vadd.f32 0.0, %v2441
        %v2443 = vpop.f32.mrb[0].mxu0
        %2444 = vmatprep.mubr.bf16.mxu0 %v2345
        %2445 = vmatmul.mubr.bf16.gmra.mrb[0].mxu0 %v2212
        %v2446 = vpop.f32.mrb[0].mxu0
        %v2447 = vadd.f32 0.0, %v2446
        %v2448 = vpop.f32.mrb[0].mxu0
        %v2449 = vpop.f32.mrb[0].mxu0
        %v2450 = vadd.f32 0.0, %v2449
        %v2451 = vpop.f32.mrb[0].mxu0
        %2452 = vmatprep.mubr.bf16.mxu0 %v2348
        %2453 = vmatmul.mubr.bf16.gmra.mrb[0].mxu0 %v2214
        %v2454 = vpop.f32.mrb[0].mxu0
        %v2455 = vadd.f32 0.0, %v2454
        %v2456 = vpop.f32.mrb[0].mxu0
        %v2457 = vpop.f32.mrb[0].mxu0
        %v2458 = vadd.f32 0.0, %v2457
        %v2459 = vpop.f32.mrb[0].mxu0
        %2460 = vmatprep.mubr.bf16.mxu0 %v2351
        %2461 = vmatmul.mubr.bf16.gmra.mrb[0].mxu0 %v2216
        %v2462 = vpop.f32.mrb[0].mxu0
        %v2463 = vadd.f32 0.0, %v2462
        %v2464 = vpop.f32.mrb[0].mxu0
        %v2465 = vpop.f32.mrb[0].mxu0
        %v2466 = vadd.f32 0.0, %v2465
        %v2467 = vpop.f32.mrb[0].mxu0
        %2468 = vmatprep.mubr.bf16.mxu0 %v2354
        %2469 = vmatmul.mubr.bf16.gmra.mrb[0].mxu0 %v2218
        %v2470 = vpop.f32.mrb[0].mxu0
        %v2471 = vadd.f32 0.0, %v2470
        %v2472 = vpop.f32.mrb[0].mxu0
        %v2473 = vpop.f32.mrb[0].mxu0
        %v2474 = vadd.f32 0.0, %v2473
        %v2475 = vpop.f32.mrb[0].mxu0
        %2476 = vmatprep.mubr.bf16.mxu0 %v2357
        %2477 = vmatmul.mubr.bf16.gmra.mrb[0].mxu0 %v2220
        %v2478 = vpop.f32.mrb[0].mxu0
        %v2479 = vadd.f32 0.0, %v2478
        %v2480 = vpop.f32.mrb[0].mxu0
        %v2481 = vpop.f32.mrb[0].mxu0
        %v2482 = vadd.f32 0.0, %v2481
        %v2483 = vpop.f32.mrb[0].mxu0
        %2484 = vmatprep.mubr.bf16.mxu0 %v2360
        %2485 = vmatmul.mubr.bf16.gmra.mrb[0].mxu0 %v2222
        %v2486 = vpop.f32.mrb[0].mxu0
        %v2487 = vadd.f32 0.0, %v2486
        %v2488 = vpop.f32.mrb[0].mxu0
        %v2489 = vpop.f32.mrb[0].mxu0
        %v2490 = vadd.f32 0.0, %v2489
        %v2491 = vpop.f32.mrb[0].mxu0
        %2492 = vmatprep.mubr.bf16.mxu0 %v2363
        %2493 = vmatmul.mubr.bf16.gmra.mrb[0].mxu0 %v2224
        %v2494 = vpop.f32.mrb[0].mxu0
        %v2495 = vadd.f32 0.0, %v2494
        %v2496 = vpop.f32.mrb[0].mxu0
        %v2497 = vpop.f32.mrb[0].mxu0
        %v2498 = vadd.f32 0.0, %v2497
        %v2499 = vpop.f32.mrb[0].mxu0
        %2500 = vmatprep.mubr.bf16.mxu0 %v2366
        %2501 = vmatmul.mubr.bf16.gmra.mrb[0].mxu0 %v2226
        %v2502 = vpop.f32.mrb[0].mxu0
        %v2503 = vadd.f32 0.0, %v2502
        %v2504 = vpop.f32.mrb[0].mxu0
        %v2505 = vpop.f32.mrb[0].mxu0
        %v2506 = vadd.f32 0.0, %v2505
        %v2507 = vpop.f32.mrb[0].mxu0
        %2508 = vmatprep.mubr.bf16.mxu0 %v2369
        %2509 = vmatmul.mubr.bf16.gmra.mrb[0].mxu0 %v2228
        %v2510 = vpop.f32.mrb[0].mxu0
        %v2511 = vadd.f32 0.0, %v2510
        %v2512 = vpop.f32.mrb[0].mxu0
        %v2513 = vpop.f32.mrb[0].mxu0
        %v2514 = vadd.f32 0.0, %v2513
        %v2515 = vpop.f32.mrb[0].mxu0
        %2516 = vmatprep.mubr.bf16.mxu0 %v2372
        %2517 = vmatmul.mubr.bf16.gmra.mrb[0].mxu0 %v2230
        %v2518 = vpop.f32.mrb[0].mxu0
        %v2519 = vadd.f32 0.0, %v2518
        %v2520 = vpop.f32.mrb[0].mxu0
        %v2521 = vpop.f32.mrb[0].mxu0
        %v2522 = vadd.f32 0.0, %v2521
        %v2523 = vpop.f32.mrb[0].mxu0
        %2524 = vmatprep.mubr.bf16.mxu0 %v2375
        %2525 = vmatmul.mubr.bf16.gmra.mrb[0].mxu0 %v2232
        %v2526 = vpop.f32.mrb[0].mxu0
        %v2527 = vadd.f32 0.0, %v2526
        %v2528 = vpop.f32.mrb[0].mxu0
        %v2529 = vpop.f32.mrb[0].mxu0
        %v2530 = vadd.f32 0.0, %v2529
        %v2531 = vpop.f32.mrb[0].mxu0
        %2532 = vmatprep.mubr.bf16.mxu0 %v2378
        %2533 = vmatmul.mubr.bf16.gmra.mrb[0].mxu0 %v2234
        %v2534 = vpop.f32.mrb[0].mxu0
        %v2535 = vadd.f32 0.0, %v2534
        %v2536 = vpop.f32.mrb[0].mxu0
        %v2537 = vpop.f32.mrb[0].mxu0
        %v2538 = vadd.f32 0.0, %v2537
        %v2539 = vpop.f32.mrb[0].mxu0
        %2540 = vdwg.mxu0
        %v2541 = vadd.f32 %v2202, %v2415
        %v2542 = vadd.f32 %v2202, %v2418
        %v2543 = vadd.f32 %v2202, %v2423
        %v2544 = vadd.f32 %v2202, %v2426
        %v2545 = vadd.f32 %v2202, %v2431
        %v2546 = vadd.f32 %v2202, %v2434
        %v2547 = vadd.f32 %v2202, %v2439
        %v2548 = vadd.f32 %v2202, %v2442
        %v2549 = vadd.f32 %v2202, %v2447
        %v2550 = vadd.f32 %v2202, %v2450
        %v2551 = vadd.f32 %v2202, %v2455
        %v2552 = vadd.f32 %v2202, %v2458
        %v2553 = vadd.f32 %v2202, %v2463
        %v2554 = vadd.f32 %v2202, %v2466
        %v2555 = vadd.f32 %v2202, %v2471
        %v2556 = vadd.f32 %v2202, %v2474
        %v2557 = vadd.f32 %v2202, %v2479
        %v2558 = vadd.f32 %v2202, %v2482
        %v2559 = vadd.f32 %v2202, %v2487
        %v2560 = vadd.f32 %v2202, %v2490
        %v2561 = vadd.f32 %v2202, %v2495
        %v2562 = vadd.f32 %v2202, %v2498
        %v2563 = vadd.f32 %v2202, %v2503
        %v2564 = vadd.f32 %v2202, %v2506
        %v2565 = vadd.f32 %v2202, %v2511
        %v2566 = vadd.f32 %v2202, %v2514
        %v2567 = vadd.f32 %v2202, %v2519
        %v2568 = vadd.f32 %v2202, %v2522
        %v2569 = vadd.f32 %v2202, %v2527
        %v2570 = vadd.f32 %v2202, %v2530
        %v2571 = vadd.f32 %v2202, %v2535
        %v2572 = vadd.f32 %v2202, %v2538
        %v2573 = vpack.c.bf16 %v2194, %v2193
        %v2574 = vpack.c.bf16 %v2119, %v2117
        %s2575 = scalar_lea.vmem %s3, 96
        %v2576 = vld [vmem:[%s2575] sm:$0xf]
        %v2577 = vld [vmem:[%s2575 + $0x4] sm:$0xf]
        %v2578 = vld [vmem:[%s2575 + $0x8] sm:$0xf]
        %v2579 = vld [vmem:[%s2575 + $0xc] sm:$0xf]
        %v2580 = vld [vmem:[%s2575 + $0x10] sm:$0xf]
        %v2581 = vld [vmem:[%s2575 + $0x14] sm:$0xf]
        %v2582 = vld [vmem:[%s2575 + $0x18] sm:$0xf]
        %v2583 = vld [vmem:[%s2575 + $0x1c] sm:$0xf]
        %v2584 = vld [vmem:[%s2575 + $0x20] sm:$0xf]
        %v2585 = vld [vmem:[%s2575 + $0x24] sm:$0xf]
        %v2586 = vld [vmem:[%s2575 + $0x28] sm:$0xf]
        %v2587 = vld [vmem:[%s2575 + $0x2c] sm:$0xf]
        %v2588 = vld [vmem:[%s2575 + $0x30] sm:$0xf]
        %v2589 = vld [vmem:[%s2575 + $0x34] sm:$0xf]
        %v2590 = vld [vmem:[%s2575 + $0x38] sm:$0xf]
        %v2591 = vld [vmem:[%s2575 + $0x3c] sm:$0xf]
        %v2592 = vld [vmem:[%s2575 + $0x40] sm:$0xf]
        %v2593 = vld [vmem:[%s2575 + $0x44] sm:$0xf]
        %v2594 = vld [vmem:[%s2575 + $0x48] sm:$0xf]
        %v2595 = vld [vmem:[%s2575 + $0x4c] sm:$0xf]
        %v2596 = vld [vmem:[%s2575 + $0x50] sm:$0xf]
        %v2597 = vld [vmem:[%s2575 + $0x54] sm:$0xf]
        %v2598 = vld [vmem:[%s2575 + $0x58] sm:$0xf]
        %v2599 = vld [vmem:[%s2575 + $0x5c] sm:$0xf]
        %v2624 = vunpack.c.l.b16 %v2576
        %v2625 = vunpack.c.l.b16 %v2577
        %v2626 = vunpack.c.l.b16 %v2578
        %v2627 = vunpack.c.l.b16 %v2579
        %v2628 = vunpack.c.l.b16 %v2580
        %v2629 = vunpack.c.l.b16 %v2581
        %v2630 = vunpack.c.l.b16 %v2582
        %v2631 = vunpack.c.l.b16 %v2583
        %v2632 = vunpack.c.l.b16 %v2584
        %v2633 = vunpack.c.l.b16 %v2585
        %v2634 = vunpack.c.l.b16 %v2586
        %v2635 = vunpack.c.l.b16 %v2587
        %v2636 = vunpack.c.l.b16 %v2588
        %v2637 = vunpack.c.l.b16 %v2589
        %v2638 = vunpack.c.l.b16 %v2590
        %v2639 = vunpack.c.l.b16 %v2591
        %v2640 = vunpack.c.l.b16 %v2592
        %v2641 = vunpack.c.l.b16 %v2593
        %v2642 = vunpack.c.l.b16 %v2594
        %v2643 = vunpack.c.l.b16 %v2595
        %v2644 = vunpack.c.l.b16 %v2596
        %v2645 = vunpack.c.l.b16 %v2597
        %v2646 = vunpack.c.l.b16 %v2598
        %v2647 = vunpack.c.l.b16 %v2599
        %v2648 = vpack.c.b16 %v2625, %v2624
        %v2649 = vpack.c.b16 %v2627, %v2626
        %v2650 = vpack.c.b16 %v2629, %v2628
        %v2651 = vpack.c.b16 %v2631, %v2630
        %v2652 = vpack.c.b16 %v2633, %v2632
        %v2653 = vpack.c.b16 %v2635, %v2634
        %v2654 = vpack.c.b16 %v2637, %v2636
        %v2655 = vpack.c.b16 %v2639, %v2638
        %v2656 = vpack.c.b16 %v2641, %v2640
        %v2657 = vpack.c.b16 %v2643, %v2642
        %v2658 = vpack.c.b16 %v2645, %v2644
        %v2659 = vpack.c.b16 %v2647, %v2646
        %v2673 = vsel %vm767, %v2574, 0
        %2675 = vmatprep.subr.bf16.mxu0 0
        %2676 = vmatpush1.bf16.msra.mxu0 %v2648
        %2677 = vmatprep.subr.bf16.mxu0 0
        %2678 = vmatpush1.bf16.msra.mxu0 %v2649
        %2679 = vmatprep.subr.bf16.mxu0 0
        %2680 = vmatpush1.bf16.msra.mxu0 %v2650
        %2681 = vmatprep.subr.bf16.mxu0 0
        %2682 = vmatpush1.bf16.msra.mxu0 %v2651
        %2683 = vmatprep.subr.bf16.mxu0 0
        %2684 = vmatpush1.bf16.msra.mxu0 %v2652
        %2685 = vmatprep.subr.bf16.mxu0 0
        %2686 = vmatpush1.bf16.msra.mxu0 %v2653
        %2687 = vmatprep.subr.bf16.mxu0 0
        %2688 = vmatpush1.bf16.msra.mxu0 %v2654
        %2689 = vmatprep.subr.bf16.mxu0 0
        %2690 = vmatpush1.bf16.msra.mxu0 %v2655
        %2691 = vmatprep.subr.bf16.mxu0 0
        %2692 = vmatpush1.bf16.msra.mxu0 %v2656
        %2693 = vmatprep.subr.bf16.mxu0 0
        %2694 = vmatpush1.bf16.msra.mxu0 %v2657
        %2695 = vmatprep.subr.bf16.mxu0 0
        %2696 = vmatpush1.bf16.msra.mxu0 %v2658
        %2697 = vmatprep.subr.bf16.mxu0 0
        %2698 = vmatpush1.bf16.msra.mxu0 %v2659
        %2699 = vmatprep.subr.bf16.mxu0 0
        %2700 = vmatpush1.bf16.msra.mxu0 0
        %2701 = vmatprep.subr.bf16.mxu0 0
        %2702 = vmatpush1.bf16.msra.mxu0 0
        %2703 = vmatprep.subr.bf16.mxu0 0
        %2704 = vmatpush1.bf16.msra.mxu0 0
        %2705 = vmatprep.subr.bf16.mxu0 0
        %2706 = vmatpush1.bf16.msra.mxu0 0
        %2707 = vmatprep.mubr.bf16.mxu0 %v2336
        %2708 = vmatmul.mubr.bf16.gmra.mrb[0].mxu0 %v2206
        %v2709 = vpop.f32.mrb[0].mxu0
        %v2710 = vadd.f32 0.0, %v2709
        %v2711 = vpop.f32.mrb[0].mxu0
        %v2712 = vpop.f32.mrb[0].mxu0
        %v2713 = vadd.f32 0.0, %v2712
        %v2714 = vpop.f32.mrb[0].mxu0
        %2715 = vmatprep.mubr.bf16.mxu0 %v2339
        %2716 = vmatmul.mubr.bf16.gmra.mrb[0].mxu0 %v2208
        %v2717 = vpop.f32.mrb[0].mxu0
        %v2718 = vadd.f32 0.0, %v2717
        %v2719 = vpop.f32.mrb[0].mxu0
        %v2720 = vpop.f32.mrb[0].mxu0
        %v2721 = vadd.f32 0.0, %v2720
        %v2722 = vpop.f32.mrb[0].mxu0
        %2723 = vmatprep.mubr.bf16.mxu0 %v2342
        %2724 = vmatmul.mubr.bf16.gmra.mrb[0].mxu0 %v2210
        %v2725 = vpop.f32.mrb[0].mxu0
        %v2726 = vadd.f32 0.0, %v2725
        %v2727 = vpop.f32.mrb[0].mxu0
        %v2728 = vpop.f32.mrb[0].mxu0
        %v2729 = vadd.f32 0.0, %v2728
        %v2730 = vpop.f32.mrb[0].mxu0
        %2731 = vmatprep.mubr.bf16.mxu0 %v2345
        %2732 = vmatmul.mubr.bf16.gmra.mrb[0].mxu0 %v2212
        %v2733 = vpop.f32.mrb[0].mxu0
        %v2734 = vadd.f32 0.0, %v2733
        %v2735 = vpop.f32.mrb[0].mxu0
        %v2736 = vpop.f32.mrb[0].mxu0
        %v2737 = vadd.f32 0.0, %v2736
        %v2738 = vpop.f32.mrb[0].mxu0
        %2739 = vmatprep.mubr.bf16.mxu0 %v2348
        %2740 = vmatmul.mubr.bf16.gmra.mrb[0].mxu0 %v2214
        %v2741 = vpop.f32.mrb[0].mxu0
        %v2742 = vadd.f32 0.0, %v2741
        %v2743 = vpop.f32.mrb[0].mxu0
        %v2744 = vpop.f32.mrb[0].mxu0
        %v2745 = vadd.f32 0.0, %v2744
        %v2746 = vpop.f32.mrb[0].mxu0
        %2747 = vmatprep.mubr.bf16.mxu0 %v2351
        %2748 = vmatmul.mubr.bf16.gmra.mrb[0].mxu0 %v2216
        %v2749 = vpop.f32.mrb[0].mxu0
        %v2750 = vadd.f32 0.0, %v2749
        %v2751 = vpop.f32.mrb[0].mxu0
        %v2752 = vpop.f32.mrb[0].mxu0
        %v2753 = vadd.f32 0.0, %v2752
        %v2754 = vpop.f32.mrb[0].mxu0
        %2755 = vmatprep.mubr.bf16.mxu0 %v2354
        %2756 = vmatmul.mubr.bf16.gmra.mrb[0].mxu0 %v2218
        %v2757 = vpop.f32.mrb[0].mxu0
        %v2758 = vadd.f32 0.0, %v2757
        %v2759 = vpop.f32.mrb[0].mxu0
        %v2760 = vpop.f32.mrb[0].mxu0
        %v2761 = vadd.f32 0.0, %v2760
        %v2762 = vpop.f32.mrb[0].mxu0
        %2763 = vmatprep.mubr.bf16.mxu0 %v2357
        %2764 = vmatmul.mubr.bf16.gmra.mrb[0].mxu0 %v2220
        %v2765 = vpop.f32.mrb[0].mxu0
        %v2766 = vadd.f32 0.0, %v2765
        %v2767 = vpop.f32.mrb[0].mxu0
        %v2768 = vpop.f32.mrb[0].mxu0
        %v2769 = vadd.f32 0.0, %v2768
        %v2770 = vpop.f32.mrb[0].mxu0
        %2771 = vmatprep.mubr.bf16.mxu0 %v2360
        %2772 = vmatmul.mubr.bf16.gmra.mrb[0].mxu0 %v2222
        %v2773 = vpop.f32.mrb[0].mxu0
        %v2774 = vadd.f32 0.0, %v2773
        %v2775 = vpop.f32.mrb[0].mxu0
        %v2776 = vpop.f32.mrb[0].mxu0
        %v2777 = vadd.f32 0.0, %v2776
        %v2778 = vpop.f32.mrb[0].mxu0
        %2779 = vmatprep.mubr.bf16.mxu0 %v2363
        %2780 = vmatmul.mubr.bf16.gmra.mrb[0].mxu0 %v2224
        %v2781 = vpop.f32.mrb[0].mxu0
        %v2782 = vadd.f32 0.0, %v2781
        %v2783 = vpop.f32.mrb[0].mxu0
        %v2784 = vpop.f32.mrb[0].mxu0
        %v2785 = vadd.f32 0.0, %v2784
        %v2786 = vpop.f32.mrb[0].mxu0
        %2787 = vmatprep.mubr.bf16.mxu0 %v2366
        %2788 = vmatmul.mubr.bf16.gmra.mrb[0].mxu0 %v2226
        %v2789 = vpop.f32.mrb[0].mxu0
        %v2790 = vadd.f32 0.0, %v2789
        %v2791 = vpop.f32.mrb[0].mxu0
        %v2792 = vpop.f32.mrb[0].mxu0
        %v2793 = vadd.f32 0.0, %v2792
        %v2794 = vpop.f32.mrb[0].mxu0
        %2795 = vmatprep.mubr.bf16.mxu0 %v2369
        %2796 = vmatmul.mubr.bf16.gmra.mrb[0].mxu0 %v2228
        %v2797 = vpop.f32.mrb[0].mxu0
        %v2798 = vadd.f32 0.0, %v2797
        %v2799 = vpop.f32.mrb[0].mxu0
        %v2800 = vpop.f32.mrb[0].mxu0
        %v2801 = vadd.f32 0.0, %v2800
        %v2802 = vpop.f32.mrb[0].mxu0
        %2803 = vmatprep.mubr.bf16.mxu0 %v2372
        %2804 = vmatmul.mubr.bf16.gmra.mrb[0].mxu0 %v2230
        %v2805 = vpop.f32.mrb[0].mxu0
        %v2806 = vadd.f32 0.0, %v2805
        %v2807 = vpop.f32.mrb[0].mxu0
        %v2808 = vpop.f32.mrb[0].mxu0
        %v2809 = vadd.f32 0.0, %v2808
        %v2810 = vpop.f32.mrb[0].mxu0
        %2811 = vmatprep.mubr.bf16.mxu0 %v2375
        %2812 = vmatmul.mubr.bf16.gmra.mrb[0].mxu0 %v2232
        %v2813 = vpop.f32.mrb[0].mxu0
        %v2814 = vadd.f32 0.0, %v2813
        %v2815 = vpop.f32.mrb[0].mxu0
        %v2816 = vpop.f32.mrb[0].mxu0
        %v2817 = vadd.f32 0.0, %v2816
        %v2818 = vpop.f32.mrb[0].mxu0
        %2819 = vmatprep.mubr.bf16.mxu0 %v2378
        %2820 = vmatmul.mubr.bf16.gmra.mrb[0].mxu0 %v2234
        %v2821 = vpop.f32.mrb[0].mxu0
        %v2822 = vadd.f32 0.0, %v2821
        %v2823 = vpop.f32.mrb[0].mxu0
        %v2824 = vpop.f32.mrb[0].mxu0
        %v2825 = vadd.f32 0.0, %v2824
        %v2826 = vpop.f32.mrb[0].mxu0
        %2827 = vmatprep.mubr.bf16.mxu0 %v2673
        %2828 = vmatmul.mubr.bf16.gmra.mrb[0].mxu0 %v2573
        %v2829 = vpop.f32.mrb[0].mxu0
        %v2830 = vadd.f32 0.0, %v2829
        %v2831 = vpop.f32.mrb[0].mxu0
        %v2832 = vpop.f32.mrb[0].mxu0
        %v2833 = vadd.f32 0.0, %v2832
        %v2834 = vpop.f32.mrb[0].mxu0
        %2835 = vdwg.mxu0
        %v2836 = vadd.f32 %v2541, %v2710
        %v2837 = vadd.f32 %v2542, %v2713
        %v2838 = vadd.f32 %v2543, %v2718
        %v2839 = vadd.f32 %v2544, %v2721
        %v2840 = vadd.f32 %v2545, %v2726
        %v2841 = vadd.f32 %v2546, %v2729
        %v2842 = vadd.f32 %v2547, %v2734
        %v2843 = vadd.f32 %v2548, %v2737
        %v2844 = vadd.f32 %v2549, %v2742
        %v2845 = vadd.f32 %v2550, %v2745
        %v2846 = vadd.f32 %v2551, %v2750
        %v2847 = vadd.f32 %v2552, %v2753
        %v2848 = vadd.f32 %v2553, %v2758
        %v2849 = vadd.f32 %v2554, %v2761
        %v2850 = vadd.f32 %v2555, %v2766
        %v2851 = vadd.f32 %v2556, %v2769
        %v2852 = vadd.f32 %v2557, %v2774
        %v2853 = vadd.f32 %v2558, %v2777
        %v2854 = vadd.f32 %v2559, %v2782
        %v2855 = vadd.f32 %v2560, %v2785
        %v2856 = vadd.f32 %v2561, %v2790
        %v2857 = vadd.f32 %v2562, %v2793
        %v2858 = vadd.f32 %v2563, %v2798
        %v2859 = vadd.f32 %v2564, %v2801
        %v2860 = vadd.f32 %v2565, %v2806
        %v2861 = vadd.f32 %v2566, %v2809
        %v2862 = vadd.f32 %v2567, %v2814
        %v2863 = vadd.f32 %v2568, %v2817
        %v2864 = vadd.f32 %v2569, %v2822
        %v2865 = vadd.f32 %v2570, %v2825
        %v2866 = vadd.f32 %v2571, %v2830
        %v2867 = vadd.f32 %v2572, %v2833
        %v2868 = vpack.c.bf16 %v2196, %v2195
        %v2869 = vpack.c.bf16 %v2124, %v2122
        %s2870 = scalar_lea.vmem %s3, 192
        %v2871 = vld [vmem:[%s2870] sm:$0xf]
        %v2872 = vld [vmem:[%s2870 + $0x4] sm:$0xf]
        %v2873 = vld [vmem:[%s2870 + $0x8] sm:$0xf]
        %v2874 = vld [vmem:[%s2870 + $0xc] sm:$0xf]
        %v2875 = vld [vmem:[%s2870 + $0x10] sm:$0xf]
        %v2876 = vld [vmem:[%s2870 + $0x14] sm:$0xf]
        %v2877 = vld [vmem:[%s2870 + $0x18] sm:$0xf]
        %v2878 = vld [vmem:[%s2870 + $0x1c] sm:$0xf]
        %v2879 = vld [vmem:[%s2870 + $0x20] sm:$0xf]
        %v2880 = vld [vmem:[%s2870 + $0x24] sm:$0xf]
        %v2881 = vld [vmem:[%s2870 + $0x28] sm:$0xf]
        %v2882 = vld [vmem:[%s2870 + $0x2c] sm:$0xf]
        %v2883 = vld [vmem:[%s2870 + $0x30] sm:$0xf]
        %v2884 = vld [vmem:[%s2870 + $0x34] sm:$0xf]
        %v2885 = vld [vmem:[%s2870 + $0x38] sm:$0xf]
        %v2886 = vld [vmem:[%s2870 + $0x3c] sm:$0xf]
        %v2887 = vld [vmem:[%s2870 + $0x40] sm:$0xf]
        %v2888 = vld [vmem:[%s2870 + $0x44] sm:$0xf]
        %v2889 = vld [vmem:[%s2870 + $0x48] sm:$0xf]
        %v2890 = vld [vmem:[%s2870 + $0x4c] sm:$0xf]
        %v2891 = vld [vmem:[%s2870 + $0x50] sm:$0xf]
        %v2892 = vld [vmem:[%s2870 + $0x54] sm:$0xf]
        %v2893 = vld [vmem:[%s2870 + $0x58] sm:$0xf]
        %v2894 = vld [vmem:[%s2870 + $0x5c] sm:$0xf]
        %v2919 = vunpack.c.l.b16 %v2871
        %v2920 = vunpack.c.l.b16 %v2872
        %v2921 = vunpack.c.l.b16 %v2873
        %v2922 = vunpack.c.l.b16 %v2874
        %v2923 = vunpack.c.l.b16 %v2875
        %v2924 = vunpack.c.l.b16 %v2876
        %v2925 = vunpack.c.l.b16 %v2877
        %v2926 = vunpack.c.l.b16 %v2878
        %v2927 = vunpack.c.l.b16 %v2879
        %v2928 = vunpack.c.l.b16 %v2880
        %v2929 = vunpack.c.l.b16 %v2881
        %v2930 = vunpack.c.l.b16 %v2882
        %v2931 = vunpack.c.l.b16 %v2883
        %v2932 = vunpack.c.l.b16 %v2884
        %v2933 = vunpack.c.l.b16 %v2885
        %v2934 = vunpack.c.l.b16 %v2886
        %v2935 = vunpack.c.l.b16 %v2887
        %v2936 = vunpack.c.l.b16 %v2888
        %v2937 = vunpack.c.l.b16 %v2889
        %v2938 = vunpack.c.l.b16 %v2890
        %v2939 = vunpack.c.l.b16 %v2891
        %v2940 = vunpack.c.l.b16 %v2892
        %v2941 = vunpack.c.l.b16 %v2893
        %v2942 = vunpack.c.l.b16 %v2894
        %v2943 = vpack.c.b16 %v2920, %v2919
        %v2944 = vpack.c.b16 %v2922, %v2921
        %v2945 = vpack.c.b16 %v2924, %v2923
        %v2946 = vpack.c.b16 %v2926, %v2925
        %v2947 = vpack.c.b16 %v2928, %v2927
        %v2948 = vpack.c.b16 %v2930, %v2929
        %v2949 = vpack.c.b16 %v2932, %v2931
        %v2950 = vpack.c.b16 %v2934, %v2933
        %v2951 = vpack.c.b16 %v2936, %v2935
        %v2952 = vpack.c.b16 %v2938, %v2937
        %v2953 = vpack.c.b16 %v2940, %v2939
        %v2954 = vpack.c.b16 %v2942, %v2941
        %v2968 = vsel %vm767, %v2869, 0
        %2970 = vmatprep.subr.bf16.mxu0 0
        %2971 = vmatpush1.bf16.msra.mxu0 %v2943
        %2972 = vmatprep.subr.bf16.mxu0 0
        %2973 = vmatpush1.bf16.msra.mxu0 %v2944
        %2974 = vmatprep.subr.bf16.mxu0 0
        %2975 = vmatpush1.bf16.msra.mxu0 %v2945
        %2976 = vmatprep.subr.bf16.mxu0 0
        %2977 = vmatpush1.bf16.msra.mxu0 %v2946
        %2978 = vmatprep.subr.bf16.mxu0 0
        %2979 = vmatpush1.bf16.msra.mxu0 %v2947
        %2980 = vmatprep.subr.bf16.mxu0 0
        %2981 = vmatpush1.bf16.msra.mxu0 %v2948
        %2982 = vmatprep.subr.bf16.mxu0 0
        %2983 = vmatpush1.bf16.msra.mxu0 %v2949
        %2984 = vmatprep.subr.bf16.mxu0 0
        %2985 = vmatpush1.bf16.msra.mxu0 %v2950
        %2986 = vmatprep.subr.bf16.mxu0 0
        %2987 = vmatpush1.bf16.msra.mxu0 %v2951
        %2988 = vmatprep.subr.bf16.mxu0 0
        %2989 = vmatpush1.bf16.msra.mxu0 %v2952
        %2990 = vmatprep.subr.bf16.mxu0 0
        %2991 = vmatpush1.bf16.msra.mxu0 %v2953
        %2992 = vmatprep.subr.bf16.mxu0 0
        %2993 = vmatpush1.bf16.msra.mxu0 %v2954
        %2994 = vmatprep.subr.bf16.mxu0 0
        %2995 = vmatpush1.bf16.msra.mxu0 0
        %2996 = vmatprep.subr.bf16.mxu0 0
        %2997 = vmatpush1.bf16.msra.mxu0 0
        %2998 = vmatprep.subr.bf16.mxu0 0
        %2999 = vmatpush1.bf16.msra.mxu0 0
        %3000 = vmatprep.subr.bf16.mxu0 0
        %3001 = vmatpush1.bf16.msra.mxu0 0
        %3002 = vmatprep.mubr.bf16.mxu0 %v2339
        %3003 = vmatmul.mubr.bf16.gmra.mrb[0].mxu0 %v2208
        %v3004 = vpop.f32.mrb[0].mxu0
        %v3005 = vadd.f32 0.0, %v3004
        %v3006 = vpop.f32.mrb[0].mxu0
        %v3007 = vpop.f32.mrb[0].mxu0
        %v3008 = vadd.f32 0.0, %v3007
        %v3009 = vpop.f32.mrb[0].mxu0
        %3010 = vmatprep.mubr.bf16.mxu0 %v2342
        %3011 = vmatmul.mubr.bf16.gmra.mrb[0].mxu0 %v2210
        %v3012 = vpop.f32.mrb[0].mxu0
        %v3013 = vadd.f32 0.0, %v3012
        %v3014 = vpop.f32.mrb[0].mxu0
        %v3015 = vpop.f32.mrb[0].mxu0
        %v3016 = vadd.f32 0.0, %v3015
        %v3017 = vpop.f32.mrb[0].mxu0
        %3018 = vmatprep.mubr.bf16.mxu0 %v2345
        %3019 = vmatmul.mubr.bf16.gmra.mrb[0].mxu0 %v2212
        %v3020 = vpop.f32.mrb[0].mxu0
        %v3021 = vadd.f32 0.0, %v3020
        %v3022 = vpop.f32.mrb[0].mxu0
        %v3023 = vpop.f32.mrb[0].mxu0
        %v3024 = vadd.f32 0.0, %v3023
        %v3025 = vpop.f32.mrb[0].mxu0
        %3026 = vmatprep.mubr.bf16.mxu0 %v2348
        %3027 = vmatmul.mubr.bf16.gmra.mrb[0].mxu0 %v2214
        %v3028 = vpop.f32.mrb[0].mxu0
        %v3029 = vadd.f32 0.0, %v3028
        %v3030 = vpop.f32.mrb[0].mxu0
        %v3031 = vpop.f32.mrb[0].mxu0
        %v3032 = vadd.f32 0.0, %v3031
        %v3033 = vpop.f32.mrb[0].mxu0
        %3034 = vmatprep.mubr.bf16.mxu0 %v2351
        %3035 = vmatmul.mubr.bf16.gmra.mrb[0].mxu0 %v2216
        %v3036 = vpop.f32.mrb[0].mxu0
        %v3037 = vadd.f32 0.0, %v3036
        %v3038 = vpop.f32.mrb[0].mxu0
        %v3039 = vpop.f32.mrb[0].mxu0
        %v3040 = vadd.f32 0.0, %v3039
        %v3041 = vpop.f32.mrb[0].mxu0
        %3042 = vmatprep.mubr.bf16.mxu0 %v2354
        %3043 = vmatmul.mubr.bf16.gmra.mrb[0].mxu0 %v2218
        %v3044 = vpop.f32.mrb[0].mxu0
        %v3045 = vadd.f32 0.0, %v3044
        %v3046 = vpop.f32.mrb[0].mxu0
        %v3047 = vpop.f32.mrb[0].mxu0
        %v3048 = vadd.f32 0.0, %v3047
        %v3049 = vpop.f32.mrb[0].mxu0
        %3050 = vmatprep.mubr.bf16.mxu0 %v2357
        %3051 = vmatmul.mubr.bf16.gmra.mrb[0].mxu0 %v2220
        %v3052 = vpop.f32.mrb[0].mxu0
        %v3053 = vadd.f32 0.0, %v3052
        %v3054 = vpop.f32.mrb[0].mxu0
        %v3055 = vpop.f32.mrb[0].mxu0
        %v3056 = vadd.f32 0.0, %v3055
        %v3057 = vpop.f32.mrb[0].mxu0
        %3058 = vmatprep.mubr.bf16.mxu0 %v2360
        %3059 = vmatmul.mubr.bf16.gmra.mrb[0].mxu0 %v2222
        %v3060 = vpop.f32.mrb[0].mxu0
        %v3061 = vadd.f32 0.0, %v3060
        %v3062 = vpop.f32.mrb[0].mxu0
        %v3063 = vpop.f32.mrb[0].mxu0
        %v3064 = vadd.f32 0.0, %v3063
        %v3065 = vpop.f32.mrb[0].mxu0
        %3066 = vmatprep.mubr.bf16.mxu0 %v2363
        %3067 = vmatmul.mubr.bf16.gmra.mrb[0].mxu0 %v2224
        %v3068 = vpop.f32.mrb[0].mxu0
        %v3069 = vadd.f32 0.0, %v3068
        %v3070 = vpop.f32.mrb[0].mxu0
        %v3071 = vpop.f32.mrb[0].mxu0
        %v3072 = vadd.f32 0.0, %v3071
        %v3073 = vpop.f32.mrb[0].mxu0
        %3074 = vmatprep.mubr.bf16.mxu0 %v2366
        %3075 = vmatmul.mubr.bf16.gmra.mrb[0].mxu0 %v2226
        %v3076 = vpop.f32.mrb[0].mxu0
        %v3077 = vadd.f32 0.0, %v3076
        %v3078 = vpop.f32.mrb[0].mxu0
        %v3079 = vpop.f32.mrb[0].mxu0
        %v3080 = vadd.f32 0.0, %v3079
        %v3081 = vpop.f32.mrb[0].mxu0
        %3082 = vmatprep.mubr.bf16.mxu0 %v2369
        %3083 = vmatmul.mubr.bf16.gmra.mrb[0].mxu0 %v2228
        %v3084 = vpop.f32.mrb[0].mxu0
        %v3085 = vadd.f32 0.0, %v3084
        %v3086 = vpop.f32.mrb[0].mxu0
        %v3087 = vpop.f32.mrb[0].mxu0
        %v3088 = vadd.f32 0.0, %v3087
        %v3089 = vpop.f32.mrb[0].mxu0
        %3090 = vmatprep.mubr.bf16.mxu0 %v2372
        %3091 = vmatmul.mubr.bf16.gmra.mrb[0].mxu0 %v2230
        %v3092 = vpop.f32.mrb[0].mxu0
        %v3093 = vadd.f32 0.0, %v3092
        %v3094 = vpop.f32.mrb[0].mxu0
        %v3095 = vpop.f32.mrb[0].mxu0
        %v3096 = vadd.f32 0.0, %v3095
        %v3097 = vpop.f32.mrb[0].mxu0
        %3098 = vmatprep.mubr.bf16.mxu0 %v2375
        %3099 = vmatmul.mubr.bf16.gmra.mrb[0].mxu0 %v2232
        %v3100 = vpop.f32.mrb[0].mxu0
        %v3101 = vadd.f32 0.0, %v3100
        %v3102 = vpop.f32.mrb[0].mxu0
        %v3103 = vpop.f32.mrb[0].mxu0
        %v3104 = vadd.f32 0.0, %v3103
        %v3105 = vpop.f32.mrb[0].mxu0
        %3106 = vmatprep.mubr.bf16.mxu0 %v2378
        %3107 = vmatmul.mubr.bf16.gmra.mrb[0].mxu0 %v2234
        %v3108 = vpop.f32.mrb[0].mxu0
        %v3109 = vadd.f32 0.0, %v3108
        %v3110 = vpop.f32.mrb[0].mxu0
        %v3111 = vpop.f32.mrb[0].mxu0
        %v3112 = vadd.f32 0.0, %v3111
        %v3113 = vpop.f32.mrb[0].mxu0
        %3114 = vmatprep.mubr.bf16.mxu0 %v2673
        %3115 = vmatmul.mubr.bf16.gmra.mrb[0].mxu0 %v2573
        %v3116 = vpop.f32.mrb[0].mxu0
        %v3117 = vadd.f32 0.0, %v3116
        %v3118 = vpop.f32.mrb[0].mxu0
        %v3119 = vpop.f32.mrb[0].mxu0
        %v3120 = vadd.f32 0.0, %v3119
        %v3121 = vpop.f32.mrb[0].mxu0
        %3122 = vmatprep.mubr.bf16.mxu0 %v2968
        %3123 = vmatmul.mubr.bf16.gmra.mrb[0].mxu0 %v2868
        %v3124 = vpop.f32.mrb[0].mxu0
        %v3125 = vadd.f32 0.0, %v3124
        %v3126 = vpop.f32.mrb[0].mxu0
        %v3127 = vpop.f32.mrb[0].mxu0
        %v3128 = vadd.f32 0.0, %v3127
        %v3129 = vpop.f32.mrb[0].mxu0
        %3130 = vdwg.mxu0
        %v3131 = vadd.f32 %v2836, %v3005
        %v3132 = vadd.f32 %v2837, %v3008
        %v3133 = vadd.f32 %v2838, %v3013
        %v3134 = vadd.f32 %v2839, %v3016
        %v3135 = vadd.f32 %v2840, %v3021
        %v3136 = vadd.f32 %v2841, %v3024
        %v3137 = vadd.f32 %v2842, %v3029
        %v3138 = vadd.f32 %v2843, %v3032
        %v3139 = vadd.f32 %v2844, %v3037
        %v3140 = vadd.f32 %v2845, %v3040
        %v3141 = vadd.f32 %v2846, %v3045
        %v3142 = vadd.f32 %v2847, %v3048
        %v3143 = vadd.f32 %v2848, %v3053
        %v3144 = vadd.f32 %v2849, %v3056
        %v3145 = vadd.f32 %v2850, %v3061
        %v3146 = vadd.f32 %v2851, %v3064
        %v3147 = vadd.f32 %v2852, %v3069
        %v3148 = vadd.f32 %v2853, %v3072
        %v3149 = vadd.f32 %v2854, %v3077
        %v3150 = vadd.f32 %v2855, %v3080
        %v3151 = vadd.f32 %v2856, %v3085
        %v3152 = vadd.f32 %v2857, %v3088
        %v3153 = vadd.f32 %v2858, %v3093
        %v3154 = vadd.f32 %v2859, %v3096
        %v3155 = vadd.f32 %v2860, %v3101
        %v3156 = vadd.f32 %v2861, %v3104
        %v3157 = vadd.f32 %v2862, %v3109
        %v3158 = vadd.f32 %v2863, %v3112
        %v3159 = vadd.f32 %v2864, %v3117
        %v3160 = vadd.f32 %v2865, %v3120
        %v3161 = vadd.f32 %v2866, %v3125
        %v3162 = vadd.f32 %v2867, %v3128
        %v3163 = vmax.f32 %v3131, 0.0
        %v3164 = vmax.f32 %v3132, 0.0
        %v3165 = vmax.f32 %v3133, 0.0
        %v3166 = vmax.f32 %v3134, 0.0
        %v3167 = vmax.f32 %v3135, 0.0
        %v3168 = vmax.f32 %v3136, 0.0
        %v3169 = vmax.f32 %v3137, 0.0
        %v3170 = vmax.f32 %v3138, 0.0
        %v3171 = vmax.f32 %v3139, 0.0
        %v3172 = vmax.f32 %v3140, 0.0
        %v3173 = vmax.f32 %v3141, 0.0
        %v3174 = vmax.f32 %v3142, 0.0
        %v3175 = vmax.f32 %v3143, 0.0
        %v3176 = vmax.f32 %v3144, 0.0
        %v3177 = vmax.f32 %v3145, 0.0
        %v3178 = vmax.f32 %v3146, 0.0
        %v3179 = vmax.f32 %v3147, 0.0
        %v3180 = vmax.f32 %v3148, 0.0
        %v3181 = vmax.f32 %v3149, 0.0
        %v3182 = vmax.f32 %v3150, 0.0
        %v3183 = vmax.f32 %v3151, 0.0
        %v3184 = vmax.f32 %v3152, 0.0
        %v3185 = vmax.f32 %v3153, 0.0
        %v3186 = vmax.f32 %v3154, 0.0
        %v3187 = vmax.f32 %v3155, 0.0
        %v3188 = vmax.f32 %v3156, 0.0
        %v3189 = vmax.f32 %v3157, 0.0
        %v3190 = vmax.f32 %v3158, 0.0
        %v3191 = vmax.f32 %v3159, 0.0
        %v3192 = vmax.f32 %v3160, 0.0
        %v3193 = vmax.f32 %v3161, 0.0
        %v3194 = vmax.f32 %v3162, 0.0
        %3195 = vst.msk [vmem:[%s217] sm:$0xff] %vm767, %v3163
        %3196 = vst.msk [vmem:[%s217 + $0x8] sm:$0xff] %vm767, %v3164
        %3197 = vst.msk [vmem:[%s217 + $0x10] sm:$0xff] %vm767, %v3165
        %3198 = vst.msk [vmem:[%s217 + $0x18] sm:$0xff] %vm767, %v3166
        %3199 = vst.msk [vmem:[%s217 + $0x20] sm:$0xff] %vm767, %v3167
        %3200 = vst.msk [vmem:[%s217 + $0x28] sm:$0xff] %vm767, %v3168
        %3201 = vst.msk [vmem:[%s217 + $0x30] sm:$0xff] %vm767, %v3169
        %3202 = vst.msk [vmem:[%s217 + $0x38] sm:$0xff] %vm767, %v3170
        %3203 = vst.msk [vmem:[%s217 + $0x40] sm:$0xff] %vm767, %v3171
        %3204 = vst.msk [vmem:[%s217 + $0x48] sm:$0xff] %vm767, %v3172
        %3205 = vst.msk [vmem:[%s217 + $0x50] sm:$0xff] %vm767, %v3173
        %3206 = vst.msk [vmem:[%s217 + $0x58] sm:$0xff] %vm767, %v3174
        %3207 = vst.msk [vmem:[%s217 + $0x60] sm:$0xff] %vm767, %v3175
        %3208 = vst.msk [vmem:[%s217 + $0x68] sm:$0xff] %vm767, %v3176
        %3209 = vst.msk [vmem:[%s217 + $0x70] sm:$0xff] %vm767, %v3177
        %3210 = vst.msk [vmem:[%s217 + $0x78] sm:$0xff] %vm767, %v3178
        %3211 = vst.msk [vmem:[%s217 + $0x80] sm:$0xff] %vm767, %v3179
        %3212 = vst.msk [vmem:[%s217 + $0x88] sm:$0xff] %vm767, %v3180
        %3213 = vst.msk [vmem:[%s217 + $0x90] sm:$0xff] %vm767, %v3181
        %3214 = vst.msk [vmem:[%s217 + $0x98] sm:$0xff] %vm767, %v3182
        %3215 = vst.msk [vmem:[%s217 + $0xa0] sm:$0xff] %vm767, %v3183
        %3216 = vst.msk [vmem:[%s217 + $0xa8] sm:$0xff] %vm767, %v3184
        %3217 = vst.msk [vmem:[%s217 + $0xb0] sm:$0xff] %vm767, %v3185
        %3218 = vst.msk [vmem:[%s217 + $0xb8] sm:$0xff] %vm767, %v3186
        %3219 = vst.msk [vmem:[%s217 + $0xc0] sm:$0xff] %vm767, %v3187
        %3220 = vst.msk [vmem:[%s217 + $0xc8] sm:$0xff] %vm767, %v3188
        %3221 = vst.msk [vmem:[%s217 + $0xd0] sm:$0xff] %vm767, %v3189
        %3222 = vst.msk [vmem:[%s217 + $0xd8] sm:$0xff] %vm767, %v3190
        %3223 = vst.msk [vmem:[%s217 + $0xe0] sm:$0xff] %vm767, %v3191
        %3224 = vst.msk [vmem:[%s217 + $0xe8] sm:$0xff] %vm767, %v3192
        %3225 = vst.msk [vmem:[%s217 + $0xf0] sm:$0xff] %vm767, %v3193
        %3226 = vst.msk [vmem:[%s217 + $0xf8] sm:$0xff] %vm767, %v3194
        %s3227 = sand.u32 %s137, 1
        %s3228 = scalar_lea.sflag [#allocation4], %s3227
        %s3229 = sand.u32 %s137, 1
        %s3230 = smul.addr %s3229, 256
        %s3231 = scalar_lea.vmem [#allocation3], %s3230
        // Predicated region
        $region41: #{fcn_backbone_forward.1} parent=39 // pred_check
          %p3232 = pneg %p147
        $region42: #{fcn_backbone_forward.1} parent=39 // pred_check_branch
          %3234 = sbr.rel (%p3232) target = $region44
        $region43: #{fcn_backbone_forward.1} parent=39 // pred_region
          %s3236 = ssub.s32 4096, 4096
          %3237 = vsyncadd %s3228, %s3236
          %s3238 = smul.addr %s19, 32
          %s3239 = smul.addr %s3238, 128
          %s3240 = scalar_lea.hbm %s5, %s3239
          %s3241 = sshll.u32 %s3231, 4
          %s3242 = int_to_ptr.vmem [resolvable:$true] %s3241
          %3247 = dma.vmem_to_hbm [thread:$0]  %s3242, 4096, %s3240, %s3228, 128, 128, 8
        $region44: #{fcn_backbone_forward.1} parent=39 // pred_fallthru
          _
      $region40: #{fcn_backbone_forward.1} parent=5 // pred_fallthru
        _
      %p3248 = scmp.le.s32.totalorder 2, %s14
      // Predicated region
      $region45: #{fcn_backbone_forward.1} parent=5 // pred_check
        %p3249 = pneg %p3248
      $region46: #{fcn_backbone_forward.1} parent=5 // pred_check_branch
        %3251 = sbr.rel (%p3249) target = $region48
      $region47: #{fcn_backbone_forward.1} parent=5 // pred_region
        %s3252 = ssub.s32 %s14, 2
        // Predicated region
        $region49: #{fcn_backbone_forward.1} parent=47 // pred_check
          %p3253 = pneg %p153
        $region50: #{fcn_backbone_forward.1} parent=47 // pred_check_branch
          %3255 = sbr.rel (%p3253) target = $region52
        $region51: #{fcn_backbone_forward.1} parent=47 // pred_region
          %s3256 = sand.u32 %s138, 1
          %s3257 = scalar_lea.sflag [#allocation4], %s3256
          %s3258 = sand.u32 %s138, 1
          %s3259 = smul.addr %s3258, 256
          %s3260 = scalar_lea.vmem [#allocation3], %s3259
          %3261 = dma.done %s3257, 4096
        $region52: #{fcn_backbone_forward.1} parent=47 // pred_fallthru
          _
      $region48: #{fcn_backbone_forward.1} parent=5 // pred_fallthru
        _
    $region6: #{fcn_backbone_forward.1} parent=1 // loop_footer
      %s18 = sadd.s32 1, %s14
    $region7: #{fcn_backbone_forward.1} parent=1 // loop_footer_branch
      %13 = sbr.rel target = $region3
    $region8: #{fcn_backbone_forward.1} parent=1 // loop_exit
      _
    %3262 = vsyncpa [#allocation4], 1
    %s3263 = scalar_lea.sflag [#allocation4], 1
    %3264 = vsyncpa %s3263, 1

</llo_original>
